<compile_context>
chip_gen: v6e
topology: v6e:2x2x1
jax: 0.10.0
libtpu: 0.0.40
codegen_flags: <defaults>
</compile_context>

<pallas_src>
import functools

import jax
import jax.numpy as jnp
from jax import lax
from jax.experimental import pallas as pl
from jax.experimental.pallas import tpu as pltpu


def _round_up(x, m):
    return ((x + m - 1) // m) * m


# ----------------------------------------------------------------------------
# Fused Pallas kernel: all conv layers + activation + linear for one batch tile
# ----------------------------------------------------------------------------
def _fused_encoder_kernel(x_ref, *refs, K, W, heights, chans, embed, b_tile,
                          act, compute_dtype):
    """Ref order:
      x_ref                     (b_tile, HWpad, C0)  flattened NHWC image rows
      w_i, b_i (per conv layer) (K*K, Cin, Cout), (1, Cout)
      wl, bl                    (C_last*E, R_last), (E, 1)
      out_ref                   (b_tile, E, 1)
      scratch_i (i < L-1)       (R_i_pad, C_{i+1})   VMEM intermediates

    Spatial layout everywhere is "flat rows with pitch W": row r = y*W + x,
    channels on the lane dim.  Columns x >= Wo_i of layer i are wrap-around
    garbage; they are never read by valid outputs and are multiplied by zero
    rows of the (pre-permuted) linear weight.
    """
    L = len(chans) - 1
    conv_w = [refs[2 * i] for i in range(L)]
    conv_b = [refs[2 * i + 1] for i in range(L)]
    wl_ref = refs[2 * L]
    bl_ref = refs[2 * L + 1]
    out_ref = refs[2 * L + 2]
    scratches = refs[2 * L + 3:]

    def activation(a):
        if act == "relu":
            return jnp.maximum(a, 0.0)
        return jnp.where(a > 0.0, a, jnp.exp(a) - 1.0)   # elu

    for b in range(b_tile):
        h_last = None
        for li in range(L):
            rows = heights[li + 1] * W                   # output rows (pitch W)
            cout = chans[li + 1]
            acc = jnp.zeros((rows, cout), jnp.float32)
            # K*K whole-plane taps: one contiguous slab + one MXU dot per tap.
            for dy in range(K):
                for dx in range(K):
                    off = dy * W + dx
                    if li == 0:
                        slab = x_ref[b, pl.ds(off, rows), :]
                    else:
                        slab = scratches[li - 1][pl.ds(off, rows), :]
                    tap = conv_w[li][dy * K + dx]        # (Cin, Cout)
                    acc = acc + jnp.dot(slab.astype(compute_dtype),
                                        tap.astype(compute_dtype),
                                        preferred_element_type=jnp.float32)
            a = activation(acc + conv_b[li][...])        # bias broadcast once
            if li < L - 1:
                sc = scratches[li]
                rpad = sc.shape[0]
                sc[0:rows, :] = a                        # one plane store
                if rpad > rows:                          # keep over-read rows finite
                    sc[rows:rpad, :] = jnp.zeros((rpad - rows, cout), jnp.float32)
            else:
                h_last = a                               # (R_last, C_last)

        # ---- Linear (NCHW flatten permutation folded into wl at init) ----
        # tmp[c*E + e, c'] = sum_r wl[c*E + e, r] * h_last[r, c']
        tmp = jnp.dot(wl_ref[...].astype(compute_dtype),
                      h_last.astype(compute_dtype),
                      preferred_element_type=jnp.float32)  # (C_last*E, C_last)
        out = bl_ref[...]                                   # (E, 1)
        for c in range(chans[-1]):
            out = out + tmp[c * embed:(c + 1) * embed, c:c + 1]
        out_ref[b, :, :] = out


# ----------------------------------------------------------------------------
# ImageEncoder module (JAX side)
# ----------------------------------------------------------------------------
class ImageEncoderPallas:
    """Mirrors torchkit ImageEncoder (activation='relu' by default)."""

    def __init__(self, image_shape, embed_size=100, depths=(8, 16),
                 kernel_size=2, stride=1, activation="relu",
                 from_flattened=False, normalize_pixel=False,
                 batch_tile=1, compute_dtype=jnp.float32, key=None):
        # TODO(synk): stride != 1 (non-default) is not implemented in the kernel.
        assert stride == 1, "only the module default stride=1 is implemented"
        assert activation in ("relu", "elu")
        self.shape = tuple(image_shape)                  # (C, H, W)
        self.K = int(kernel_size)
        self.depths = [image_shape[0]] + list(depths)
        self.embed_size = int(embed_size)
        self.activation = activation
        self.from_flattened = from_flattened
        self.normalize_pixel = normalize_pixel
        self.batch_tile = int(batch_tile)
        # compute_dtype=jnp.bfloat16 is a valid option on v6e/v7x (f32 accumulate).
        self.compute_dtype = compute_dtype

        C, H, W = self.shape
        L = len(self.depths) - 1
        assert H >= L * (self.K - 1) + 1 and W >= L * (self.K - 1) + 1

        key = jax.random.PRNGKey(0) if key is None else key
        keys = jax.random.split(key, 2 * L + 2)

        # ---- parameters in PyTorch layout (also used by the pure-JAX reference) ----
        self.conv_w, self.conv_b = [], []
        h, w = H, W
        for i in range(L):
            cin, cout = self.depths[i], self.depths[i + 1]
            wk = 0.1 * jax.random.normal(keys[2 * i], (cout, cin, self.K, self.K),
                                         jnp.float32)
            bk = 0.1 * jax.random.normal(keys[2 * i + 1], (cout,), jnp.float32)
            self.conv_w.append(wk)
            self.conv_b.append(bk)
            h, w = h - (self.K - 1), w - (self.K - 1)
        self.out_hw = (h, w)
        feat = h * w * self.depths[-1]
        self.lin_w = 0.1 * jax.random.normal(keys[-2], (self.embed_size, feat),
                                             jnp.float32)
        self.lin_b = 0.1 * jax.random.normal(keys[-1], (self.embed_size,),
                                             jnp.float32)

        # ---- kernel-layout parameters, folded ONCE at init ----
        self.heights = [H - i * (self.K - 1) for i in range(L + 1)]
        # conv taps (K*K, Cin, Cout): taps[dy*K+dx][c, d] == W_torch[d, c, dy, dx]
        self.taps = [
            jnp.transpose(wk, (2, 3, 1, 0)).reshape(self.K * self.K,
                                                    wk.shape[1], wk.shape[0])
            for wk in self.conv_w
        ]
        self.biases2d = [bk.reshape(1, -1) for bk in self.conv_b]
        # Linear weight with the PyTorch NCHW-flatten order folded in and rows
        # mapped onto the kernel's full-width (pitch W) grid; wrapped columns = 0.
        Ho, Wo = self.out_hw
        Cl, E = self.depths[-1], self.embed_size
        wl = self.lin_w.reshape(E, Cl, Ho, Wo)           # torch flatten: (c, y, x)
        wl = jnp.transpose(wl, (1, 0, 2, 3))             # (Cl, E, Ho, Wo)
        wl = jnp.pad(wl, ((0, 0), (0, 0), (0, 0), (0, W - Wo)))
        self.lin_w_kernel = wl.reshape(Cl * E, Ho * W)   # (Cl*E, R_last)
        self.lin_b_kernel = self.lin_b.reshape(E, 1)

        # padded row counts (tail rows only feed wrap-around garbage outputs)
        self._in_rows = _round_up(H * W + self.K - 1, 8)
        self._scratch_rows = [
            _round_up(self.heights[i + 1] * W + self.K - 1, 8) for i in range(L - 1)
        ]

        self._forward = jax.jit(self._forward_impl)

    # ---- fused pallas_call ----
    def _pallas_forward(self, x_flat):
        C, H, W = self.shape
        K, E, L = self.K, self.embed_size, len(self.depths) - 1
        n = x_flat.shape[0]
        b_tile = (self.batch_tile
                  if (self.batch_tile > 0 and n % self.batch_tile == 0) else 1)
        grid = (n // b_tile,)

        kernel = functools.partial(
            _fused_encoder_kernel, K=K, W=W, heights=self.heights,
            chans=self.depths, embed=E, b_tile=b_tile, act=self.activation,
            compute_dtype=self.compute_dtype)

        in_specs = [pl.BlockSpec((b_tile, self._in_rows, C), lambda i: (i, 0, 0))]
        inputs = [x_flat]
        for li in range(L):
            cin, cout = self.depths[li], self.depths[li + 1]
            in_specs.append(pl.BlockSpec((K * K, cin, cout), lambda i: (0, 0, 0)))
            inputs.append(self.taps[li])
            in_specs.append(pl.BlockSpec((1, cout), lambda i: (0, 0)))
            inputs.append(self.biases2d[li])
        in_specs.append(pl.BlockSpec(self.lin_w_kernel.shape, lambda i: (0, 0)))
        inputs.append(self.lin_w_kernel)
        in_specs.append(pl.BlockSpec((E, 1), lambda i: (0, 0)))
        inputs.append(self.lin_b_kernel)

        scratch_shapes = [
            pltpu.VMEM((r, self.depths[i + 1]), jnp.float32)
            for i, r in enumerate(self._scratch_rows)
        ]

        out = pl.pallas_call(
            kernel,
            out_shape=jax.ShapeDtypeStruct((n, E, 1), jnp.float32),
            grid=grid,
            in_specs=in_specs,
            out_specs=pl.BlockSpec((b_tile, E, 1), lambda i: (i, 0, 0)),
            scratch_shapes=scratch_shapes,
            compiler_params=pltpu.CompilerParams(
                dimension_semantics=("parallel",)),
        )(*inputs)
        return out.reshape(n, E)

    # ---- forward (glue is plain JAX, jitted together with the kernel) ----
    def _forward_impl(self, image):
        if self.from_flattened:
            lead = image.shape[:-1]
            image = image.reshape((-1,) + self.shape)
        else:
            lead = (image.shape[0],)
        if self.normalize_pixel:
            image = image / 255.0

        x = image.astype(jnp.float32)
        n = x.shape[0]
        C, H, W = self.shape
        # NCHW -> NHWC -> flat rows of pitch W (channels on the lane dim),
        # zero-padded tail rows so every in-kernel tap window stays in bounds.
        x = jnp.transpose(x, (0, 2, 3, 1)).reshape(n, H * W, C)
        x = jnp.pad(x, ((0, 0), (0, self._in_rows - H * W), (0, 0)))
        out = self._pallas_forward(x)
        return out.reshape(lead + (self.embed_size,))

    def __call__(self, image):
        return self._forward(image)


# ----------------------------------------------------------------------------
# Pure-JAX reference (mirrors the PyTorch forward exactly)
# ----------------------------------------------------------------------------
def reference_forward(enc, image_nchw):
    x = image_nchw.astype(jnp.float32)
    for wk, bk in zip(enc.conv_w, enc.conv_b):
        x = lax.conv_general_dilated(
            x, wk, window_strides=(1, 1), padding="VALID",
            dimension_numbers=("NCHW", "OIHW", "NCHW"))
        x = jnp.maximum(x + bk[None, :, None, None], 0.0)
    x = x.reshape(x.shape[0], -1)
    return x @ enc.lin_w.T + enc.lin_b


# ----------------------------------------------------------------------------
if __name__ == "__main__":
    key = jax.random.PRNGKey(0)
    k_img, k_par = jax.random.split(key)

    # Small shapes consistent with the module: image_shape=(C,H,W)=(4,16,16).
    batch, C, H, W = 2, 4, 16, 16
    embed_size = 32
    image = jax.random.normal(k_img, (batch, C, H, W), jnp.float32)

    enc = ImageEncoderPallas((C, H, W), embed_size=embed_size, depths=(8, 16),
                             kernel_size=2, stride=1, key=k_par)

    out = jax.block_until_ready(enc(image))
    ref = jax.block_until_ready(reference_forward(enc, image))

    assert out.shape == (batch, embed_size), out.shape
    err = float(jnp.max(jnp.abs(out - ref)))
    assert jnp.allclose(out, ref, atol=1e-4, rtol=1e-4), err

    print("KERNEL_OK")
</pallas_src>

<mosaic_0001>
module attributes {stable_mosaic.version = 11 : i64} {
  func.func @_fused_encoder_kernel(%arg0: i32, %arg1: memref<1x264x4xf32, #tpu.memory_space<vmem>>, %arg2: memref<4x4x8xf32, #tpu.memory_space<vmem>>, %arg3: memref<1x8xf32, #tpu.memory_space<vmem>>, %arg4: memref<4x8x16xf32, #tpu.memory_space<vmem>>, %arg5: memref<1x16xf32, #tpu.memory_space<vmem>>, %arg6: memref<512x224xf32, #tpu.memory_space<vmem>>, %arg7: memref<32x1xf32, #tpu.memory_space<vmem>>, %arg8: memref<1x32x1xf32, #tpu.memory_space<vmem>>, %arg9: memref<248x8xf32, #tpu.memory_space<vmem>>) attributes {dimension_semantics = [#tpu.dimension_semantics<parallel>], iteration_bounds = array<i64: 2>, scalar_prefetch = 0 : i64, scratch_operands = 1 : i64, tpu.core_type = #tpu.core_type<tc>, window_params = [{transform_indices = @transform_0, window_bounds = array<i64: 1, 264, 4>}, {pipeline_mode = #tpu.pipeline_mode<synchronous>, transform_indices = @transform_1, window_bounds = array<i64: 4, 4, 8>}, {pipeline_mode = #tpu.pipeline_mode<synchronous>, transform_indices = @transform_2, window_bounds = array<i64: 1, 8>}, {pipeline_mode = #tpu.pipeline_mode<synchronous>, transform_indices = @transform_3, window_bounds = array<i64: 4, 8, 16>}, {pipeline_mode = #tpu.pipeline_mode<synchronous>, transform_indices = @transform_4, window_bounds = array<i64: 1, 16>}, {pipeline_mode = #tpu.pipeline_mode<synchronous>, transform_indices = @transform_5, window_bounds = array<i64: 512, 224>}, {pipeline_mode = #tpu.pipeline_mode<synchronous>, transform_indices = @transform_6, window_bounds = array<i64: 32, 1>}, {transform_indices = @transform_7, window_bounds = array<i64: 1, 32, 1>}]} {
    %cst = arith.constant 0.000000e+00 : f32
    %0 = vector.broadcast %cst : f32 to vector<240x8xf32>
    %c0 = arith.constant 0 : index
    %c0_0 = arith.constant 0 : index
    %c0_1 = arith.constant 0 : index
    %1 = vector.load %arg1[%c0, %c0_0, %c0_1] : memref<1x264x4xf32, #tpu.memory_space<vmem>>, vector<1x240x4xf32>
    %2 = vector.shape_cast %1 : vector<1x240x4xf32> to vector<240x4xf32>
    %c0_2 = arith.constant 0 : index
    %c0_3 = arith.constant 0 : index
    %c0_4 = arith.constant 0 : index
    %3 = vector.load %arg2[%c0_2, %c0_3, %c0_4] : memref<4x4x8xf32, #tpu.memory_space<vmem>>, vector<1x4x8xf32>
    %4 = vector.shape_cast %3 : vector<1x4x8xf32> to vector<4x8xf32>
    %cst_5 = arith.constant dense<0.000000e+00> : vector<240x8xf32>
    %5 = tpu.matmul %2, %4, %cst_5 {dimension_numbers = #tpu.dot_dimension_numbers<[1], [0], [0], [1], [0, 0, 1, 1], [], []>} : vector<240x4xf32>, vector<4x8xf32>, vector<240x8xf32> -> vector<240x8xf32>
    %6 = arith.addf %0, %5 : vector<240x8xf32>
    %c0_6 = arith.constant 0 : index
    %c1 = arith.constant 1 : index
    %c0_7 = arith.constant 0 : index
    %7 = vector.load %arg1[%c0_6, %c1, %c0_7] : memref<1x264x4xf32, #tpu.memory_space<vmem>>, vector<1x240x4xf32>
    %8 = vector.shape_cast %7 : vector<1x240x4xf32> to vector<240x4xf32>
    %c1_8 = arith.constant 1 : index
    %c0_9 = arith.constant 0 : index
    %c0_10 = arith.constant 0 : index
    %9 = vector.load %arg2[%c1_8, %c0_9, %c0_10] : memref<4x4x8xf32, #tpu.memory_space<vmem>>, vector<1x4x8xf32>
    %10 = vector.shape_cast %9 : vector<1x4x8xf32> to vector<4x8xf32>
    %cst_11 = arith.constant dense<0.000000e+00> : vector<240x8xf32>
    %11 = tpu.matmul %8, %10, %cst_11 {dimension_numbers = #tpu.dot_dimension_numbers<[1], [0], [0], [1], [0, 0, 1, 1], [], []>} : vector<240x4xf32>, vector<4x8xf32>, vector<240x8xf32> -> vector<240x8xf32>
    %12 = arith.addf %6, %11 : vector<240x8xf32>
    %c0_12 = arith.constant 0 : index
    %c16 = arith.constant 16 : index
    %c0_13 = arith.constant 0 : index
    %13 = vector.load %arg1[%c0_12, %c16, %c0_13] : memref<1x264x4xf32, #tpu.memory_space<vmem>>, vector<1x240x4xf32>
    %14 = vector.shape_cast %13 : vector<1x240x4xf32> to vector<240x4xf32>
    %c2 = arith.constant 2 : index
    %c0_14 = arith.constant 0 : index
    %c0_15 = arith.constant 0 : index
    %15 = vector.load %arg2[%c2, %c0_14, %c0_15] : memref<4x4x8xf32, #tpu.memory_space<vmem>>, vector<1x4x8xf32>
    %16 = vector.shape_cast %15 : vector<1x4x8xf32> to vector<4x8xf32>
    %cst_16 = arith.constant dense<0.000000e+00> : vector<240x8xf32>
    %17 = tpu.matmul %14, %16, %cst_16 {dimension_numbers = #tpu.dot_dimension_numbers<[1], [0], [0], [1], [0, 0, 1, 1], [], []>} : vector<240x4xf32>, vector<4x8xf32>, vector<240x8xf32> -> vector<240x8xf32>
    %18 = arith.addf %12, %17 : vector<240x8xf32>
    %c0_17 = arith.constant 0 : index
    %c17 = arith.constant 17 : index
    %c0_18 = arith.constant 0 : index
    %19 = vector.load %arg1[%c0_17, %c17, %c0_18] : memref<1x264x4xf32, #tpu.memory_space<vmem>>, vector<1x240x4xf32>
    %20 = vector.shape_cast %19 : vector<1x240x4xf32> to vector<240x4xf32>
    %c3 = arith.constant 3 : index
    %c0_19 = arith.constant 0 : index
    %c0_20 = arith.constant 0 : index
    %21 = vector.load %arg2[%c3, %c0_19, %c0_20] : memref<4x4x8xf32, #tpu.memory_space<vmem>>, vector<1x4x8xf32>
    %22 = vector.shape_cast %21 : vector<1x4x8xf32> to vector<4x8xf32>
    %cst_21 = arith.constant dense<0.000000e+00> : vector<240x8xf32>
    %23 = tpu.matmul %20, %22, %cst_21 {dimension_numbers = #tpu.dot_dimension_numbers<[1], [0], [0], [1], [0, 0, 1, 1], [], []>} : vector<240x4xf32>, vector<4x8xf32>, vector<240x8xf32> -> vector<240x8xf32>
    %24 = arith.addf %18, %23 : vector<240x8xf32>
    %c0_22 = arith.constant 0 : index
    %c0_23 = arith.constant 0 : index
    %25 = vector.load %arg3[%c0_22, %c0_23] : memref<1x8xf32, #tpu.memory_space<vmem>>, vector<1x8xf32>
    %26 = vector.broadcast %25 : vector<1x8xf32> to vector<240x8xf32>
    %27 = arith.addf %24, %26 : vector<240x8xf32>
    %cst_24 = arith.constant 0.000000e+00 : f32
    %28 = vector.broadcast %cst_24 : f32 to vector<240x8xf32>
    %29 = arith.maximumf %27, %28 : vector<240x8xf32>
    %c0_25 = arith.constant 0 : index
    %c0_26 = arith.constant 0 : index
    %30 = vector.load %arg9[%c0_25, %c0_26] : memref<248x8xf32, #tpu.memory_space<vmem>>, vector<240x8xf32>
    tpu.vector_store %arg9[%c0_25, %c0_26], %29 {strides = array<i32>} : memref<248x8xf32, #tpu.memory_space<vmem>>, vector<240x8xf32>,
    %cst_27 = arith.constant 0.000000e+00 : f32
    %31 = vector.broadcast %cst_27 : f32 to vector<8x8xf32>
    %c240 = arith.constant 240 : index
    %c0_28 = arith.constant 0 : index
    %32 = vector.load %arg9[%c240, %c0_28] : memref<248x8xf32, #tpu.memory_space<vmem>>, vector<8x8xf32>
    tpu.vector_store %arg9[%c240, %c0_28], %31 {strides = array<i32>} : memref<248x8xf32, #tpu.memory_space<vmem>>, vector<8x8xf32>,
    %cst_29 = arith.constant 0.000000e+00 : f32
    %33 = vector.broadcast %cst_29 : f32 to vector<224x16xf32>
    %c0_30 = arith.constant 0 : index
    %c0_31 = arith.constant 0 : index
    %34 = vector.load %arg9[%c0_30, %c0_31] : memref<248x8xf32, #tpu.memory_space<vmem>>, vector<224x8xf32>
    %c0_32 = arith.constant 0 : index
    %c0_33 = arith.constant 0 : index
    %c0_34 = arith.constant 0 : index
    %35 = vector.load %arg4[%c0_32, %c0_33, %c0_34] : memref<4x8x16xf32, #tpu.memory_space<vmem>>, vector<1x8x16xf32>
    %36 = vector.shape_cast %35 : vector<1x8x16xf32> to vector<8x16xf32>
    %cst_35 = arith.constant dense<0.000000e+00> : vector<224x16xf32>
    %37 = tpu.matmul %34, %36, %cst_35 {dimension_numbers = #tpu.dot_dimension_numbers<[1], [0], [0], [1], [0, 0, 1, 1], [], []>} : vector<224x8xf32>, vector<8x16xf32>, vector<224x16xf32> -> vector<224x16xf32>
    %38 = arith.addf %33, %37 : vector<224x16xf32>
    %c1_36 = arith.constant 1 : index
    %c0_37 = arith.constant 0 : index
    %39 = vector.load %arg9[%c1_36, %c0_37] : memref<248x8xf32, #tpu.memory_space<vmem>>, vector<224x8xf32>
    %c1_38 = arith.constant 1 : index
    %c0_39 = arith.constant 0 : index
    %c0_40 = arith.constant 0 : index
    %40 = vector.load %arg4[%c1_38, %c0_39, %c0_40] : memref<4x8x16xf32, #tpu.memory_space<vmem>>, vector<1x8x16xf32>
    %41 = vector.shape_cast %40 : vector<1x8x16xf32> to vector<8x16xf32>
    %cst_41 = arith.constant dense<0.000000e+00> : vector<224x16xf32>
    %42 = tpu.matmul %39, %41, %cst_41 {dimension_numbers = #tpu.dot_dimension_numbers<[1], [0], [0], [1], [0, 0, 1, 1], [], []>} : vector<224x8xf32>, vector<8x16xf32>, vector<224x16xf32> -> vector<224x16xf32>
    %43 = arith.addf %38, %42 : vector<224x16xf32>
    %c16_42 = arith.constant 16 : index
    %c0_43 = arith.constant 0 : index
    %44 = vector.load %arg9[%c16_42, %c0_43] : memref<248x8xf32, #tpu.memory_space<vmem>>, vector<224x8xf32>
    %c2_44 = arith.constant 2 : index
    %c0_45 = arith.constant 0 : index
    %c0_46 = arith.constant 0 : index
    %45 = vector.load %arg4[%c2_44, %c0_45, %c0_46] : memref<4x8x16xf32, #tpu.memory_space<vmem>>, vector<1x8x16xf32>
    %46 = vector.shape_cast %45 : vector<1x8x16xf32> to vector<8x16xf32>
    %cst_47 = arith.constant dense<0.000000e+00> : vector<224x16xf32>
    %47 = tpu.matmul %44, %46, %cst_47 {dimension_numbers = #tpu.dot_dimension_numbers<[1], [0], [0], [1], [0, 0, 1, 1], [], []>} : vector<224x8xf32>, vector<8x16xf32>, vector<224x16xf32> -> vector<224x16xf32>
    %48 = arith.addf %43, %47 : vector<224x16xf32>
    %c17_48 = arith.constant 17 : index
    %c0_49 = arith.constant 0 : index
    %49 = vector.load %arg9[%c17_48, %c0_49] : memref<248x8xf32, #tpu.memory_space<vmem>>, vector<224x8xf32>
    %c3_50 = arith.constant 3 : index
    %c0_51 = arith.constant 0 : index
    %c0_52 = arith.constant 0 : index
    %50 = vector.load %arg4[%c3_50, %c0_51, %c0_52] : memref<4x8x16xf32, #tpu.memory_space<vmem>>, vector<1x8x16xf32>
    %51 = vector.shape_cast %50 : vector<1x8x16xf32> to vector<8x16xf32>
    %cst_53 = arith.constant dense<0.000000e+00> : vector<224x16xf32>
    %52 = tpu.matmul %49, %51, %cst_53 {dimension_numbers = #tpu.dot_dimension_numbers<[1], [0], [0], [1], [0, 0, 1, 1], [], []>} : vector<224x8xf32>, vector<8x16xf32>, vector<224x16xf32> -> vector<224x16xf32>
    %53 = arith.addf %48, %52 : vector<224x16xf32>
    %c0_54 = arith.constant 0 : index
    %c0_55 = arith.constant 0 : index
    %54 = vector.load %arg5[%c0_54, %c0_55] : memref<1x16xf32, #tpu.memory_space<vmem>>, vector<1x16xf32>
    %55 = vector.broadcast %54 : vector<1x16xf32> to vector<224x16xf32>
    %56 = arith.addf %53, %55 : vector<224x16xf32>
    %cst_56 = arith.constant 0.000000e+00 : f32
    %57 = vector.broadcast %cst_56 : f32 to vector<224x16xf32>
    %58 = arith.maximumf %56, %57 : vector<224x16xf32>
    %c0_57 = arith.constant 0 : index
    %c0_58 = arith.constant 0 : index
    %59 = vector.load %arg6[%c0_57, %c0_58] : memref<512x224xf32, #tpu.memory_space<vmem>>, vector<512x224xf32>
    %cst_59 = arith.constant dense<0.000000e+00> : vector<512x16xf32>
    %60 = tpu.matmul %59, %58, %cst_59 {dimension_numbers = #tpu.dot_dimension_numbers<[1], [0], [0], [1], [0, 0, 1, 1], [], []>} : vector<512x224xf32>, vector<224x16xf32>, vector<512x16xf32> -> vector<512x16xf32>
    %c0_60 = arith.constant 0 : index
    %c0_61 = arith.constant 0 : index
    %61 = vector.load %arg7[%c0_60, %c0_61] : memref<32x1xf32, #tpu.memory_space<vmem>>, vector<32x1xf32>
    %62 = vector.extract_strided_slice %60 {offsets = [0, 0], sizes = [32, 1], strides = [1, 1]} : vector<512x16xf32> to vector<32x1xf32>
    %63 = arith.addf %61, %62 : vector<32x1xf32>
    %64 = vector.extract_strided_slice %60 {offsets = [32, 1], sizes = [32, 1], strides = [1, 1]} : vector<512x16xf32> to vector<32x1xf32>
    %65 = arith.addf %63, %64 : vector<32x1xf32>
    %66 = vector.extract_strided_slice %60 {offsets = [64, 2], sizes = [32, 1], strides = [1, 1]} : vector<512x16xf32> to vector<32x1xf32>
    %67 = arith.addf %65, %66 : vector<32x1xf32>
    %68 = vector.extract_strided_slice %60 {offsets = [96, 3], sizes = [32, 1], strides = [1, 1]} : vector<512x16xf32> to vector<32x1xf32>
    %69 = arith.addf %67, %68 : vector<32x1xf32>
    %70 = vector.extract_strided_slice %60 {offsets = [128, 4], sizes = [32, 1], strides = [1, 1]} : vector<512x16xf32> to vector<32x1xf32>
    %71 = arith.addf %69, %70 : vector<32x1xf32>
    %72 = vector.extract_strided_slice %60 {offsets = [160, 5], sizes = [32, 1], strides = [1, 1]} : vector<512x16xf32> to vector<32x1xf32>
    %73 = arith.addf %71, %72 : vector<32x1xf32>
    %74 = vector.extract_strided_slice %60 {offsets = [192, 6], sizes = [32, 1], strides = [1, 1]} : vector<512x16xf32> to vector<32x1xf32>
    %75 = arith.addf %73, %74 : vector<32x1xf32>
    %76 = vector.extract_strided_slice %60 {offsets = [224, 7], sizes = [32, 1], strides = [1, 1]} : vector<512x16xf32> to vector<32x1xf32>
    %77 = arith.addf %75, %76 : vector<32x1xf32>
    %78 = vector.extract_strided_slice %60 {offsets = [256, 8], sizes = [32, 1], strides = [1, 1]} : vector<512x16xf32> to vector<32x1xf32>
    %79 = arith.addf %77, %78 : vector<32x1xf32>
    %80 = vector.extract_strided_slice %60 {offsets = [288, 9], sizes = [32, 1], strides = [1, 1]} : vector<512x16xf32> to vector<32x1xf32>
    %81 = arith.addf %79, %80 : vector<32x1xf32>
    %82 = vector.extract_strided_slice %60 {offsets = [320, 10], sizes = [32, 1], strides = [1, 1]} : vector<512x16xf32> to vector<32x1xf32>
    %83 = arith.addf %81, %82 : vector<32x1xf32>
    %84 = vector.extract_strided_slice %60 {offsets = [352, 11], sizes = [32, 1], strides = [1, 1]} : vector<512x16xf32> to vector<32x1xf32>
    %85 = arith.addf %83, %84 : vector<32x1xf32>
    %86 = vector.extract_strided_slice %60 {offsets = [384, 12], sizes = [32, 1], strides = [1, 1]} : vector<512x16xf32> to vector<32x1xf32>
    %87 = arith.addf %85, %86 : vector<32x1xf32>
    %88 = vector.extract_strided_slice %60 {offsets = [416, 13], sizes = [32, 1], strides = [1, 1]} : vector<512x16xf32> to vector<32x1xf32>
    %89 = arith.addf %87, %88 : vector<32x1xf32>
    %90 = vector.extract_strided_slice %60 {offsets = [448, 14], sizes = [32, 1], strides = [1, 1]} : vector<512x16xf32> to vector<32x1xf32>
    %91 = arith.addf %89, %90 : vector<32x1xf32>
    %92 = vector.extract_strided_slice %60 {offsets = [480, 15], sizes = [32, 1], strides = [1, 1]} : vector<512x16xf32> to vector<32x1xf32>
    %93 = arith.addf %91, %92 : vector<32x1xf32>
    %c0_62 = arith.constant 0 : index
    %c0_63 = arith.constant 0 : index
    %c0_64 = arith.constant 0 : index
    %94 = vector.load %arg8[%c0_62, %c0_63, %c0_64] : memref<1x32x1xf32, #tpu.memory_space<vmem>>, vector<1x32x1xf32>
    %95 = vector.shape_cast %94 : vector<1x32x1xf32> to vector<32x1xf32>
    %96 = vector.shape_cast %93 : vector<32x1xf32> to vector<1x32x1xf32>
    tpu.vector_store %arg8[%c0_62, %c0_63, %c0_64], %96 {strides = array<i32>} : memref<1x32x1xf32, #tpu.memory_space<vmem>>, vector<1x32x1xf32>,
    return
  }
  func.func @transform_0(%arg0: i32) -> (i32, i32, i32) {
    %c0_i32 = arith.constant 0 : i32
    %c0_i32_0 = arith.constant 0 : i32
    %c0_i32_1 = arith.constant 0 : i32
    return %arg0, %c0_i32, %c0_i32_0 : i32, i32, i32
  }
  func.func @transform_1(%arg0: i32) -> (i32, i32, i32) {
    %c0_i32 = arith.constant 0 : i32
    %c0_i32_0 = arith.constant 0 : i32
    %c0_i32_1 = arith.constant 0 : i32
    %c0_i32_2 = arith.constant 0 : i32
    return %c0_i32, %c0_i32_0, %c0_i32_1 : i32, i32, i32
  }
  func.func @transform_2(%arg0: i32) -> (i32, i32) {
    %c0_i32 = arith.constant 0 : i32
    %c0_i32_0 = arith.constant 0 : i32
    %c0_i32_1 = arith.constant 0 : i32
    return %c0_i32, %c0_i32_0 : i32, i32
  }
  func.func @transform_3(%arg0: i32) -> (i32, i32, i32) {
    %c0_i32 = arith.constant 0 : i32
    %c0_i32_0 = arith.constant 0 : i32
    %c0_i32_1 = arith.constant 0 : i32
    %c0_i32_2 = arith.constant 0 : i32
    return %c0_i32, %c0_i32_0, %c0_i32_1 : i32, i32, i32
  }
  func.func @transform_4(%arg0: i32) -> (i32, i32) {
    %c0_i32 = arith.constant 0 : i32
    %c0_i32_0 = arith.constant 0 : i32
    %c0_i32_1 = arith.constant 0 : i32
    return %c0_i32, %c0_i32_0 : i32, i32
  }
  func.func @transform_5(%arg0: i32) -> (i32, i32) {
    %c0_i32 = arith.constant 0 : i32
    %c0_i32_0 = arith.constant 0 : i32
    %c0_i32_1 = arith.constant 0 : i32
    return %c0_i32, %c0_i32_0 : i32, i32
  }
  func.func @transform_6(%arg0: i32) -> (i32, i32) {
    %c0_i32 = arith.constant 0 : i32
    %c0_i32_0 = arith.constant 0 : i32
    %c0_i32_1 = arith.constant 0 : i32
    return %c0_i32, %c0_i32_0 : i32, i32
  }
  func.func @transform_7(%arg0: i32) -> (i32, i32, i32) {
    %c0_i32 = arith.constant 0 : i32
    %c0_i32_0 = arith.constant 0 : i32
    %c0_i32_1 = arith.constant 0 : i32
    return %arg0, %c0_i32, %c0_i32_0 : i32, i32, i32
  }
}

</mosaic_0001>

<llo_original>
// kernel: _forward_impl.1
$region0: #{_forward_impl.1}
  #allocation0 [shape = 'u32[]', space=smem, size = 0x4, offset = 0x4, fixed_abs, tag = 'smem constant byte address 0x4 - core index']
  #allocation1 [shape = 'u32[144,128]{1,0:T(1,128)}', space=vmem, size = 0x12000, scoped, tag = 'internal scratch']
  #allocation2 [shape = 'f32[248,8]{1,0:T(8,128)}', space=vmem, size = 0x1f000, scoped, tag = 'scratch operand']
  %s0 = inlined_call_operand.vmem [shape: f32[2,264,4], index: 0, kind: input, shape index: {}]
  %s1 = inlined_call_operand.vmem [shape: f32[4,4,8], index: 1, kind: input, shape index: {}]
  %s2 = inlined_call_operand.vmem [shape: f32[1,8], index: 2, kind: input, shape index: {}]
  %s3 = inlined_call_operand.vmem [shape: f32[4,8,16], index: 3, kind: input, shape index: {}]
  %s4 = inlined_call_operand.vmem [shape: f32[1,16], index: 4, kind: input, shape index: {}]
  %s5 = inlined_call_operand.vmem [shape: f32[512,224], index: 5, kind: input, shape index: {}]
  %s6 = inlined_call_operand.vmem [shape: f32[32,1], index: 6, kind: input, shape index: {}]
  %s7 = inlined_call_operand.vmem [shape: f32[2,32,1], index: 7, kind: output, shape index: {}]
  %s8 = sld [smem:[#allocation0]]
  $region61: #{_forward_impl.1} parent=0
    _
  %s10 = ssub.s32 1, %s8
  %s11 = scalar_select 0, %s10, %s8
  loop: start=0, step=1, limit=4
  $region2: #{_forward_impl.1} parent=0 // loop_pre_header
    _
  $region3: #{_forward_impl.1} parent=0 // loop_header
    %s13 = sphi 0, %s17
    %p14 = scmp.ge.s32.totalorder %s13, 4
    %s23 = sphi 0, %s25
    %s26 = sphi 0, %s23
    %s27 = sphi 0, %s26
    %s43 = sphi 0, %s27
    %s47 = sphi 0, %s47
    %s49 = sphi 0, %s47
    %s50 = sphi 0, %s49
    %s64 = sphi 0, %s50
    %s68 = sphi 0, %s68
    %s70 = sphi 0, %s68
    %s71 = sphi 0, %s70
    %s85 = sphi 0, %s71
    %s89 = sphi 0, %s89
    %s91 = sphi 0, %s89
    %s92 = sphi 0, %s91
    %s106 = sphi 0, %s92
    %s110 = sphi 0, %s110
    %s112 = sphi 0, %s110
    %s113 = sphi 0, %s112
    %s127 = sphi 0, %s113
    %s131 = sphi 0, %s131
    %s133 = sphi 0, %s131
    %s134 = sphi 0, %s133
    %s148 = sphi 0, %s134
    %s152 = sphi 0, %s152
    %s154 = sphi 0, %s152
    %s155 = sphi 0, %s154
    %s169 = sphi 0, %s155
    %s175 = sphi 0, %s177
    %s178 = sphi 0, %s175
    %s179 = sphi 0, %s178
    %s195 = sphi 0, %s179
  $region4: #{_forward_impl.1} parent=0 // loop_header_branch
    %16 = sbr.rel (%p14) target = $region8
  $region5: #{_forward_impl.1} parent=0 // loop_body
    %s18 = ssub.s32 %s13, 1
    %s19 = ssub.s32 %s13, 2
    %s20 = sadd.s32 %s13, 1
    %s21 = ssub.s32 %s13, %s20
    %p22 = scmp.eq.s32.totalorder %s21, 0
    %s24 = sadd.s32 %s23, 1
    %s25 = scalar_select %p22, %s23, %s24
    %p28 = pneg %p22
    %p29 = scmp.eq.s32.totalorder %s13, 1
    %p30 = por %p28, %p29
    %p31 = scmp.ne.s32.totalorder %s23, %s26
    %p32 = scmp.eq.s32.totalorder %s13, 0
    %p33 = por %p31, %p32
    %p34 = scmp.ne.s32.totalorder %s23, %s26
    %p35 = scmp.eq.s32.totalorder %s18, 1
    %p36 = por %p34, %p35
    %p37 = scmp.ne.s32.totalorder %s26, %s27
    %p38 = scmp.eq.s32.totalorder %s18, 0
    %p39 = por %p37, %p38
    %p40 = scmp.ne.s32.totalorder %s26, %s27
    %p41 = scmp.eq.s32.totalorder %s19, 1
    %p42 = por %p40, %p41
    %p44 = scmp.ne.s32.totalorder %s27, %s43
    %p45 = scmp.eq.s32.totalorder %s19, 0
    %p46 = por %p44, %p45
    %s48 = sadd.s32 %s47, 1
    %p51 = scmp.eq.s32.totalorder %s13, 1
    %p52 = scmp.ne.s32.totalorder %s47, %s49
    %p53 = scmp.eq.s32.totalorder %s13, 0
    %p54 = por %p52, %p53
    %p55 = scmp.ne.s32.totalorder %s47, %s49
    %p56 = scmp.eq.s32.totalorder %s18, 1
    %p57 = por %p55, %p56
    %p58 = scmp.ne.s32.totalorder %s49, %s50
    %p59 = scmp.eq.s32.totalorder %s18, 0
    %p60 = por %p58, %p59
    %p61 = scmp.ne.s32.totalorder %s49, %s50
    %p62 = scmp.eq.s32.totalorder %s19, 1
    %p63 = por %p61, %p62
    %p65 = scmp.ne.s32.totalorder %s50, %s64
    %p66 = scmp.eq.s32.totalorder %s19, 0
    %p67 = por %p65, %p66
    %s69 = sadd.s32 %s68, 1
    %p72 = scmp.eq.s32.totalorder %s13, 1
    %p73 = scmp.ne.s32.totalorder %s68, %s70
    %p74 = scmp.eq.s32.totalorder %s13, 0
    %p75 = por %p73, %p74
    %p76 = scmp.ne.s32.totalorder %s68, %s70
    %p77 = scmp.eq.s32.totalorder %s18, 1
    %p78 = por %p76, %p77
    %p79 = scmp.ne.s32.totalorder %s70, %s71
    %p80 = scmp.eq.s32.totalorder %s18, 0
    %p81 = por %p79, %p80
    %p82 = scmp.ne.s32.totalorder %s70, %s71
    %p83 = scmp.eq.s32.totalorder %s19, 1
    %p84 = por %p82, %p83
    %p86 = scmp.ne.s32.totalorder %s71, %s85
    %p87 = scmp.eq.s32.totalorder %s19, 0
    %p88 = por %p86, %p87
    %s90 = sadd.s32 %s89, 1
    %p93 = scmp.eq.s32.totalorder %s13, 1
    %p94 = scmp.ne.s32.totalorder %s89, %s91
    %p95 = scmp.eq.s32.totalorder %s13, 0
    %p96 = por %p94, %p95
    %p97 = scmp.ne.s32.totalorder %s89, %s91
    %p98 = scmp.eq.s32.totalorder %s18, 1
    %p99 = por %p97, %p98
    %p100 = scmp.ne.s32.totalorder %s91, %s92
    %p101 = scmp.eq.s32.totalorder %s18, 0
    %p102 = por %p100, %p101
    %p103 = scmp.ne.s32.totalorder %s91, %s92
    %p104 = scmp.eq.s32.totalorder %s19, 1
    %p105 = por %p103, %p104
    %p107 = scmp.ne.s32.totalorder %s92, %s106
    %p108 = scmp.eq.s32.totalorder %s19, 0
    %p109 = por %p107, %p108
    %s111 = sadd.s32 %s110, 1
    %p114 = scmp.eq.s32.totalorder %s13, 1
    %p115 = scmp.ne.s32.totalorder %s110, %s112
    %p116 = scmp.eq.s32.totalorder %s13, 0
    %p117 = por %p115, %p116
    %p118 = scmp.ne.s32.totalorder %s110, %s112
    %p119 = scmp.eq.s32.totalorder %s18, 1
    %p120 = por %p118, %p119
    %p121 = scmp.ne.s32.totalorder %s112, %s113
    %p122 = scmp.eq.s32.totalorder %s18, 0
    %p123 = por %p121, %p122
    %p124 = scmp.ne.s32.totalorder %s112, %s113
    %p125 = scmp.eq.s32.totalorder %s19, 1
    %p126 = por %p124, %p125
    %p128 = scmp.ne.s32.totalorder %s113, %s127
    %p129 = scmp.eq.s32.totalorder %s19, 0
    %p130 = por %p128, %p129
    %s132 = sadd.s32 %s131, 1
    %p135 = scmp.eq.s32.totalorder %s13, 1
    %p136 = scmp.ne.s32.totalorder %s131, %s133
    %p137 = scmp.eq.s32.totalorder %s13, 0
    %p138 = por %p136, %p137
    %p139 = scmp.ne.s32.totalorder %s131, %s133
    %p140 = scmp.eq.s32.totalorder %s18, 1
    %p141 = por %p139, %p140
    %p142 = scmp.ne.s32.totalorder %s133, %s134
    %p143 = scmp.eq.s32.totalorder %s18, 0
    %p144 = por %p142, %p143
    %p145 = scmp.ne.s32.totalorder %s133, %s134
    %p146 = scmp.eq.s32.totalorder %s19, 1
    %p147 = por %p145, %p146
    %p149 = scmp.ne.s32.totalorder %s134, %s148
    %p150 = scmp.eq.s32.totalorder %s19, 0
    %p151 = por %p149, %p150
    %s153 = sadd.s32 %s152, 1
    %p156 = scmp.eq.s32.totalorder %s13, 1
    %p157 = scmp.ne.s32.totalorder %s152, %s154
    %p158 = scmp.eq.s32.totalorder %s13, 0
    %p159 = por %p157, %p158
    %p160 = scmp.ne.s32.totalorder %s152, %s154
    %p161 = scmp.eq.s32.totalorder %s18, 1
    %p162 = por %p160, %p161
    %p163 = scmp.ne.s32.totalorder %s154, %s155
    %p164 = scmp.eq.s32.totalorder %s18, 0
    %p165 = por %p163, %p164
    %p166 = scmp.ne.s32.totalorder %s154, %s155
    %p167 = scmp.eq.s32.totalorder %s19, 1
    %p168 = por %p166, %p167
    %p170 = scmp.ne.s32.totalorder %s155, %s169
    %p171 = scmp.eq.s32.totalorder %s19, 0
    %p172 = por %p170, %p171
    %s173 = ssub.s32 %s13, %s20
    %p174 = scmp.eq.s32.totalorder %s173, 0
    %s176 = sadd.s32 %s175, 1
    %s177 = scalar_select %p174, %s175, %s176
    %p180 = pneg %p174
    %p181 = scmp.eq.s32.totalorder %s13, 1
    %p182 = por %p180, %p181
    %p183 = scmp.ne.s32.totalorder %s175, %s178
    %p184 = scmp.eq.s32.totalorder %s13, 0
    %p185 = por %p183, %p184
    %p186 = scmp.ne.s32.totalorder %s175, %s178
    %p187 = scmp.eq.s32.totalorder %s18, 1
    %p188 = por %p186, %p187
    %p189 = scmp.ne.s32.totalorder %s178, %s179
    %p190 = scmp.eq.s32.totalorder %s18, 0
    %p191 = por %p189, %p190
    %p192 = scmp.ne.s32.totalorder %s178, %s179
    %p193 = scmp.eq.s32.totalorder %s19, 1
    %p194 = por %p192, %p193
    %p196 = scmp.ne.s32.totalorder %s179, %s195
    %p197 = scmp.eq.s32.totalorder %s19, 0
    %p198 = por %p196, %p197
    %p199 = scmp.le.s32.totalorder 1, %s13
    %p200 = scmp.lt.s32.totalorder %s13, 3
    %p201 = pnand %p199, %p200
    %p202 = pneg %p201
    // Predicated region
    $region9: #{_forward_impl.1} parent=5 // pred_check
      _
    $region10: #{_forward_impl.1} parent=5 // pred_check_branch
      %204 = sbr.rel (%p201) target = $region12
    $region11: #{_forward_impl.1} parent=5 // pred_region
      %s205 = ssub.s32 %s13, 1
      // Predicated region
      $region13: #{_forward_impl.1} parent=11 // pred_check
        %p206 = pneg %p60
      $region14: #{_forward_impl.1} parent=11 // pred_check_branch
        %208 = sbr.rel (%p206) target = $region16
      $region15: #{_forward_impl.1} parent=11 // pred_region
        _
      $region16: #{_forward_impl.1} parent=11 // pred_fallthru
        _
      // Predicated region
      $region17: #{_forward_impl.1} parent=11 // pred_check
        %p209 = pneg %p81
      $region18: #{_forward_impl.1} parent=11 // pred_check_branch
        %211 = sbr.rel (%p209) target = $region20
      $region19: #{_forward_impl.1} parent=11 // pred_region
        _
      $region20: #{_forward_impl.1} parent=11 // pred_fallthru
        _
      // Predicated region
      $region21: #{_forward_impl.1} parent=11 // pred_check
        %p212 = pneg %p102
      $region22: #{_forward_impl.1} parent=11 // pred_check_branch
        %214 = sbr.rel (%p212) target = $region24
      $region23: #{_forward_impl.1} parent=11 // pred_region
        _
      $region24: #{_forward_impl.1} parent=11 // pred_fallthru
        _
      // Predicated region
      $region25: #{_forward_impl.1} parent=11 // pred_check
        %p215 = pneg %p123
      $region26: #{_forward_impl.1} parent=11 // pred_check_branch
        %217 = sbr.rel (%p215) target = $region28
      $region27: #{_forward_impl.1} parent=11 // pred_region
        _
      $region28: #{_forward_impl.1} parent=11 // pred_fallthru
        _
      // Predicated region
      $region29: #{_forward_impl.1} parent=11 // pred_check
        %p218 = pneg %p144
      $region30: #{_forward_impl.1} parent=11 // pred_check_branch
        %220 = sbr.rel (%p218) target = $region32
      $region31: #{_forward_impl.1} parent=11 // pred_region
        _
      $region32: #{_forward_impl.1} parent=11 // pred_fallthru
        _
      // Predicated region
      $region33: #{_forward_impl.1} parent=11 // pred_check
        %p221 = pneg %p165
      $region34: #{_forward_impl.1} parent=11 // pred_check_branch
        %223 = sbr.rel (%p221) target = $region36
      $region35: #{_forward_impl.1} parent=11 // pred_region
        _
      $region36: #{_forward_impl.1} parent=11 // pred_fallthru
        _
    $region12: #{_forward_impl.1} parent=5 // pred_fallthru
      _
    %p224 = scmp.lt.s32.totalorder %s13, 2
    // Predicated region
    $region37: #{_forward_impl.1} parent=5 // pred_check
      %p225 = pneg %p224
    $region38: #{_forward_impl.1} parent=5 // pred_check_branch
      %227 = sbr.rel (%p225) target = $region40
    $region39: #{_forward_impl.1} parent=5 // pred_region
      // Predicated region
      $region41: #{_forward_impl.1} parent=39 // pred_check
        %p228 = pneg %p33
      $region42: #{_forward_impl.1} parent=39 // pred_check_branch
        %230 = sbr.rel (%p228) target = $region44
      $region43: #{_forward_impl.1} parent=39 // pred_region
        %p231 = scmp.lt.s32.totalorder %s13, 1
        %s232 = scalar_select %p231, %s13, 1
        %s233 = smul.addr %s232, 33
        %s234 = smul.addr %s233, 8
        %s235 = scalar_lea.vmem %s0, %s234
      $region44: #{_forward_impl.1} parent=39 // pred_fallthru
        _
    $region40: #{_forward_impl.1} parent=5 // pred_fallthru
      _
    %p236 = scmp.le.s32.totalorder 1, %s13
    %p237 = scmp.lt.s32.totalorder %s13, 3
    %p238 = pnand %p236, %p237
    %p239 = pneg %p238
    // Predicated region
    $region45: #{_forward_impl.1} parent=5 // pred_check
      _
    $region46: #{_forward_impl.1} parent=5 // pred_check_branch
      %241 = sbr.rel (%p238) target = $region48
    $region47: #{_forward_impl.1} parent=5 // pred_region
      %s242 = ssub.s32 %s13, 1
      %p243 = scmp.lt.s32.totalorder %s18, 1
      %s244 = scalar_select %p243, %s18, 1
      %s245 = smul.addr %s244, 33
      %s246 = smul.addr %s245, 8
      %s247 = scalar_lea.vmem %s0, %s246
      %p248 = pneg %p39
      %p249 = pneg %p36
      %p250 = pneg %p60
      %p251 = pneg %p57
      %p252 = pneg %p81
      %p253 = pneg %p78
      %p254 = pneg %p102
      %p255 = pneg %p99
      %p256 = pneg %p123
      %p257 = pneg %p120
      %p258 = pneg %p144
      %p259 = pneg %p141
      %p260 = pneg %p165
      %p261 = pneg %p162
      %p262 = pneg %p191
      %p263 = pneg %p188
      %p264 = scmp.lt.s32.totalorder %s18, 1
      %s265 = scalar_select %p264, %s18, 1
      %s266 = smul.addr %s265, 4
      %s267 = smul.addr %s266, 8
      %s268 = scalar_lea.vmem %s7, %s267
      %p269 = scmp.lt.s32.totalorder %s18, 1
      %s270 = scalar_select %p269, %s18, 1
      %s271 = smul.addr %s270, 33
      %s272 = smul.addr %s271, 8
      %s273 = scalar_lea.vmem %s0, %s272
      %p274 = scmp.lt.s32.totalorder %s18, 1
      %s275 = scalar_select %p274, %s18, 1
      %s276 = smul.addr %s275, 4
      %s277 = smul.addr %s276, 8
      %s278 = scalar_lea.vmem %s7, %s277
      %v279 = vld [vmem:[%s273] sm:$0xff]
      %v280 = vld [vmem:[%s273 + $0x8] sm:$0xff]
      %v281 = vld [vmem:[%s273 + $0x10] sm:$0xff]
      %v282 = vld [vmem:[%s273 + $0x18] sm:$0xff]
      %v283 = vld [vmem:[%s273 + $0x20] sm:$0xff]
      %v284 = vld [vmem:[%s273 + $0x28] sm:$0xff]
      %v285 = vld [vmem:[%s273 + $0x30] sm:$0xff]
      %v286 = vld [vmem:[%s273 + $0x38] sm:$0xff]
      %v287 = vld [vmem:[%s273 + $0x40] sm:$0xff]
      %v288 = vld [vmem:[%s273 + $0x48] sm:$0xff]
      %v289 = vld [vmem:[%s273 + $0x50] sm:$0xff]
      %v290 = vld [vmem:[%s273 + $0x58] sm:$0xff]
      %v291 = vld [vmem:[%s273 + $0x60] sm:$0xff]
      %v292 = vld [vmem:[%s273 + $0x68] sm:$0xff]
      %v293 = vld [vmem:[%s273 + $0x70] sm:$0xff]
      %v294 = vld [vmem:[%s273 + $0x78] sm:$0xff]
      %v295 = vld [vmem:[%s273 + $0x80] sm:$0xff]
      %v296 = vld [vmem:[%s273 + $0x88] sm:$0xff]
      %v297 = vld [vmem:[%s273 + $0x90] sm:$0xff]
      %v298 = vld [vmem:[%s273 + $0x98] sm:$0xff]
      %v299 = vld [vmem:[%s273 + $0xa0] sm:$0xff]
      %v300 = vld [vmem:[%s273 + $0xa8] sm:$0xff]
      %v301 = vld [vmem:[%s273 + $0xb0] sm:$0xff]
      %v302 = vld [vmem:[%s273 + $0xb8] sm:$0xff]
      %v303 = vld [vmem:[%s273 + $0xc0] sm:$0xff]
      %v304 = vld [vmem:[%s273 + $0xc8] sm:$0xff]
      %v305 = vld [vmem:[%s273 + $0xd0] sm:$0xff]
      %v306 = vld [vmem:[%s273 + $0xd8] sm:$0xff]
      %v307 = vld [vmem:[%s273 + $0xe0] sm:$0xff]
      %v308 = vld [vmem:[%s273 + $0xe8] sm:$0xff]
      %v309 = vld [vmem:[%s1] sm:$0xf]
      %v310 = vld [vmem:[%s273 + $0x1] sm:$0xff]
      %v311 = vld [vmem:[%s273 + $0x9] sm:$0xff]
      %v312 = vld [vmem:[%s273 + $0x11] sm:$0xff]
      %v313 = vld [vmem:[%s273 + $0x19] sm:$0xff]
      %v314 = vld [vmem:[%s273 + $0x21] sm:$0xff]
      %v315 = vld [vmem:[%s273 + $0x29] sm:$0xff]
      %v316 = vld [vmem:[%s273 + $0x31] sm:$0xff]
      %v317 = vld [vmem:[%s273 + $0x39] sm:$0xff]
      %v318 = vld [vmem:[%s273 + $0x41] sm:$0xff]
      %v319 = vld [vmem:[%s273 + $0x49] sm:$0xff]
      %v320 = vld [vmem:[%s273 + $0x51] sm:$0xff]
      %v321 = vld [vmem:[%s273 + $0x59] sm:$0xff]
      %v322 = vld [vmem:[%s273 + $0x61] sm:$0xff]
      %v323 = vld [vmem:[%s273 + $0x69] sm:$0xff]
      %v324 = vld [vmem:[%s273 + $0x71] sm:$0xff]
      %v325 = vld [vmem:[%s273 + $0x79] sm:$0xff]
      %v326 = vld [vmem:[%s273 + $0x81] sm:$0xff]
      %v327 = vld [vmem:[%s273 + $0x89] sm:$0xff]
      %v328 = vld [vmem:[%s273 + $0x91] sm:$0xff]
      %v329 = vld [vmem:[%s273 + $0x99] sm:$0xff]
      %v330 = vld [vmem:[%s273 + $0xa1] sm:$0xff]
      %v331 = vld [vmem:[%s273 + $0xa9] sm:$0xff]
      %v332 = vld [vmem:[%s273 + $0xb1] sm:$0xff]
      %v333 = vld [vmem:[%s273 + $0xb9] sm:$0xff]
      %v334 = vld [vmem:[%s273 + $0xc1] sm:$0xff]
      %v335 = vld [vmem:[%s273 + $0xc9] sm:$0xff]
      %v336 = vld [vmem:[%s273 + $0xd1] sm:$0xff]
      %v337 = vld [vmem:[%s273 + $0xd9] sm:$0xff]
      %v338 = vld [vmem:[%s273 + $0xe1] sm:$0xff]
      %v339 = vld [vmem:[%s273 + $0xe9] sm:$0xff]
      %s340 = scalar_lea.vmem %s1, 4
      %v341 = vld [vmem:[%s340] sm:$0xf]
      %vm342 = vcmask 31744
      %v344 = vsel %vm342, %v310, 0
      %v347 = vsel %vm342, %v311, 0
      %v350 = vsel %vm342, %v312, 0
      %v353 = vsel %vm342, %v313, 0
      %v356 = vsel %vm342, %v314, 0
      %v359 = vsel %vm342, %v315, 0
      %v362 = vsel %vm342, %v316, 0
      %v365 = vsel %vm342, %v317, 0
      %v368 = vsel %vm342, %v318, 0
      %v371 = vsel %vm342, %v319, 0
      %v374 = vsel %vm342, %v320, 0
      %v377 = vsel %vm342, %v321, 0
      %v380 = vsel %vm342, %v322, 0
      %v383 = vsel %vm342, %v323, 0
      %v386 = vsel %vm342, %v324, 0
      %v389 = vsel %vm342, %v325, 0
      %v392 = vsel %vm342, %v326, 0
      %v395 = vsel %vm342, %v327, 0
      %v398 = vsel %vm342, %v328, 0
      %v401 = vsel %vm342, %v329, 0
      %v404 = vsel %vm342, %v330, 0
      %v407 = vsel %vm342, %v331, 0
      %v410 = vsel %vm342, %v332, 0
      %v413 = vsel %vm342, %v333, 0
      %v416 = vsel %vm342, %v334, 0
      %v419 = vsel %vm342, %v335, 0
      %v422 = vsel %vm342, %v336, 0
      %v425 = vsel %vm342, %v337, 0
      %v428 = vsel %vm342, %v338, 0
      %v431 = vsel %vm342, %v339, 0
      %vm433 = vcmask 1043456
      %v435 = vsel %vm433, %v341, 0
      %437 = vmatprep.subr.mxu0 0.0
      %438 = vmatpush1.msra.mxu0 0.0
      %439 = vmatprep.subr.mxu0 0.0
      %440 = vmatpush1.msra.mxu0 0.0
      %441 = vmatprep.subr.mxu0 0.0
      %442 = vmatpush1.msra.mxu0 0.0
      %443 = vmatprep.subr.mxu0 0.0
      %444 = vmatpush1.msra.mxu0 0.0
      %445 = vmatprep.subr.mxu0 0.0
      %446 = vmatpush1.msra.mxu0 0.0
      %447 = vmatprep.subr.mxu0 0.0
      %448 = vmatpush1.msra.mxu0 0.0
      %449 = vmatprep.subr.mxu0 0.0
      %450 = vmatpush1.msra.mxu0 0.0
      %451 = vmatprep.subr.mxu0 0.0
      %452 = vmatpush1.msra.mxu0 0.0
      %453 = vmatprep.subr.mxu0 0.0
      %454 = vmatpush1.msra.mxu0 0.0
      %455 = vmatprep.subr.mxu0 0.0
      %456 = vmatpush1.msra.mxu0 0.0
      %457 = vmatprep.subr.mxu0 0.0
      %458 = vmatpush1.msra.mxu0 0.0
      %459 = vmatprep.subr.mxu0 0.0
      %460 = vmatpush1.msra.mxu0 0.0
      %461 = vmatprep.subr.mxu0 0.0
      %462 = vmatpush1.msra.mxu0 0.0
      %463 = vmatprep.subr.mxu0 0.0
      %464 = vmatpush1.msra.mxu0 0.0
      %465 = vmatprep.subr.mxu0 0.0
      %466 = vmatpush1.msra.mxu0 0.0
      %467 = vmatprep.subr.mxu0 0.0
      %468 = vmatpush1.msra.mxu0 %v435
      %469 = vmatprep.subr.mxu0 0.0
      %470 = vmatpush2.msra.mxu0 0.0
      %471 = vmatprep.subr.mxu0 0.0
      %472 = vmatpush2.msra.mxu0 0.0
      %473 = vmatprep.subr.mxu0 0.0
      %474 = vmatpush2.msra.mxu0 0.0
      %475 = vmatprep.subr.mxu0 0.0
      %476 = vmatpush2.msra.mxu0 0.0
      %477 = vmatprep.subr.mxu0 0.0
      %478 = vmatpush2.msra.mxu0 0.0
      %479 = vmatprep.subr.mxu0 0.0
      %480 = vmatpush2.msra.mxu0 0.0
      %481 = vmatprep.subr.mxu0 0.0
      %482 = vmatpush2.msra.mxu0 0.0
      %483 = vmatprep.subr.mxu0 0.0
      %484 = vmatpush2.msra.mxu0 0.0
      %485 = vmatprep.subr.mxu0 0.0
      %486 = vmatpush2.msra.mxu0 0.0
      %487 = vmatprep.subr.mxu0 0.0
      %488 = vmatpush2.msra.mxu0 0.0
      %489 = vmatprep.subr.mxu0 0.0
      %490 = vmatpush2.msra.mxu0 0.0
      %491 = vmatprep.subr.mxu0 0.0
      %492 = vmatpush2.msra.mxu0 0.0
      %493 = vmatprep.subr.mxu0 0.0
      %494 = vmatpush2.msra.mxu0 0.0
      %495 = vmatprep.subr.mxu0 0.0
      %496 = vmatpush2.msra.mxu0 0.0
      %497 = vmatprep.subr.mxu0 0.0
      %498 = vmatpush2.msra.mxu0 0.0
      %499 = vmatprep.subr.mxu0 0.0
      %500 = vmatpush2.msra.mxu0 0.0
      %501 = vmatprep.mubr.f32.mxu0 0.0
      %502 = vmatmul.mubr.f32.gmra.mxu0 %v344
      %v503 = vpop.f32.mrf.mxu0
      %v504 = vadd.f32 0.0, %v503
      %v505 = vpop.f32.mrf.mxu0
      %506 = vmatprep.mubr.f32.mxu0 0.0
      %507 = vmatmul.mubr.f32.gmra.mxu0 %v347
      %v508 = vpop.f32.mrf.mxu0
      %v509 = vadd.f32 0.0, %v508
      %v510 = vpop.f32.mrf.mxu0
      %511 = vmatprep.mubr.f32.mxu0 0.0
      %512 = vmatmul.mubr.f32.gmra.mxu0 %v350
      %v513 = vpop.f32.mrf.mxu0
      %v514 = vadd.f32 0.0, %v513
      %v515 = vpop.f32.mrf.mxu0
      %516 = vmatprep.mubr.f32.mxu0 0.0
      %517 = vmatmul.mubr.f32.gmra.mxu0 %v353
      %v518 = vpop.f32.mrf.mxu0
      %v519 = vadd.f32 0.0, %v518
      %v520 = vpop.f32.mrf.mxu0
      %521 = vmatprep.mubr.f32.mxu0 0.0
      %522 = vmatmul.mubr.f32.gmra.mxu0 %v356
      %v523 = vpop.f32.mrf.mxu0
      %v524 = vadd.f32 0.0, %v523
      %v525 = vpop.f32.mrf.mxu0
      %526 = vmatprep.mubr.f32.mxu0 0.0
      %527 = vmatmul.mubr.f32.gmra.mxu0 %v359
      %v528 = vpop.f32.mrf.mxu0
      %v529 = vadd.f32 0.0, %v528
      %v530 = vpop.f32.mrf.mxu0
      %531 = vmatprep.mubr.f32.mxu0 0.0
      %532 = vmatmul.mubr.f32.gmra.mxu0 %v362
      %v533 = vpop.f32.mrf.mxu0
      %v534 = vadd.f32 0.0, %v533
      %v535 = vpop.f32.mrf.mxu0
      %536 = vmatprep.mubr.f32.mxu0 0.0
      %537 = vmatmul.mubr.f32.gmra.mxu0 %v365
      %v538 = vpop.f32.mrf.mxu0
      %v539 = vadd.f32 0.0, %v538
      %v540 = vpop.f32.mrf.mxu0
      %541 = vmatprep.mubr.f32.mxu0 0.0
      %542 = vmatmul.mubr.f32.gmra.mxu0 %v368
      %v543 = vpop.f32.mrf.mxu0
      %v544 = vadd.f32 0.0, %v543
      %v545 = vpop.f32.mrf.mxu0
      %546 = vmatprep.mubr.f32.mxu0 0.0
      %547 = vmatmul.mubr.f32.gmra.mxu0 %v371
      %v548 = vpop.f32.mrf.mxu0
      %v549 = vadd.f32 0.0, %v548
      %v550 = vpop.f32.mrf.mxu0
      %551 = vmatprep.mubr.f32.mxu0 0.0
      %552 = vmatmul.mubr.f32.gmra.mxu0 %v374
      %v553 = vpop.f32.mrf.mxu0
      %v554 = vadd.f32 0.0, %v553
      %v555 = vpop.f32.mrf.mxu0
      %556 = vmatprep.mubr.f32.mxu0 0.0
      %557 = vmatmul.mubr.f32.gmra.mxu0 %v377
      %v558 = vpop.f32.mrf.mxu0
      %v559 = vadd.f32 0.0, %v558
      %v560 = vpop.f32.mrf.mxu0
      %561 = vmatprep.mubr.f32.mxu0 0.0
      %562 = vmatmul.mubr.f32.gmra.mxu0 %v380
      %v563 = vpop.f32.mrf.mxu0
      %v564 = vadd.f32 0.0, %v563
      %v565 = vpop.f32.mrf.mxu0
      %566 = vmatprep.mubr.f32.mxu0 0.0
      %567 = vmatmul.mubr.f32.gmra.mxu0 %v383
      %v568 = vpop.f32.mrf.mxu0
      %v569 = vadd.f32 0.0, %v568
      %v570 = vpop.f32.mrf.mxu0
      %571 = vmatprep.mubr.f32.mxu0 0.0
      %572 = vmatmul.mubr.f32.gmra.mxu0 %v386
      %v573 = vpop.f32.mrf.mxu0
      %v574 = vadd.f32 0.0, %v573
      %v575 = vpop.f32.mrf.mxu0
      %576 = vmatprep.mubr.f32.mxu0 0.0
      %577 = vmatmul.mubr.f32.gmra.mxu0 %v389
      %v578 = vpop.f32.mrf.mxu0
      %v579 = vadd.f32 0.0, %v578
      %v580 = vpop.f32.mrf.mxu0
      %581 = vmatprep.mubr.f32.mxu0 0.0
      %582 = vmatmul.mubr.f32.gmra.mxu0 %v392
      %v583 = vpop.f32.mrf.mxu0
      %v584 = vadd.f32 0.0, %v583
      %v585 = vpop.f32.mrf.mxu0
      %586 = vmatprep.mubr.f32.mxu0 0.0
      %587 = vmatmul.mubr.f32.gmra.mxu0 %v395
      %v588 = vpop.f32.mrf.mxu0
      %v589 = vadd.f32 0.0, %v588
      %v590 = vpop.f32.mrf.mxu0
      %591 = vmatprep.mubr.f32.mxu0 0.0
      %592 = vmatmul.mubr.f32.gmra.mxu0 %v398
      %v593 = vpop.f32.mrf.mxu0
      %v594 = vadd.f32 0.0, %v593
      %v595 = vpop.f32.mrf.mxu0
      %596 = vmatprep.mubr.f32.mxu0 0.0
      %597 = vmatmul.mubr.f32.gmra.mxu0 %v401
      %v598 = vpop.f32.mrf.mxu0
      %v599 = vadd.f32 0.0, %v598
      %v600 = vpop.f32.mrf.mxu0
      %601 = vmatprep.mubr.f32.mxu0 0.0
      %602 = vmatmul.mubr.f32.gmra.mxu0 %v404
      %v603 = vpop.f32.mrf.mxu0
      %v604 = vadd.f32 0.0, %v603
      %v605 = vpop.f32.mrf.mxu0
      %606 = vmatprep.mubr.f32.mxu0 0.0
      %607 = vmatmul.mubr.f32.gmra.mxu0 %v407
      %v608 = vpop.f32.mrf.mxu0
      %v609 = vadd.f32 0.0, %v608
      %v610 = vpop.f32.mrf.mxu0
      %611 = vmatprep.mubr.f32.mxu0 0.0
      %612 = vmatmul.mubr.f32.gmra.mxu0 %v410
      %v613 = vpop.f32.mrf.mxu0
      %v614 = vadd.f32 0.0, %v613
      %v615 = vpop.f32.mrf.mxu0
      %616 = vmatprep.mubr.f32.mxu0 0.0
      %617 = vmatmul.mubr.f32.gmra.mxu0 %v413
      %v618 = vpop.f32.mrf.mxu0
      %v619 = vadd.f32 0.0, %v618
      %v620 = vpop.f32.mrf.mxu0
      %621 = vmatprep.mubr.f32.mxu0 0.0
      %622 = vmatmul.mubr.f32.gmra.mxu0 %v416
      %v623 = vpop.f32.mrf.mxu0
      %v624 = vadd.f32 0.0, %v623
      %v625 = vpop.f32.mrf.mxu0
      %626 = vmatprep.mubr.f32.mxu0 0.0
      %627 = vmatmul.mubr.f32.gmra.mxu0 %v419
      %v628 = vpop.f32.mrf.mxu0
      %v629 = vadd.f32 0.0, %v628
      %v630 = vpop.f32.mrf.mxu0
      %631 = vmatprep.mubr.f32.mxu0 0.0
      %632 = vmatmul.mubr.f32.gmra.mxu0 %v422
      %v633 = vpop.f32.mrf.mxu0
      %v634 = vadd.f32 0.0, %v633
      %v635 = vpop.f32.mrf.mxu0
      %636 = vmatprep.mubr.f32.mxu0 0.0
      %637 = vmatmul.mubr.f32.gmra.mxu0 %v425
      %v638 = vpop.f32.mrf.mxu0
      %v639 = vadd.f32 0.0, %v638
      %v640 = vpop.f32.mrf.mxu0
      %641 = vmatprep.mubr.f32.mxu0 0.0
      %642 = vmatmul.mubr.f32.gmra.mxu0 %v428
      %v643 = vpop.f32.mrf.mxu0
      %v644 = vadd.f32 0.0, %v643
      %v645 = vpop.f32.mrf.mxu0
      %646 = vmatprep.mubr.f32.mxu0 0.0
      %647 = vmatmul.mubr.f32.gmra.mxu0 %v431
      %v648 = vpop.f32.mrf.mxu0
      %v649 = vadd.f32 0.0, %v648
      %v650 = vpop.f32.mrf.mxu0
      %651 = vdwg.mxu0
      %v653 = vsel %vm342, %v279, 0
      %v656 = vsel %vm342, %v280, 0
      %v659 = vsel %vm342, %v281, 0
      %v662 = vsel %vm342, %v282, 0
      %v665 = vsel %vm342, %v283, 0
      %v668 = vsel %vm342, %v284, 0
      %v671 = vsel %vm342, %v285, 0
      %v674 = vsel %vm342, %v286, 0
      %v677 = vsel %vm342, %v287, 0
      %v680 = vsel %vm342, %v288, 0
      %v683 = vsel %vm342, %v289, 0
      %v686 = vsel %vm342, %v290, 0
      %v689 = vsel %vm342, %v291, 0
      %v692 = vsel %vm342, %v292, 0
      %v695 = vsel %vm342, %v293, 0
      %v698 = vsel %vm342, %v294, 0
      %v701 = vsel %vm342, %v295, 0
      %v704 = vsel %vm342, %v296, 0
      %v707 = vsel %vm342, %v297, 0
      %v710 = vsel %vm342, %v298, 0
      %v713 = vsel %vm342, %v299, 0
      %v716 = vsel %vm342, %v300, 0
      %v719 = vsel %vm342, %v301, 0
      %v722 = vsel %vm342, %v302, 0
      %v725 = vsel %vm342, %v303, 0
      %v728 = vsel %vm342, %v304, 0
      %v731 = vsel %vm342, %v305, 0
      %v734 = vsel %vm342, %v306, 0
      %v737 = vsel %vm342, %v307, 0
      %v740 = vsel %vm342, %v308, 0
      %v743 = vsel %vm433, %v309, 0
      %745 = vmatprep.subr.mxu0 0.0
      %746 = vmatpush1.msra.mxu0 0.0
      %747 = vmatprep.subr.mxu0 0.0
      %748 = vmatpush1.msra.mxu0 0.0
      %749 = vmatprep.subr.mxu0 0.0
      %750 = vmatpush1.msra.mxu0 0.0
      %751 = vmatprep.subr.mxu0 0.0
      %752 = vmatpush1.msra.mxu0 0.0
      %753 = vmatprep.subr.mxu0 0.0
      %754 = vmatpush1.msra.mxu0 0.0
      %755 = vmatprep.subr.mxu0 0.0
      %756 = vmatpush1.msra.mxu0 0.0
      %757 = vmatprep.subr.mxu0 0.0
      %758 = vmatpush1.msra.mxu0 0.0
      %759 = vmatprep.subr.mxu0 0.0
      %760 = vmatpush1.msra.mxu0 0.0
      %761 = vmatprep.subr.mxu0 0.0
      %762 = vmatpush1.msra.mxu0 0.0
      %763 = vmatprep.subr.mxu0 0.0
      %764 = vmatpush1.msra.mxu0 0.0
      %765 = vmatprep.subr.mxu0 0.0
      %766 = vmatpush1.msra.mxu0 0.0
      %767 = vmatprep.subr.mxu0 0.0
      %768 = vmatpush1.msra.mxu0 0.0
      %769 = vmatprep.subr.mxu0 0.0
      %770 = vmatpush1.msra.mxu0 0.0
      %771 = vmatprep.subr.mxu0 0.0
      %772 = vmatpush1.msra.mxu0 0.0
      %773 = vmatprep.subr.mxu0 0.0
      %774 = vmatpush1.msra.mxu0 0.0
      %775 = vmatprep.subr.mxu0 0.0
      %776 = vmatpush1.msra.mxu0 %v743
      %777 = vmatprep.subr.mxu0 0.0
      %778 = vmatpush2.msra.mxu0 0.0
      %779 = vmatprep.subr.mxu0 0.0
      %780 = vmatpush2.msra.mxu0 0.0
      %781 = vmatprep.subr.mxu0 0.0
      %782 = vmatpush2.msra.mxu0 0.0
      %783 = vmatprep.subr.mxu0 0.0
      %784 = vmatpush2.msra.mxu0 0.0
      %785 = vmatprep.subr.mxu0 0.0
      %786 = vmatpush2.msra.mxu0 0.0
      %787 = vmatprep.subr.mxu0 0.0
      %788 = vmatpush2.msra.mxu0 0.0
      %789 = vmatprep.subr.mxu0 0.0
      %790 = vmatpush2.msra.mxu0 0.0
      %791 = vmatprep.subr.mxu0 0.0
      %792 = vmatpush2.msra.mxu0 0.0
      %793 = vmatprep.subr.mxu0 0.0
      %794 = vmatpush2.msra.mxu0 0.0
      %795 = vmatprep.subr.mxu0 0.0
      %796 = vmatpush2.msra.mxu0 0.0
      %797 = vmatprep.subr.mxu0 0.0
      %798 = vmatpush2.msra.mxu0 0.0
      %799 = vmatprep.subr.mxu0 0.0
      %800 = vmatpush2.msra.mxu0 0.0
      %801 = vmatprep.subr.mxu0 0.0
      %802 = vmatpush2.msra.mxu0 0.0
      %803 = vmatprep.subr.mxu0 0.0
      %804 = vmatpush2.msra.mxu0 0.0
      %805 = vmatprep.subr.mxu0 0.0
      %806 = vmatpush2.msra.mxu0 0.0
      %807 = vmatprep.subr.mxu0 0.0
      %808 = vmatpush2.msra.mxu0 0.0
      %809 = vmatprep.mubr.f32.mxu0 0.0
      %810 = vmatmul.mubr.f32.gmra.mxu0 %v653
      %v811 = vpop.f32.mrf.mxu0
      %v812 = vadd.f32 %v504, %v811
      %v813 = vpop.f32.mrf.mxu0
      %814 = vmatprep.mubr.f32.mxu0 0.0
      %815 = vmatmul.mubr.f32.gmra.mxu0 %v656
      %v816 = vpop.f32.mrf.mxu0
      %v817 = vadd.f32 %v509, %v816
      %v818 = vpop.f32.mrf.mxu0
      %819 = vmatprep.mubr.f32.mxu0 0.0
      %820 = vmatmul.mubr.f32.gmra.mxu0 %v659
      %v821 = vpop.f32.mrf.mxu0
      %v822 = vadd.f32 %v514, %v821
      %v823 = vpop.f32.mrf.mxu0
      %824 = vmatprep.mubr.f32.mxu0 0.0
      %825 = vmatmul.mubr.f32.gmra.mxu0 %v662
      %v826 = vpop.f32.mrf.mxu0
      %v827 = vadd.f32 %v519, %v826
      %v828 = vpop.f32.mrf.mxu0
      %829 = vmatprep.mubr.f32.mxu0 0.0
      %830 = vmatmul.mubr.f32.gmra.mxu0 %v665
      %v831 = vpop.f32.mrf.mxu0
      %v832 = vadd.f32 %v524, %v831
      %v833 = vpop.f32.mrf.mxu0
      %834 = vmatprep.mubr.f32.mxu0 0.0
      %835 = vmatmul.mubr.f32.gmra.mxu0 %v668
      %v836 = vpop.f32.mrf.mxu0
      %v837 = vadd.f32 %v529, %v836
      %v838 = vpop.f32.mrf.mxu0
      %839 = vmatprep.mubr.f32.mxu0 0.0
      %840 = vmatmul.mubr.f32.gmra.mxu0 %v671
      %v841 = vpop.f32.mrf.mxu0
      %v842 = vadd.f32 %v534, %v841
      %v843 = vpop.f32.mrf.mxu0
      %844 = vmatprep.mubr.f32.mxu0 0.0
      %845 = vmatmul.mubr.f32.gmra.mxu0 %v674
      %v846 = vpop.f32.mrf.mxu0
      %v847 = vadd.f32 %v539, %v846
      %v848 = vpop.f32.mrf.mxu0
      %849 = vmatprep.mubr.f32.mxu0 0.0
      %850 = vmatmul.mubr.f32.gmra.mxu0 %v677
      %v851 = vpop.f32.mrf.mxu0
      %v852 = vadd.f32 %v544, %v851
      %v853 = vpop.f32.mrf.mxu0
      %854 = vmatprep.mubr.f32.mxu0 0.0
      %855 = vmatmul.mubr.f32.gmra.mxu0 %v680
      %v856 = vpop.f32.mrf.mxu0
      %v857 = vadd.f32 %v549, %v856
      %v858 = vpop.f32.mrf.mxu0
      %859 = vmatprep.mubr.f32.mxu0 0.0
      %860 = vmatmul.mubr.f32.gmra.mxu0 %v683
      %v861 = vpop.f32.mrf.mxu0
      %v862 = vadd.f32 %v554, %v861
      %v863 = vpop.f32.mrf.mxu0
      %864 = vmatprep.mubr.f32.mxu0 0.0
      %865 = vmatmul.mubr.f32.gmra.mxu0 %v686
      %v866 = vpop.f32.mrf.mxu0
      %v867 = vadd.f32 %v559, %v866
      %v868 = vpop.f32.mrf.mxu0
      %869 = vmatprep.mubr.f32.mxu0 0.0
      %870 = vmatmul.mubr.f32.gmra.mxu0 %v689
      %v871 = vpop.f32.mrf.mxu0
      %v872 = vadd.f32 %v564, %v871
      %v873 = vpop.f32.mrf.mxu0
      %874 = vmatprep.mubr.f32.mxu0 0.0
      %875 = vmatmul.mubr.f32.gmra.mxu0 %v692
      %v876 = vpop.f32.mrf.mxu0
      %v877 = vadd.f32 %v569, %v876
      %v878 = vpop.f32.mrf.mxu0
      %879 = vmatprep.mubr.f32.mxu0 0.0
      %880 = vmatmul.mubr.f32.gmra.mxu0 %v695
      %v881 = vpop.f32.mrf.mxu0
      %v882 = vadd.f32 %v574, %v881
      %v883 = vpop.f32.mrf.mxu0
      %884 = vmatprep.mubr.f32.mxu0 0.0
      %885 = vmatmul.mubr.f32.gmra.mxu0 %v698
      %v886 = vpop.f32.mrf.mxu0
      %v887 = vadd.f32 %v579, %v886
      %v888 = vpop.f32.mrf.mxu0
      %889 = vmatprep.mubr.f32.mxu0 0.0
      %890 = vmatmul.mubr.f32.gmra.mxu0 %v701
      %v891 = vpop.f32.mrf.mxu0
      %v892 = vadd.f32 %v584, %v891
      %v893 = vpop.f32.mrf.mxu0
      %894 = vmatprep.mubr.f32.mxu0 0.0
      %895 = vmatmul.mubr.f32.gmra.mxu0 %v704
      %v896 = vpop.f32.mrf.mxu0
      %v897 = vadd.f32 %v589, %v896
      %v898 = vpop.f32.mrf.mxu0
      %899 = vmatprep.mubr.f32.mxu0 0.0
      %900 = vmatmul.mubr.f32.gmra.mxu0 %v707
      %v901 = vpop.f32.mrf.mxu0
      %v902 = vadd.f32 %v594, %v901
      %v903 = vpop.f32.mrf.mxu0
      %904 = vmatprep.mubr.f32.mxu0 0.0
      %905 = vmatmul.mubr.f32.gmra.mxu0 %v710
      %v906 = vpop.f32.mrf.mxu0
      %v907 = vadd.f32 %v599, %v906
      %v908 = vpop.f32.mrf.mxu0
      %909 = vmatprep.mubr.f32.mxu0 0.0
      %910 = vmatmul.mubr.f32.gmra.mxu0 %v713
      %v911 = vpop.f32.mrf.mxu0
      %v912 = vadd.f32 %v604, %v911
      %v913 = vpop.f32.mrf.mxu0
      %914 = vmatprep.mubr.f32.mxu0 0.0
      %915 = vmatmul.mubr.f32.gmra.mxu0 %v716
      %v916 = vpop.f32.mrf.mxu0
      %v917 = vadd.f32 %v609, %v916
      %v918 = vpop.f32.mrf.mxu0
      %919 = vmatprep.mubr.f32.mxu0 0.0
      %920 = vmatmul.mubr.f32.gmra.mxu0 %v719
      %v921 = vpop.f32.mrf.mxu0
      %v922 = vadd.f32 %v614, %v921
      %v923 = vpop.f32.mrf.mxu0
      %924 = vmatprep.mubr.f32.mxu0 0.0
      %925 = vmatmul.mubr.f32.gmra.mxu0 %v722
      %v926 = vpop.f32.mrf.mxu0
      %v927 = vadd.f32 %v619, %v926
      %v928 = vpop.f32.mrf.mxu0
      %929 = vmatprep.mubr.f32.mxu0 0.0
      %930 = vmatmul.mubr.f32.gmra.mxu0 %v725
      %v931 = vpop.f32.mrf.mxu0
      %v932 = vadd.f32 %v624, %v931
      %v933 = vpop.f32.mrf.mxu0
      %934 = vmatprep.mubr.f32.mxu0 0.0
      %935 = vmatmul.mubr.f32.gmra.mxu0 %v728
      %v936 = vpop.f32.mrf.mxu0
      %v937 = vadd.f32 %v629, %v936
      %v938 = vpop.f32.mrf.mxu0
      %939 = vmatprep.mubr.f32.mxu0 0.0
      %940 = vmatmul.mubr.f32.gmra.mxu0 %v731
      %v941 = vpop.f32.mrf.mxu0
      %v942 = vadd.f32 %v634, %v941
      %v943 = vpop.f32.mrf.mxu0
      %944 = vmatprep.mubr.f32.mxu0 0.0
      %945 = vmatmul.mubr.f32.gmra.mxu0 %v734
      %v946 = vpop.f32.mrf.mxu0
      %v947 = vadd.f32 %v639, %v946
      %v948 = vpop.f32.mrf.mxu0
      %949 = vmatprep.mubr.f32.mxu0 0.0
      %950 = vmatmul.mubr.f32.gmra.mxu0 %v737
      %v951 = vpop.f32.mrf.mxu0
      %v952 = vadd.f32 %v644, %v951
      %v953 = vpop.f32.mrf.mxu0
      %954 = vmatprep.mubr.f32.mxu0 0.0
      %955 = vmatmul.mubr.f32.gmra.mxu0 %v740
      %v956 = vpop.f32.mrf.mxu0
      %v957 = vadd.f32 %v649, %v956
      %v958 = vpop.f32.mrf.mxu0
      %959 = vdwg.mxu0
      %v960 = vld [vmem:[%s273 + $0x10] sm:$0xff]
      %v961 = vld [vmem:[%s273 + $0x18] sm:$0xff]
      %v962 = vld [vmem:[%s273 + $0x20] sm:$0xff]
      %v963 = vld [vmem:[%s273 + $0x28] sm:$0xff]
      %v964 = vld [vmem:[%s273 + $0x30] sm:$0xff]
      %v965 = vld [vmem:[%s273 + $0x38] sm:$0xff]
      %v966 = vld [vmem:[%s273 + $0x40] sm:$0xff]
      %v967 = vld [vmem:[%s273 + $0x48] sm:$0xff]
      %v968 = vld [vmem:[%s273 + $0x50] sm:$0xff]
      %v969 = vld [vmem:[%s273 + $0x58] sm:$0xff]
      %v970 = vld [vmem:[%s273 + $0x60] sm:$0xff]
      %v971 = vld [vmem:[%s273 + $0x68] sm:$0xff]
      %v972 = vld [vmem:[%s273 + $0x70] sm:$0xff]
      %v973 = vld [vmem:[%s273 + $0x78] sm:$0xff]
      %v974 = vld [vmem:[%s273 + $0x80] sm:$0xff]
      %v975 = vld [vmem:[%s273 + $0x88] sm:$0xff]
      %v976 = vld [vmem:[%s273 + $0x90] sm:$0xff]
      %v977 = vld [vmem:[%s273 + $0x98] sm:$0xff]
      %v978 = vld [vmem:[%s273 + $0xa0] sm:$0xff]
      %v979 = vld [vmem:[%s273 + $0xa8] sm:$0xff]
      %v980 = vld [vmem:[%s273 + $0xb0] sm:$0xff]
      %v981 = vld [vmem:[%s273 + $0xb8] sm:$0xff]
      %v982 = vld [vmem:[%s273 + $0xc0] sm:$0xff]
      %v983 = vld [vmem:[%s273 + $0xc8] sm:$0xff]
      %v984 = vld [vmem:[%s273 + $0xd0] sm:$0xff]
      %v985 = vld [vmem:[%s273 + $0xd8] sm:$0xff]
      %v986 = vld [vmem:[%s273 + $0xe0] sm:$0xff]
      %v987 = vld [vmem:[%s273 + $0xe8] sm:$0xff]
      %v988 = vld [vmem:[%s273 + $0xf0] sm:$0xff]
      %v989 = vld [vmem:[%s273 + $0xf8] sm:$0xff]
      %s990 = scalar_lea.vmem %s1, 8
      %v991 = vld [vmem:[%s990] sm:$0xf]
      %v993 = vsel %vm342, %v960, 0
      %v996 = vsel %vm342, %v961, 0
      %v999 = vsel %vm342, %v962, 0
      %v1002 = vsel %vm342, %v963, 0
      %v1005 = vsel %vm342, %v964, 0
      %v1008 = vsel %vm342, %v965, 0
      %v1011 = vsel %vm342, %v966, 0
      %v1014 = vsel %vm342, %v967, 0
      %v1017 = vsel %vm342, %v968, 0
      %v1020 = vsel %vm342, %v969, 0
      %v1023 = vsel %vm342, %v970, 0
      %v1026 = vsel %vm342, %v971, 0
      %v1029 = vsel %vm342, %v972, 0
      %v1032 = vsel %vm342, %v973, 0
      %v1035 = vsel %vm342, %v974, 0
      %v1038 = vsel %vm342, %v975, 0
      %v1041 = vsel %vm342, %v976, 0
      %v1044 = vsel %vm342, %v977, 0
      %v1047 = vsel %vm342, %v978, 0
      %v1050 = vsel %vm342, %v979, 0
      %v1053 = vsel %vm342, %v980, 0
      %v1056 = vsel %vm342, %v981, 0
      %v1059 = vsel %vm342, %v982, 0
      %v1062 = vsel %vm342, %v983, 0
      %v1065 = vsel %vm342, %v984, 0
      %v1068 = vsel %vm342, %v985, 0
      %v1071 = vsel %vm342, %v986, 0
      %v1074 = vsel %vm342, %v987, 0
      %v1077 = vsel %vm342, %v988, 0
      %v1080 = vsel %vm342, %v989, 0
      %v1083 = vsel %vm433, %v991, 0
      %1085 = vmatprep.subr.mxu0 0.0
      %1086 = vmatpush1.msra.mxu0 0.0
      %1087 = vmatprep.subr.mxu0 0.0
      %1088 = vmatpush1.msra.mxu0 0.0
      %1089 = vmatprep.subr.mxu0 0.0
      %1090 = vmatpush1.msra.mxu0 0.0
      %1091 = vmatprep.subr.mxu0 0.0
      %1092 = vmatpush1.msra.mxu0 0.0
      %1093 = vmatprep.subr.mxu0 0.0
      %1094 = vmatpush1.msra.mxu0 0.0
      %1095 = vmatprep.subr.mxu0 0.0
      %1096 = vmatpush1.msra.mxu0 0.0
      %1097 = vmatprep.subr.mxu0 0.0
      %1098 = vmatpush1.msra.mxu0 0.0
      %1099 = vmatprep.subr.mxu0 0.0
      %1100 = vmatpush1.msra.mxu0 0.0
      %1101 = vmatprep.subr.mxu0 0.0
      %1102 = vmatpush1.msra.mxu0 0.0
      %1103 = vmatprep.subr.mxu0 0.0
      %1104 = vmatpush1.msra.mxu0 0.0
      %1105 = vmatprep.subr.mxu0 0.0
      %1106 = vmatpush1.msra.mxu0 0.0
      %1107 = vmatprep.subr.mxu0 0.0
      %1108 = vmatpush1.msra.mxu0 0.0
      %1109 = vmatprep.subr.mxu0 0.0
      %1110 = vmatpush1.msra.mxu0 0.0
      %1111 = vmatprep.subr.mxu0 0.0
      %1112 = vmatpush1.msra.mxu0 0.0
      %1113 = vmatprep.subr.mxu0 0.0
      %1114 = vmatpush1.msra.mxu0 0.0
      %1115 = vmatprep.subr.mxu0 0.0
      %1116 = vmatpush1.msra.mxu0 %v1083
      %1117 = vmatprep.subr.mxu0 0.0
      %1118 = vmatpush2.msra.mxu0 0.0
      %1119 = vmatprep.subr.mxu0 0.0
      %1120 = vmatpush2.msra.mxu0 0.0
      %1121 = vmatprep.subr.mxu0 0.0
      %1122 = vmatpush2.msra.mxu0 0.0
      %1123 = vmatprep.subr.mxu0 0.0
      %1124 = vmatpush2.msra.mxu0 0.0
      %1125 = vmatprep.subr.mxu0 0.0
      %1126 = vmatpush2.msra.mxu0 0.0
      %1127 = vmatprep.subr.mxu0 0.0
      %1128 = vmatpush2.msra.mxu0 0.0
      %1129 = vmatprep.subr.mxu0 0.0
      %1130 = vmatpush2.msra.mxu0 0.0
      %1131 = vmatprep.subr.mxu0 0.0
      %1132 = vmatpush2.msra.mxu0 0.0
      %1133 = vmatprep.subr.mxu0 0.0
      %1134 = vmatpush2.msra.mxu0 0.0
      %1135 = vmatprep.subr.mxu0 0.0
      %1136 = vmatpush2.msra.mxu0 0.0
      %1137 = vmatprep.subr.mxu0 0.0
      %1138 = vmatpush2.msra.mxu0 0.0
      %1139 = vmatprep.subr.mxu0 0.0
      %1140 = vmatpush2.msra.mxu0 0.0
      %1141 = vmatprep.subr.mxu0 0.0
      %1142 = vmatpush2.msra.mxu0 0.0
      %1143 = vmatprep.subr.mxu0 0.0
      %1144 = vmatpush2.msra.mxu0 0.0
      %1145 = vmatprep.subr.mxu0 0.0
      %1146 = vmatpush2.msra.mxu0 0.0
      %1147 = vmatprep.subr.mxu0 0.0
      %1148 = vmatpush2.msra.mxu0 0.0
      %1149 = vmatprep.mubr.f32.mxu0 0.0
      %1150 = vmatmul.mubr.f32.gmra.mxu0 %v993
      %v1151 = vpop.f32.mrf.mxu0
      %v1152 = vadd.f32 0.0, %v1151
      %v1153 = vpop.f32.mrf.mxu0
      %1154 = vmatprep.mubr.f32.mxu0 0.0
      %1155 = vmatmul.mubr.f32.gmra.mxu0 %v996
      %v1156 = vpop.f32.mrf.mxu0
      %v1157 = vadd.f32 0.0, %v1156
      %v1158 = vpop.f32.mrf.mxu0
      %1159 = vmatprep.mubr.f32.mxu0 0.0
      %1160 = vmatmul.mubr.f32.gmra.mxu0 %v999
      %v1161 = vpop.f32.mrf.mxu0
      %v1162 = vadd.f32 0.0, %v1161
      %v1163 = vpop.f32.mrf.mxu0
      %1164 = vmatprep.mubr.f32.mxu0 0.0
      %1165 = vmatmul.mubr.f32.gmra.mxu0 %v1002
      %v1166 = vpop.f32.mrf.mxu0
      %v1167 = vadd.f32 0.0, %v1166
      %v1168 = vpop.f32.mrf.mxu0
      %1169 = vmatprep.mubr.f32.mxu0 0.0
      %1170 = vmatmul.mubr.f32.gmra.mxu0 %v1005
      %v1171 = vpop.f32.mrf.mxu0
      %v1172 = vadd.f32 0.0, %v1171
      %v1173 = vpop.f32.mrf.mxu0
      %1174 = vmatprep.mubr.f32.mxu0 0.0
      %1175 = vmatmul.mubr.f32.gmra.mxu0 %v1008
      %v1176 = vpop.f32.mrf.mxu0
      %v1177 = vadd.f32 0.0, %v1176
      %v1178 = vpop.f32.mrf.mxu0
      %1179 = vmatprep.mubr.f32.mxu0 0.0
      %1180 = vmatmul.mubr.f32.gmra.mxu0 %v1011
      %v1181 = vpop.f32.mrf.mxu0
      %v1182 = vadd.f32 0.0, %v1181
      %v1183 = vpop.f32.mrf.mxu0
      %1184 = vmatprep.mubr.f32.mxu0 0.0
      %1185 = vmatmul.mubr.f32.gmra.mxu0 %v1014
      %v1186 = vpop.f32.mrf.mxu0
      %v1187 = vadd.f32 0.0, %v1186
      %v1188 = vpop.f32.mrf.mxu0
      %1189 = vmatprep.mubr.f32.mxu0 0.0
      %1190 = vmatmul.mubr.f32.gmra.mxu0 %v1017
      %v1191 = vpop.f32.mrf.mxu0
      %v1192 = vadd.f32 0.0, %v1191
      %v1193 = vpop.f32.mrf.mxu0
      %1194 = vmatprep.mubr.f32.mxu0 0.0
      %1195 = vmatmul.mubr.f32.gmra.mxu0 %v1020
      %v1196 = vpop.f32.mrf.mxu0
      %v1197 = vadd.f32 0.0, %v1196
      %v1198 = vpop.f32.mrf.mxu0
      %1199 = vmatprep.mubr.f32.mxu0 0.0
      %1200 = vmatmul.mubr.f32.gmra.mxu0 %v1023
      %v1201 = vpop.f32.mrf.mxu0
      %v1202 = vadd.f32 0.0, %v1201
      %v1203 = vpop.f32.mrf.mxu0
      %1204 = vmatprep.mubr.f32.mxu0 0.0
      %1205 = vmatmul.mubr.f32.gmra.mxu0 %v1026
      %v1206 = vpop.f32.mrf.mxu0
      %v1207 = vadd.f32 0.0, %v1206
      %v1208 = vpop.f32.mrf.mxu0
      %1209 = vmatprep.mubr.f32.mxu0 0.0
      %1210 = vmatmul.mubr.f32.gmra.mxu0 %v1029
      %v1211 = vpop.f32.mrf.mxu0
      %v1212 = vadd.f32 0.0, %v1211
      %v1213 = vpop.f32.mrf.mxu0
      %1214 = vmatprep.mubr.f32.mxu0 0.0
      %1215 = vmatmul.mubr.f32.gmra.mxu0 %v1032
      %v1216 = vpop.f32.mrf.mxu0
      %v1217 = vadd.f32 0.0, %v1216
      %v1218 = vpop.f32.mrf.mxu0
      %1219 = vmatprep.mubr.f32.mxu0 0.0
      %1220 = vmatmul.mubr.f32.gmra.mxu0 %v1035
      %v1221 = vpop.f32.mrf.mxu0
      %v1222 = vadd.f32 0.0, %v1221
      %v1223 = vpop.f32.mrf.mxu0
      %1224 = vmatprep.mubr.f32.mxu0 0.0
      %1225 = vmatmul.mubr.f32.gmra.mxu0 %v1038
      %v1226 = vpop.f32.mrf.mxu0
      %v1227 = vadd.f32 0.0, %v1226
      %v1228 = vpop.f32.mrf.mxu0
      %1229 = vmatprep.mubr.f32.mxu0 0.0
      %1230 = vmatmul.mubr.f32.gmra.mxu0 %v1041
      %v1231 = vpop.f32.mrf.mxu0
      %v1232 = vadd.f32 0.0, %v1231
      %v1233 = vpop.f32.mrf.mxu0
      %1234 = vmatprep.mubr.f32.mxu0 0.0
      %1235 = vmatmul.mubr.f32.gmra.mxu0 %v1044
      %v1236 = vpop.f32.mrf.mxu0
      %v1237 = vadd.f32 0.0, %v1236
      %v1238 = vpop.f32.mrf.mxu0
      %1239 = vmatprep.mubr.f32.mxu0 0.0
      %1240 = vmatmul.mubr.f32.gmra.mxu0 %v1047
      %v1241 = vpop.f32.mrf.mxu0
      %v1242 = vadd.f32 0.0, %v1241
      %v1243 = vpop.f32.mrf.mxu0
      %1244 = vmatprep.mubr.f32.mxu0 0.0
      %1245 = vmatmul.mubr.f32.gmra.mxu0 %v1050
      %v1246 = vpop.f32.mrf.mxu0
      %v1247 = vadd.f32 0.0, %v1246
      %v1248 = vpop.f32.mrf.mxu0
      %1249 = vmatprep.mubr.f32.mxu0 0.0
      %1250 = vmatmul.mubr.f32.gmra.mxu0 %v1053
      %v1251 = vpop.f32.mrf.mxu0
      %v1252 = vadd.f32 0.0, %v1251
      %v1253 = vpop.f32.mrf.mxu0
      %1254 = vmatprep.mubr.f32.mxu0 0.0
      %1255 = vmatmul.mubr.f32.gmra.mxu0 %v1056
      %v1256 = vpop.f32.mrf.mxu0
      %v1257 = vadd.f32 0.0, %v1256
      %v1258 = vpop.f32.mrf.mxu0
      %1259 = vmatprep.mubr.f32.mxu0 0.0
      %1260 = vmatmul.mubr.f32.gmra.mxu0 %v1059
      %v1261 = vpop.f32.mrf.mxu0
      %v1262 = vadd.f32 0.0, %v1261
      %v1263 = vpop.f32.mrf.mxu0
      %1264 = vmatprep.mubr.f32.mxu0 0.0
      %1265 = vmatmul.mubr.f32.gmra.mxu0 %v1062
      %v1266 = vpop.f32.mrf.mxu0
      %v1267 = vadd.f32 0.0, %v1266
      %v1268 = vpop.f32.mrf.mxu0
      %1269 = vmatprep.mubr.f32.mxu0 0.0
      %1270 = vmatmul.mubr.f32.gmra.mxu0 %v1065
      %v1271 = vpop.f32.mrf.mxu0
      %v1272 = vadd.f32 0.0, %v1271
      %v1273 = vpop.f32.mrf.mxu0
      %1274 = vmatprep.mubr.f32.mxu0 0.0
      %1275 = vmatmul.mubr.f32.gmra.mxu0 %v1068
      %v1276 = vpop.f32.mrf.mxu0
      %v1277 = vadd.f32 0.0, %v1276
      %v1278 = vpop.f32.mrf.mxu0
      %1279 = vmatprep.mubr.f32.mxu0 0.0
      %1280 = vmatmul.mubr.f32.gmra.mxu0 %v1071
      %v1281 = vpop.f32.mrf.mxu0
      %v1282 = vadd.f32 0.0, %v1281
      %v1283 = vpop.f32.mrf.mxu0
      %1284 = vmatprep.mubr.f32.mxu0 0.0
      %1285 = vmatmul.mubr.f32.gmra.mxu0 %v1074
      %v1286 = vpop.f32.mrf.mxu0
      %v1287 = vadd.f32 0.0, %v1286
      %v1288 = vpop.f32.mrf.mxu0
      %1289 = vmatprep.mubr.f32.mxu0 0.0
      %1290 = vmatmul.mubr.f32.gmra.mxu0 %v1077
      %v1291 = vpop.f32.mrf.mxu0
      %v1292 = vadd.f32 0.0, %v1291
      %v1293 = vpop.f32.mrf.mxu0
      %1294 = vmatprep.mubr.f32.mxu0 0.0
      %1295 = vmatmul.mubr.f32.gmra.mxu0 %v1080
      %v1296 = vpop.f32.mrf.mxu0
      %v1297 = vadd.f32 0.0, %v1296
      %v1298 = vpop.f32.mrf.mxu0
      %1299 = vdwg.mxu0
      %v1300 = vadd.f32 %v812, %v1152
      %v1301 = vadd.f32 %v817, %v1157
      %v1302 = vadd.f32 %v822, %v1162
      %v1303 = vadd.f32 %v827, %v1167
      %v1304 = vadd.f32 %v832, %v1172
      %v1305 = vadd.f32 %v837, %v1177
      %v1306 = vadd.f32 %v842, %v1182
      %v1307 = vadd.f32 %v847, %v1187
      %v1308 = vadd.f32 %v852, %v1192
      %v1309 = vadd.f32 %v857, %v1197
      %v1310 = vadd.f32 %v862, %v1202
      %v1311 = vadd.f32 %v867, %v1207
      %v1312 = vadd.f32 %v872, %v1212
      %v1313 = vadd.f32 %v877, %v1217
      %v1314 = vadd.f32 %v882, %v1222
      %v1315 = vadd.f32 %v887, %v1227
      %v1316 = vadd.f32 %v892, %v1232
      %v1317 = vadd.f32 %v897, %v1237
      %v1318 = vadd.f32 %v902, %v1242
      %v1319 = vadd.f32 %v907, %v1247
      %v1320 = vadd.f32 %v912, %v1252
      %v1321 = vadd.f32 %v917, %v1257
      %v1322 = vadd.f32 %v922, %v1262
      %v1323 = vadd.f32 %v927, %v1267
      %v1324 = vadd.f32 %v932, %v1272
      %v1325 = vadd.f32 %v937, %v1277
      %v1326 = vadd.f32 %v942, %v1282
      %v1327 = vadd.f32 %v947, %v1287
      %v1328 = vadd.f32 %v952, %v1292
      %v1329 = vadd.f32 %v957, %v1297
      %v1330 = vld [vmem:[%s273 + $0x11] sm:$0xff]
      %v1331 = vld [vmem:[%s273 + $0x19] sm:$0xff]
      %v1332 = vld [vmem:[%s273 + $0x21] sm:$0xff]
      %v1333 = vld [vmem:[%s273 + $0x29] sm:$0xff]
      %v1334 = vld [vmem:[%s273 + $0x31] sm:$0xff]
      %v1335 = vld [vmem:[%s273 + $0x39] sm:$0xff]
      %v1336 = vld [vmem:[%s273 + $0x41] sm:$0xff]
      %v1337 = vld [vmem:[%s273 + $0x49] sm:$0xff]
      %v1338 = vld [vmem:[%s273 + $0x51] sm:$0xff]
      %v1339 = vld [vmem:[%s273 + $0x59] sm:$0xff]
      %v1340 = vld [vmem:[%s273 + $0x61] sm:$0xff]
      %v1341 = vld [vmem:[%s273 + $0x69] sm:$0xff]
      %v1342 = vld [vmem:[%s273 + $0x71] sm:$0xff]
      %v1343 = vld [vmem:[%s273 + $0x79] sm:$0xff]
      %v1344 = vld [vmem:[%s273 + $0x81] sm:$0xff]
      %v1345 = vld [vmem:[%s273 + $0x89] sm:$0xff]
      %v1346 = vld [vmem:[%s273 + $0x91] sm:$0xff]
      %v1347 = vld [vmem:[%s273 + $0x99] sm:$0xff]
      %v1348 = vld [vmem:[%s273 + $0xa1] sm:$0xff]
      %v1349 = vld [vmem:[%s273 + $0xa9] sm:$0xff]
      %v1350 = vld [vmem:[%s273 + $0xb1] sm:$0xff]
      %v1351 = vld [vmem:[%s273 + $0xb9] sm:$0xff]
      %v1352 = vld [vmem:[%s273 + $0xc1] sm:$0xff]
      %v1353 = vld [vmem:[%s273 + $0xc9] sm:$0xff]
      %v1354 = vld [vmem:[%s273 + $0xd1] sm:$0xff]
      %v1355 = vld [vmem:[%s273 + $0xd9] sm:$0xff]
      %v1356 = vld [vmem:[%s273 + $0xe1] sm:$0xff]
      %v1357 = vld [vmem:[%s273 + $0xe9] sm:$0xff]
      %v1358 = vld [vmem:[%s273 + $0xf1] sm:$0xff]
      %v1359 = vld [vmem:[%s273 + $0xf9] sm:$0xff]
      %s1360 = scalar_lea.vmem %s1, 12
      %v1361 = vld [vmem:[%s1360] sm:$0xf]
      %v1363 = vsel %vm342, %v1330, 0
      %v1366 = vsel %vm342, %v1331, 0
      %v1369 = vsel %vm342, %v1332, 0
      %v1372 = vsel %vm342, %v1333, 0
      %v1375 = vsel %vm342, %v1334, 0
      %v1378 = vsel %vm342, %v1335, 0
      %v1381 = vsel %vm342, %v1336, 0
      %v1384 = vsel %vm342, %v1337, 0
      %v1387 = vsel %vm342, %v1338, 0
      %v1390 = vsel %vm342, %v1339, 0
      %v1393 = vsel %vm342, %v1340, 0
      %v1396 = vsel %vm342, %v1341, 0
      %v1399 = vsel %vm342, %v1342, 0
      %v1402 = vsel %vm342, %v1343, 0
      %v1405 = vsel %vm342, %v1344, 0
      %v1408 = vsel %vm342, %v1345, 0
      %v1411 = vsel %vm342, %v1346, 0
      %v1414 = vsel %vm342, %v1347, 0
      %v1417 = vsel %vm342, %v1348, 0
      %v1420 = vsel %vm342, %v1349, 0
      %v1423 = vsel %vm342, %v1350, 0
      %v1426 = vsel %vm342, %v1351, 0
      %v1429 = vsel %vm342, %v1352, 0
      %v1432 = vsel %vm342, %v1353, 0
      %v1435 = vsel %vm342, %v1354, 0
      %v1438 = vsel %vm342, %v1355, 0
      %v1441 = vsel %vm342, %v1356, 0
      %v1444 = vsel %vm342, %v1357, 0
      %v1447 = vsel %vm342, %v1358, 0
      %v1450 = vsel %vm342, %v1359, 0
      %v1453 = vsel %vm433, %v1361, 0
      %1455 = vmatprep.subr.mxu0 0.0
      %1456 = vmatpush1.msra.mxu0 0.0
      %1457 = vmatprep.subr.mxu0 0.0
      %1458 = vmatpush1.msra.mxu0 0.0
      %1459 = vmatprep.subr.mxu0 0.0
      %1460 = vmatpush1.msra.mxu0 0.0
      %1461 = vmatprep.subr.mxu0 0.0
      %1462 = vmatpush1.msra.mxu0 0.0
      %1463 = vmatprep.subr.mxu0 0.0
      %1464 = vmatpush1.msra.mxu0 0.0
      %1465 = vmatprep.subr.mxu0 0.0
      %1466 = vmatpush1.msra.mxu0 0.0
      %1467 = vmatprep.subr.mxu0 0.0
      %1468 = vmatpush1.msra.mxu0 0.0
      %1469 = vmatprep.subr.mxu0 0.0
      %1470 = vmatpush1.msra.mxu0 0.0
      %1471 = vmatprep.subr.mxu0 0.0
      %1472 = vmatpush1.msra.mxu0 0.0
      %1473 = vmatprep.subr.mxu0 0.0
      %1474 = vmatpush1.msra.mxu0 0.0
      %1475 = vmatprep.subr.mxu0 0.0
      %1476 = vmatpush1.msra.mxu0 0.0
      %1477 = vmatprep.subr.mxu0 0.0
      %1478 = vmatpush1.msra.mxu0 0.0
      %1479 = vmatprep.subr.mxu0 0.0
      %1480 = vmatpush1.msra.mxu0 0.0
      %1481 = vmatprep.subr.mxu0 0.0
      %1482 = vmatpush1.msra.mxu0 0.0
      %1483 = vmatprep.subr.mxu0 0.0
      %1484 = vmatpush1.msra.mxu0 0.0
      %1485 = vmatprep.subr.mxu0 0.0
      %1486 = vmatpush1.msra.mxu0 %v1453
      %1487 = vmatprep.subr.mxu0 0.0
      %1488 = vmatpush2.msra.mxu0 0.0
      %1489 = vmatprep.subr.mxu0 0.0
      %1490 = vmatpush2.msra.mxu0 0.0
      %1491 = vmatprep.subr.mxu0 0.0
      %1492 = vmatpush2.msra.mxu0 0.0
      %1493 = vmatprep.subr.mxu0 0.0
      %1494 = vmatpush2.msra.mxu0 0.0
      %1495 = vmatprep.subr.mxu0 0.0
      %1496 = vmatpush2.msra.mxu0 0.0
      %1497 = vmatprep.subr.mxu0 0.0
      %1498 = vmatpush2.msra.mxu0 0.0
      %1499 = vmatprep.subr.mxu0 0.0
      %1500 = vmatpush2.msra.mxu0 0.0
      %1501 = vmatprep.subr.mxu0 0.0
      %1502 = vmatpush2.msra.mxu0 0.0
      %1503 = vmatprep.subr.mxu0 0.0
      %1504 = vmatpush2.msra.mxu0 0.0
      %1505 = vmatprep.subr.mxu0 0.0
      %1506 = vmatpush2.msra.mxu0 0.0
      %1507 = vmatprep.subr.mxu0 0.0
      %1508 = vmatpush2.msra.mxu0 0.0
      %1509 = vmatprep.subr.mxu0 0.0
      %1510 = vmatpush2.msra.mxu0 0.0
      %1511 = vmatprep.subr.mxu0 0.0
      %1512 = vmatpush2.msra.mxu0 0.0
      %1513 = vmatprep.subr.mxu0 0.0
      %1514 = vmatpush2.msra.mxu0 0.0
      %1515 = vmatprep.subr.mxu0 0.0
      %1516 = vmatpush2.msra.mxu0 0.0
      %1517 = vmatprep.subr.mxu0 0.0
      %1518 = vmatpush2.msra.mxu0 0.0
      %1519 = vmatprep.mubr.f32.mxu0 0.0
      %1520 = vmatmul.mubr.f32.gmra.mxu0 %v1363
      %v1521 = vpop.f32.mrf.mxu0
      %v1522 = vadd.f32 0.0, %v1521
      %v1523 = vpop.f32.mrf.mxu0
      %1524 = vmatprep.mubr.f32.mxu0 0.0
      %1525 = vmatmul.mubr.f32.gmra.mxu0 %v1366
      %v1526 = vpop.f32.mrf.mxu0
      %v1527 = vadd.f32 0.0, %v1526
      %v1528 = vpop.f32.mrf.mxu0
      %1529 = vmatprep.mubr.f32.mxu0 0.0
      %1530 = vmatmul.mubr.f32.gmra.mxu0 %v1369
      %v1531 = vpop.f32.mrf.mxu0
      %v1532 = vadd.f32 0.0, %v1531
      %v1533 = vpop.f32.mrf.mxu0
      %1534 = vmatprep.mubr.f32.mxu0 0.0
      %1535 = vmatmul.mubr.f32.gmra.mxu0 %v1372
      %v1536 = vpop.f32.mrf.mxu0
      %v1537 = vadd.f32 0.0, %v1536
      %v1538 = vpop.f32.mrf.mxu0
      %1539 = vmatprep.mubr.f32.mxu0 0.0
      %1540 = vmatmul.mubr.f32.gmra.mxu0 %v1375
      %v1541 = vpop.f32.mrf.mxu0
      %v1542 = vadd.f32 0.0, %v1541
      %v1543 = vpop.f32.mrf.mxu0
      %1544 = vmatprep.mubr.f32.mxu0 0.0
      %1545 = vmatmul.mubr.f32.gmra.mxu0 %v1378
      %v1546 = vpop.f32.mrf.mxu0
      %v1547 = vadd.f32 0.0, %v1546
      %v1548 = vpop.f32.mrf.mxu0
      %1549 = vmatprep.mubr.f32.mxu0 0.0
      %1550 = vmatmul.mubr.f32.gmra.mxu0 %v1381
      %v1551 = vpop.f32.mrf.mxu0
      %v1552 = vadd.f32 0.0, %v1551
      %v1553 = vpop.f32.mrf.mxu0
      %1554 = vmatprep.mubr.f32.mxu0 0.0
      %1555 = vmatmul.mubr.f32.gmra.mxu0 %v1384
      %v1556 = vpop.f32.mrf.mxu0
      %v1557 = vadd.f32 0.0, %v1556
      %v1558 = vpop.f32.mrf.mxu0
      %1559 = vmatprep.mubr.f32.mxu0 0.0
      %1560 = vmatmul.mubr.f32.gmra.mxu0 %v1387
      %v1561 = vpop.f32.mrf.mxu0
      %v1562 = vadd.f32 0.0, %v1561
      %v1563 = vpop.f32.mrf.mxu0
      %1564 = vmatprep.mubr.f32.mxu0 0.0
      %1565 = vmatmul.mubr.f32.gmra.mxu0 %v1390
      %v1566 = vpop.f32.mrf.mxu0
      %v1567 = vadd.f32 0.0, %v1566
      %v1568 = vpop.f32.mrf.mxu0
      %1569 = vmatprep.mubr.f32.mxu0 0.0
      %1570 = vmatmul.mubr.f32.gmra.mxu0 %v1393
      %v1571 = vpop.f32.mrf.mxu0
      %v1572 = vadd.f32 0.0, %v1571
      %v1573 = vpop.f32.mrf.mxu0
      %1574 = vmatprep.mubr.f32.mxu0 0.0
      %1575 = vmatmul.mubr.f32.gmra.mxu0 %v1396
      %v1576 = vpop.f32.mrf.mxu0
      %v1577 = vadd.f32 0.0, %v1576
      %v1578 = vpop.f32.mrf.mxu0
      %1579 = vmatprep.mubr.f32.mxu0 0.0
      %1580 = vmatmul.mubr.f32.gmra.mxu0 %v1399
      %v1581 = vpop.f32.mrf.mxu0
      %v1582 = vadd.f32 0.0, %v1581
      %v1583 = vpop.f32.mrf.mxu0
      %1584 = vmatprep.mubr.f32.mxu0 0.0
      %1585 = vmatmul.mubr.f32.gmra.mxu0 %v1402
      %v1586 = vpop.f32.mrf.mxu0
      %v1587 = vadd.f32 0.0, %v1586
      %v1588 = vpop.f32.mrf.mxu0
      %1589 = vmatprep.mubr.f32.mxu0 0.0
      %1590 = vmatmul.mubr.f32.gmra.mxu0 %v1405
      %v1591 = vpop.f32.mrf.mxu0
      %v1592 = vadd.f32 0.0, %v1591
      %v1593 = vpop.f32.mrf.mxu0
      %1594 = vmatprep.mubr.f32.mxu0 0.0
      %1595 = vmatmul.mubr.f32.gmra.mxu0 %v1408
      %v1596 = vpop.f32.mrf.mxu0
      %v1597 = vadd.f32 0.0, %v1596
      %v1598 = vpop.f32.mrf.mxu0
      %1599 = vmatprep.mubr.f32.mxu0 0.0
      %1600 = vmatmul.mubr.f32.gmra.mxu0 %v1411
      %v1601 = vpop.f32.mrf.mxu0
      %v1602 = vadd.f32 0.0, %v1601
      %v1603 = vpop.f32.mrf.mxu0
      %1604 = vmatprep.mubr.f32.mxu0 0.0
      %1605 = vmatmul.mubr.f32.gmra.mxu0 %v1414
      %v1606 = vpop.f32.mrf.mxu0
      %v1607 = vadd.f32 0.0, %v1606
      %v1608 = vpop.f32.mrf.mxu0
      %1609 = vmatprep.mubr.f32.mxu0 0.0
      %1610 = vmatmul.mubr.f32.gmra.mxu0 %v1417
      %v1611 = vpop.f32.mrf.mxu0
      %v1612 = vadd.f32 0.0, %v1611
      %v1613 = vpop.f32.mrf.mxu0
      %1614 = vmatprep.mubr.f32.mxu0 0.0
      %1615 = vmatmul.mubr.f32.gmra.mxu0 %v1420
      %v1616 = vpop.f32.mrf.mxu0
      %v1617 = vadd.f32 0.0, %v1616
      %v1618 = vpop.f32.mrf.mxu0
      %1619 = vmatprep.mubr.f32.mxu0 0.0
      %1620 = vmatmul.mubr.f32.gmra.mxu0 %v1423
      %v1621 = vpop.f32.mrf.mxu0
      %v1622 = vadd.f32 0.0, %v1621
      %v1623 = vpop.f32.mrf.mxu0
      %1624 = vmatprep.mubr.f32.mxu0 0.0
      %1625 = vmatmul.mubr.f32.gmra.mxu0 %v1426
      %v1626 = vpop.f32.mrf.mxu0
      %v1627 = vadd.f32 0.0, %v1626
      %v1628 = vpop.f32.mrf.mxu0
      %1629 = vmatprep.mubr.f32.mxu0 0.0
      %1630 = vmatmul.mubr.f32.gmra.mxu0 %v1429
      %v1631 = vpop.f32.mrf.mxu0
      %v1632 = vadd.f32 0.0, %v1631
      %v1633 = vpop.f32.mrf.mxu0
      %1634 = vmatprep.mubr.f32.mxu0 0.0
      %1635 = vmatmul.mubr.f32.gmra.mxu0 %v1432
      %v1636 = vpop.f32.mrf.mxu0
      %v1637 = vadd.f32 0.0, %v1636
      %v1638 = vpop.f32.mrf.mxu0
      %1639 = vmatprep.mubr.f32.mxu0 0.0
      %1640 = vmatmul.mubr.f32.gmra.mxu0 %v1435
      %v1641 = vpop.f32.mrf.mxu0
      %v1642 = vadd.f32 0.0, %v1641
      %v1643 = vpop.f32.mrf.mxu0
      %1644 = vmatprep.mubr.f32.mxu0 0.0
      %1645 = vmatmul.mubr.f32.gmra.mxu0 %v1438
      %v1646 = vpop.f32.mrf.mxu0
      %v1647 = vadd.f32 0.0, %v1646
      %v1648 = vpop.f32.mrf.mxu0
      %1649 = vmatprep.mubr.f32.mxu0 0.0
      %1650 = vmatmul.mubr.f32.gmra.mxu0 %v1441
      %v1651 = vpop.f32.mrf.mxu0
      %v1652 = vadd.f32 0.0, %v1651
      %v1653 = vpop.f32.mrf.mxu0
      %1654 = vmatprep.mubr.f32.mxu0 0.0
      %1655 = vmatmul.mubr.f32.gmra.mxu0 %v1444
      %v1656 = vpop.f32.mrf.mxu0
      %v1657 = vadd.f32 0.0, %v1656
      %v1658 = vpop.f32.mrf.mxu0
      %1659 = vmatprep.mubr.f32.mxu0 0.0
      %1660 = vmatmul.mubr.f32.gmra.mxu0 %v1447
      %v1661 = vpop.f32.mrf.mxu0
      %v1662 = vadd.f32 0.0, %v1661
      %v1663 = vpop.f32.mrf.mxu0
      %1664 = vmatprep.mubr.f32.mxu0 0.0
      %1665 = vmatmul.mubr.f32.gmra.mxu0 %v1450
      %v1666 = vpop.f32.mrf.mxu0
      %v1667 = vadd.f32 0.0, %v1666
      %v1668 = vpop.f32.mrf.mxu0
      %1669 = vdwg.mxu0
      %v1670 = vadd.f32 %v1300, %v1522
      %v1671 = vadd.f32 %v1301, %v1527
      %v1672 = vadd.f32 %v1302, %v1532
      %v1673 = vadd.f32 %v1303, %v1537
      %v1674 = vadd.f32 %v1304, %v1542
      %v1675 = vadd.f32 %v1305, %v1547
      %v1676 = vadd.f32 %v1306, %v1552
      %v1677 = vadd.f32 %v1307, %v1557
      %v1678 = vadd.f32 %v1308, %v1562
      %v1679 = vadd.f32 %v1309, %v1567
      %v1680 = vadd.f32 %v1310, %v1572
      %v1681 = vadd.f32 %v1311, %v1577
      %v1682 = vadd.f32 %v1312, %v1582
      %v1683 = vadd.f32 %v1313, %v1587
      %v1684 = vadd.f32 %v1314, %v1592
      %v1685 = vadd.f32 %v1315, %v1597
      %v1686 = vadd.f32 %v1316, %v1602
      %v1687 = vadd.f32 %v1317, %v1607
      %v1688 = vadd.f32 %v1318, %v1612
      %v1689 = vadd.f32 %v1319, %v1617
      %v1690 = vadd.f32 %v1320, %v1622
      %v1691 = vadd.f32 %v1321, %v1627
      %v1692 = vadd.f32 %v1322, %v1632
      %v1693 = vadd.f32 %v1323, %v1637
      %v1694 = vadd.f32 %v1324, %v1642
      %v1695 = vadd.f32 %v1325, %v1647
      %v1696 = vadd.f32 %v1326, %v1652
      %v1697 = vadd.f32 %v1327, %v1657
      %v1698 = vadd.f32 %v1328, %v1662
      %v1699 = vadd.f32 %v1329, %v1667
      %v1700 = vld [vmem:[%s2] sm:$0x1]
      %v1702 = vlaneseq
      %v1703 = vshrl.u32 %v1702, 7
      %v1704 = vsub.s32 0, %v1703
      %v1705 = vrot.slane %v1700, %v1704
      %v1707 = vadd.f32 %v1670, %v1705
      %v1708 = vadd.f32 %v1671, %v1705
      %v1709 = vadd.f32 %v1672, %v1705
      %v1710 = vadd.f32 %v1673, %v1705
      %v1711 = vadd.f32 %v1674, %v1705
      %v1712 = vadd.f32 %v1675, %v1705
      %v1713 = vadd.f32 %v1676, %v1705
      %v1714 = vadd.f32 %v1677, %v1705
      %v1715 = vadd.f32 %v1678, %v1705
      %v1716 = vadd.f32 %v1679, %v1705
      %v1717 = vadd.f32 %v1680, %v1705
      %v1718 = vadd.f32 %v1681, %v1705
      %v1719 = vadd.f32 %v1682, %v1705
      %v1720 = vadd.f32 %v1683, %v1705
      %v1721 = vadd.f32 %v1684, %v1705
      %v1722 = vadd.f32 %v1685, %v1705
      %v1723 = vadd.f32 %v1686, %v1705
      %v1724 = vadd.f32 %v1687, %v1705
      %v1725 = vadd.f32 %v1688, %v1705
      %v1726 = vadd.f32 %v1689, %v1705
      %v1727 = vadd.f32 %v1690, %v1705
      %v1728 = vadd.f32 %v1691, %v1705
      %v1729 = vadd.f32 %v1692, %v1705
      %v1730 = vadd.f32 %v1693, %v1705
      %v1731 = vadd.f32 %v1694, %v1705
      %v1732 = vadd.f32 %v1695, %v1705
      %v1733 = vadd.f32 %v1696, %v1705
      %v1734 = vadd.f32 %v1697, %v1705
      %v1735 = vadd.f32 %v1698, %v1705
      %v1736 = vadd.f32 %v1699, %v1705
      %v1737 = vmax.f32 %v1707, 0.0
      %v1738 = vmax.f32 %v1708, 0.0
      %v1739 = vmax.f32 %v1709, 0.0
      %v1740 = vmax.f32 %v1710, 0.0
      %v1741 = vmax.f32 %v1711, 0.0
      %v1742 = vmax.f32 %v1712, 0.0
      %v1743 = vmax.f32 %v1713, 0.0
      %v1744 = vmax.f32 %v1714, 0.0
      %v1745 = vmax.f32 %v1715, 0.0
      %v1746 = vmax.f32 %v1716, 0.0
      %v1747 = vmax.f32 %v1717, 0.0
      %v1748 = vmax.f32 %v1718, 0.0
      %v1749 = vmax.f32 %v1719, 0.0
      %v1750 = vmax.f32 %v1720, 0.0
      %v1751 = vmax.f32 %v1721, 0.0
      %v1752 = vmax.f32 %v1722, 0.0
      %v1753 = vmax.f32 %v1723, 0.0
      %v1754 = vmax.f32 %v1724, 0.0
      %v1755 = vmax.f32 %v1725, 0.0
      %v1756 = vmax.f32 %v1726, 0.0
      %v1757 = vmax.f32 %v1727, 0.0
      %v1758 = vmax.f32 %v1728, 0.0
      %v1759 = vmax.f32 %v1729, 0.0
      %v1760 = vmax.f32 %v1730, 0.0
      %v1761 = vmax.f32 %v1731, 0.0
      %v1762 = vmax.f32 %v1732, 0.0
      %v1763 = vmax.f32 %v1733, 0.0
      %v1764 = vmax.f32 %v1734, 0.0
      %v1765 = vmax.f32 %v1735, 0.0
      %v1766 = vmax.f32 %v1736, 0.0
      %vm1767 = vcmask 64512
      %1768 = vst.msk [vmem:[#allocation2] sm:$0xff] %vm1767, %v1737
      %1769 = vst.msk [vmem:[#allocation2 + $0x8] sm:$0xff] %vm1767, %v1738
      %1770 = vst.msk [vmem:[#allocation2 + $0x10] sm:$0xff] %vm1767, %v1739
      %1771 = vst.msk [vmem:[#allocation2 + $0x18] sm:$0xff] %vm1767, %v1740
      %1772 = vst.msk [vmem:[#allocation2 + $0x20] sm:$0xff] %vm1767, %v1741
      %1773 = vst.msk [vmem:[#allocation2 + $0x28] sm:$0xff] %vm1767, %v1742
      %1774 = vst.msk [vmem:[#allocation2 + $0x30] sm:$0xff] %vm1767, %v1743
      %1775 = vst.msk [vmem:[#allocation2 + $0x38] sm:$0xff] %vm1767, %v1744
      %1776 = vst.msk [vmem:[#allocation2 + $0x40] sm:$0xff] %vm1767, %v1745
      %1777 = vst.msk [vmem:[#allocation2 + $0x48] sm:$0xff] %vm1767, %v1746
      %1778 = vst.msk [vmem:[#allocation2 + $0x50] sm:$0xff] %vm1767, %v1747
      %1779 = vst.msk [vmem:[#allocation2 + $0x58] sm:$0xff] %vm1767, %v1748
      %1780 = vst.msk [vmem:[#allocation2 + $0x60] sm:$0xff] %vm1767, %v1749
      %1781 = vst.msk [vmem:[#allocation2 + $0x68] sm:$0xff] %vm1767, %v1750
      %1782 = vst.msk [vmem:[#allocation2 + $0x70] sm:$0xff] %vm1767, %v1751
      %1783 = vst.msk [vmem:[#allocation2 + $0x78] sm:$0xff] %vm1767, %v1752
      %1784 = vst.msk [vmem:[#allocation2 + $0x80] sm:$0xff] %vm1767, %v1753
      %1785 = vst.msk [vmem:[#allocation2 + $0x88] sm:$0xff] %vm1767, %v1754
      %1786 = vst.msk [vmem:[#allocation2 + $0x90] sm:$0xff] %vm1767, %v1755
      %1787 = vst.msk [vmem:[#allocation2 + $0x98] sm:$0xff] %vm1767, %v1756
      %1788 = vst.msk [vmem:[#allocation2 + $0xa0] sm:$0xff] %vm1767, %v1757
      %1789 = vst.msk [vmem:[#allocation2 + $0xa8] sm:$0xff] %vm1767, %v1758
      %1790 = vst.msk [vmem:[#allocation2 + $0xb0] sm:$0xff] %vm1767, %v1759
      %1791 = vst.msk [vmem:[#allocation2 + $0xb8] sm:$0xff] %vm1767, %v1760
      %1792 = vst.msk [vmem:[#allocation2 + $0xc0] sm:$0xff] %vm1767, %v1761
      %1793 = vst.msk [vmem:[#allocation2 + $0xc8] sm:$0xff] %vm1767, %v1762
      %1794 = vst.msk [vmem:[#allocation2 + $0xd0] sm:$0xff] %vm1767, %v1763
      %1795 = vst.msk [vmem:[#allocation2 + $0xd8] sm:$0xff] %vm1767, %v1764
      %1796 = vst.msk [vmem:[#allocation2 + $0xe0] sm:$0xff] %vm1767, %v1765
      %1797 = vst.msk [vmem:[#allocation2 + $0xe8] sm:$0xff] %vm1767, %v1766
      %1798 = vst.msk [vmem:[#allocation2 + $0xf0] sm:$0xff] %vm1767, 0.0
      %v1799 = vld [vmem:[#allocation2] sm:$0xff]
      %v1800 = vld [vmem:[#allocation2 + $0x8] sm:$0xff]
      %v1801 = vld [vmem:[#allocation2 + $0x10] sm:$0xff]
      %v1802 = vld [vmem:[#allocation2 + $0x18] sm:$0xff]
      %v1803 = vld [vmem:[#allocation2 + $0x20] sm:$0xff]
      %v1804 = vld [vmem:[#allocation2 + $0x28] sm:$0xff]
      %v1805 = vld [vmem:[#allocation2 + $0x30] sm:$0xff]
      %v1806 = vld [vmem:[#allocation2 + $0x38] sm:$0xff]
      %v1807 = vld [vmem:[#allocation2 + $0x40] sm:$0xff]
      %v1808 = vld [vmem:[#allocation2 + $0x48] sm:$0xff]
      %v1809 = vld [vmem:[#allocation2 + $0x50] sm:$0xff]
      %v1810 = vld [vmem:[#allocation2 + $0x58] sm:$0xff]
      %v1811 = vld [vmem:[#allocation2 + $0x60] sm:$0xff]
      %v1812 = vld [vmem:[#allocation2 + $0x68] sm:$0xff]
      %v1813 = vld [vmem:[#allocation2 + $0x70] sm:$0xff]
      %v1814 = vld [vmem:[#allocation2 + $0x78] sm:$0xff]
      %v1815 = vld [vmem:[#allocation2 + $0x80] sm:$0xff]
      %v1816 = vld [vmem:[#allocation2 + $0x88] sm:$0xff]
      %v1817 = vld [vmem:[#allocation2 + $0x90] sm:$0xff]
      %v1818 = vld [vmem:[#allocation2 + $0x98] sm:$0xff]
      %v1819 = vld [vmem:[#allocation2 + $0xa0] sm:$0xff]
      %v1820 = vld [vmem:[#allocation2 + $0xa8] sm:$0xff]
      %v1821 = vld [vmem:[#allocation2 + $0xb0] sm:$0xff]
      %v1822 = vld [vmem:[#allocation2 + $0xb8] sm:$0xff]
      %v1823 = vld [vmem:[#allocation2 + $0xc0] sm:$0xff]
      %v1824 = vld [vmem:[#allocation2 + $0xc8] sm:$0xff]
      %v1825 = vld [vmem:[#allocation2 + $0xd0] sm:$0xff]
      %v1826 = vld [vmem:[#allocation2 + $0xd8] sm:$0xff]
      %v1827 = vld [vmem:[%s3] sm:$0xff]
      %v1828 = vld [vmem:[#allocation2 + $0x1] sm:$0xff]
      %v1829 = vld [vmem:[#allocation2 + $0x9] sm:$0xff]
      %v1830 = vld [vmem:[#allocation2 + $0x11] sm:$0xff]
      %v1831 = vld [vmem:[#allocation2 + $0x19] sm:$0xff]
      %v1832 = vld [vmem:[#allocation2 + $0x21] sm:$0xff]
      %v1833 = vld [vmem:[#allocation2 + $0x29] sm:$0xff]
      %v1834 = vld [vmem:[#allocation2 + $0x31] sm:$0xff]
      %v1835 = vld [vmem:[#allocation2 + $0x39] sm:$0xff]
      %v1836 = vld [vmem:[#allocation2 + $0x41] sm:$0xff]
      %v1837 = vld [vmem:[#allocation2 + $0x49] sm:$0xff]
      %v1838 = vld [vmem:[#allocation2 + $0x51] sm:$0xff]
      %v1839 = vld [vmem:[#allocation2 + $0x59] sm:$0xff]
      %v1840 = vld [vmem:[#allocation2 + $0x61] sm:$0xff]
      %v1841 = vld [vmem:[#allocation2 + $0x69] sm:$0xff]
      %v1842 = vld [vmem:[#allocation2 + $0x71] sm:$0xff]
      %v1843 = vld [vmem:[#allocation2 + $0x79] sm:$0xff]
      %v1844 = vld [vmem:[#allocation2 + $0x81] sm:$0xff]
      %v1845 = vld [vmem:[#allocation2 + $0x89] sm:$0xff]
      %v1846 = vld [vmem:[#allocation2 + $0x91] sm:$0xff]
      %v1847 = vld [vmem:[#allocation2 + $0x99] sm:$0xff]
      %v1848 = vld [vmem:[#allocation2 + $0xa1] sm:$0xff]
      %v1849 = vld [vmem:[#allocation2 + $0xa9] sm:$0xff]
      %v1850 = vld [vmem:[#allocation2 + $0xb1] sm:$0xff]
      %v1851 = vld [vmem:[#allocation2 + $0xb9] sm:$0xff]
      %v1852 = vld [vmem:[#allocation2 + $0xc1] sm:$0xff]
      %v1853 = vld [vmem:[#allocation2 + $0xc9] sm:$0xff]
      %v1854 = vld [vmem:[#allocation2 + $0xd1] sm:$0xff]
      %v1855 = vld [vmem:[#allocation2 + $0xd9] sm:$0xff]
      %s1856 = scalar_lea.vmem %s3, 8
      %v1857 = vld [vmem:[%s1856] sm:$0xff]
      %v1859 = vsel %vm1767, %v1828, 0
      %v1862 = vsel %vm1767, %v1829, 0
      %v1865 = vsel %vm1767, %v1830, 0
      %v1868 = vsel %vm1767, %v1831, 0
      %v1871 = vsel %vm1767, %v1832, 0
      %v1874 = vsel %vm1767, %v1833, 0
      %v1877 = vsel %vm1767, %v1834, 0
      %v1880 = vsel %vm1767, %v1835, 0
      %v1883 = vsel %vm1767, %v1836, 0
      %v1886 = vsel %vm1767, %v1837, 0
      %v1889 = vsel %vm1767, %v1838, 0
      %v1892 = vsel %vm1767, %v1839, 0
      %v1895 = vsel %vm1767, %v1840, 0
      %v1898 = vsel %vm1767, %v1841, 0
      %v1901 = vsel %vm1767, %v1842, 0
      %v1904 = vsel %vm1767, %v1843, 0
      %v1907 = vsel %vm1767, %v1844, 0
      %v1910 = vsel %vm1767, %v1845, 0
      %v1913 = vsel %vm1767, %v1846, 0
      %v1916 = vsel %vm1767, %v1847, 0
      %v1919 = vsel %vm1767, %v1848, 0
      %v1922 = vsel %vm1767, %v1849, 0
      %v1925 = vsel %vm1767, %v1850, 0
      %v1928 = vsel %vm1767, %v1851, 0
      %v1931 = vsel %vm1767, %v1852, 0
      %v1934 = vsel %vm1767, %v1853, 0
      %v1937 = vsel %vm1767, %v1854, 0
      %v1940 = vsel %vm1767, %v1855, 0
      %1942 = vmatprep.subr.mxu0 0.0
      %1943 = vmatpush1.msra.mxu0 0.0
      %1944 = vmatprep.subr.mxu0 0.0
      %1945 = vmatpush1.msra.mxu0 0.0
      %1946 = vmatprep.subr.mxu0 0.0
      %1947 = vmatpush1.msra.mxu0 0.0
      %1948 = vmatprep.subr.mxu0 0.0
      %1949 = vmatpush1.msra.mxu0 0.0
      %1950 = vmatprep.subr.mxu0 0.0
      %1951 = vmatpush1.msra.mxu0 0.0
      %1952 = vmatprep.subr.mxu0 0.0
      %1953 = vmatpush1.msra.mxu0 0.0
      %1954 = vmatprep.subr.mxu0 0.0
      %1955 = vmatpush1.msra.mxu0 0.0
      %1956 = vmatprep.subr.mxu0 0.0
      %1957 = vmatpush1.msra.mxu0 0.0
      %1958 = vmatprep.subr.mxu0 0.0
      %1959 = vmatpush1.msra.mxu0 0.0
      %1960 = vmatprep.subr.mxu0 0.0
      %1961 = vmatpush1.msra.mxu0 0.0
      %1962 = vmatprep.subr.mxu0 0.0
      %1963 = vmatpush1.msra.mxu0 0.0
      %1964 = vmatprep.subr.mxu0 0.0
      %1965 = vmatpush1.msra.mxu0 0.0
      %1966 = vmatprep.subr.mxu0 0.0
      %1967 = vmatpush1.msra.mxu0 0.0
      %1968 = vmatprep.subr.mxu0 0.0
      %1969 = vmatpush1.msra.mxu0 0.0
      %1970 = vmatprep.subr.mxu0 0.0
      %1971 = vmatpush1.msra.mxu0 0.0
      %1972 = vmatprep.subr.mxu0 0.0
      %1973 = vmatpush1.msra.mxu0 %v1857
      %1974 = vmatprep.subr.mxu0 0.0
      %1975 = vmatpush2.msra.mxu0 0.0
      %1976 = vmatprep.subr.mxu0 0.0
      %1977 = vmatpush2.msra.mxu0 0.0
      %1978 = vmatprep.subr.mxu0 0.0
      %1979 = vmatpush2.msra.mxu0 0.0
      %1980 = vmatprep.subr.mxu0 0.0
      %1981 = vmatpush2.msra.mxu0 0.0
      %1982 = vmatprep.subr.mxu0 0.0
      %1983 = vmatpush2.msra.mxu0 0.0
      %1984 = vmatprep.subr.mxu0 0.0
      %1985 = vmatpush2.msra.mxu0 0.0
      %1986 = vmatprep.subr.mxu0 0.0
      %1987 = vmatpush2.msra.mxu0 0.0
      %1988 = vmatprep.subr.mxu0 0.0
      %1989 = vmatpush2.msra.mxu0 0.0
      %1990 = vmatprep.subr.mxu0 0.0
      %1991 = vmatpush2.msra.mxu0 0.0
      %1992 = vmatprep.subr.mxu0 0.0
      %1993 = vmatpush2.msra.mxu0 0.0
      %1994 = vmatprep.subr.mxu0 0.0
      %1995 = vmatpush2.msra.mxu0 0.0
      %1996 = vmatprep.subr.mxu0 0.0
      %1997 = vmatpush2.msra.mxu0 0.0
      %1998 = vmatprep.subr.mxu0 0.0
      %1999 = vmatpush2.msra.mxu0 0.0
      %2000 = vmatprep.subr.mxu0 0.0
      %2001 = vmatpush2.msra.mxu0 0.0
      %2002 = vmatprep.subr.mxu0 0.0
      %2003 = vmatpush2.msra.mxu0 0.0
      %2004 = vmatprep.subr.mxu0 0.0
      %2005 = vmatpush2.msra.mxu0 0.0
      %2006 = vmatprep.mubr.f32.mxu0 0.0
      %2007 = vmatmul.mubr.f32.gmra.mxu0 %v1859
      %v2008 = vpop.f32.mrf.mxu0
      %v2009 = vadd.f32 0.0, %v2008
      %v2010 = vpop.f32.mrf.mxu0
      %2011 = vmatprep.mubr.f32.mxu0 0.0
      %2012 = vmatmul.mubr.f32.gmra.mxu0 %v1862
      %v2013 = vpop.f32.mrf.mxu0
      %v2014 = vadd.f32 0.0, %v2013
      %v2015 = vpop.f32.mrf.mxu0
      %2016 = vmatprep.mubr.f32.mxu0 0.0
      %2017 = vmatmul.mubr.f32.gmra.mxu0 %v1865
      %v2018 = vpop.f32.mrf.mxu0
      %v2019 = vadd.f32 0.0, %v2018
      %v2020 = vpop.f32.mrf.mxu0
      %2021 = vmatprep.mubr.f32.mxu0 0.0
      %2022 = vmatmul.mubr.f32.gmra.mxu0 %v1868
      %v2023 = vpop.f32.mrf.mxu0
      %v2024 = vadd.f32 0.0, %v2023
      %v2025 = vpop.f32.mrf.mxu0
      %2026 = vmatprep.mubr.f32.mxu0 0.0
      %2027 = vmatmul.mubr.f32.gmra.mxu0 %v1871
      %v2028 = vpop.f32.mrf.mxu0
      %v2029 = vadd.f32 0.0, %v2028
      %v2030 = vpop.f32.mrf.mxu0
      %2031 = vmatprep.mubr.f32.mxu0 0.0
      %2032 = vmatmul.mubr.f32.gmra.mxu0 %v1874
      %v2033 = vpop.f32.mrf.mxu0
      %v2034 = vadd.f32 0.0, %v2033
      %v2035 = vpop.f32.mrf.mxu0
      %2036 = vmatprep.mubr.f32.mxu0 0.0
      %2037 = vmatmul.mubr.f32.gmra.mxu0 %v1877
      %v2038 = vpop.f32.mrf.mxu0
      %v2039 = vadd.f32 0.0, %v2038
      %v2040 = vpop.f32.mrf.mxu0
      %2041 = vmatprep.mubr.f32.mxu0 0.0
      %2042 = vmatmul.mubr.f32.gmra.mxu0 %v1880
      %v2043 = vpop.f32.mrf.mxu0
      %v2044 = vadd.f32 0.0, %v2043
      %v2045 = vpop.f32.mrf.mxu0
      %2046 = vmatprep.mubr.f32.mxu0 0.0
      %2047 = vmatmul.mubr.f32.gmra.mxu0 %v1883
      %v2048 = vpop.f32.mrf.mxu0
      %v2049 = vadd.f32 0.0, %v2048
      %v2050 = vpop.f32.mrf.mxu0
      %2051 = vmatprep.mubr.f32.mxu0 0.0
      %2052 = vmatmul.mubr.f32.gmra.mxu0 %v1886
      %v2053 = vpop.f32.mrf.mxu0
      %v2054 = vadd.f32 0.0, %v2053
      %v2055 = vpop.f32.mrf.mxu0
      %2056 = vmatprep.mubr.f32.mxu0 0.0
      %2057 = vmatmul.mubr.f32.gmra.mxu0 %v1889
      %v2058 = vpop.f32.mrf.mxu0
      %v2059 = vadd.f32 0.0, %v2058
      %v2060 = vpop.f32.mrf.mxu0
      %2061 = vmatprep.mubr.f32.mxu0 0.0
      %2062 = vmatmul.mubr.f32.gmra.mxu0 %v1892
      %v2063 = vpop.f32.mrf.mxu0
      %v2064 = vadd.f32 0.0, %v2063
      %v2065 = vpop.f32.mrf.mxu0
      %2066 = vmatprep.mubr.f32.mxu0 0.0
      %2067 = vmatmul.mubr.f32.gmra.mxu0 %v1895
      %v2068 = vpop.f32.mrf.mxu0
      %v2069 = vadd.f32 0.0, %v2068
      %v2070 = vpop.f32.mrf.mxu0
      %2071 = vmatprep.mubr.f32.mxu0 0.0
      %2072 = vmatmul.mubr.f32.gmra.mxu0 %v1898
      %v2073 = vpop.f32.mrf.mxu0
      %v2074 = vadd.f32 0.0, %v2073
      %v2075 = vpop.f32.mrf.mxu0
      %2076 = vmatprep.mubr.f32.mxu0 0.0
      %2077 = vmatmul.mubr.f32.gmra.mxu0 %v1901
      %v2078 = vpop.f32.mrf.mxu0
      %v2079 = vadd.f32 0.0, %v2078
      %v2080 = vpop.f32.mrf.mxu0
      %2081 = vmatprep.mubr.f32.mxu0 0.0
      %2082 = vmatmul.mubr.f32.gmra.mxu0 %v1904
      %v2083 = vpop.f32.mrf.mxu0
      %v2084 = vadd.f32 0.0, %v2083
      %v2085 = vpop.f32.mrf.mxu0
      %2086 = vmatprep.mubr.f32.mxu0 0.0
      %2087 = vmatmul.mubr.f32.gmra.mxu0 %v1907
      %v2088 = vpop.f32.mrf.mxu0
      %v2089 = vadd.f32 0.0, %v2088
      %v2090 = vpop.f32.mrf.mxu0
      %2091 = vmatprep.mubr.f32.mxu0 0.0
      %2092 = vmatmul.mubr.f32.gmra.mxu0 %v1910
      %v2093 = vpop.f32.mrf.mxu0
      %v2094 = vadd.f32 0.0, %v2093
      %v2095 = vpop.f32.mrf.mxu0
      %2096 = vmatprep.mubr.f32.mxu0 0.0
      %2097 = vmatmul.mubr.f32.gmra.mxu0 %v1913
      %v2098 = vpop.f32.mrf.mxu0
      %v2099 = vadd.f32 0.0, %v2098
      %v2100 = vpop.f32.mrf.mxu0
      %2101 = vmatprep.mubr.f32.mxu0 0.0
      %2102 = vmatmul.mubr.f32.gmra.mxu0 %v1916
      %v2103 = vpop.f32.mrf.mxu0
      %v2104 = vadd.f32 0.0, %v2103
      %v2105 = vpop.f32.mrf.mxu0
      %2106 = vmatprep.mubr.f32.mxu0 0.0
      %2107 = vmatmul.mubr.f32.gmra.mxu0 %v1919
      %v2108 = vpop.f32.mrf.mxu0
      %v2109 = vadd.f32 0.0, %v2108
      %v2110 = vpop.f32.mrf.mxu0
      %2111 = vmatprep.mubr.f32.mxu0 0.0
      %2112 = vmatmul.mubr.f32.gmra.mxu0 %v1922
      %v2113 = vpop.f32.mrf.mxu0
      %v2114 = vadd.f32 0.0, %v2113
      %v2115 = vpop.f32.mrf.mxu0
      %2116 = vmatprep.mubr.f32.mxu0 0.0
      %2117 = vmatmul.mubr.f32.gmra.mxu0 %v1925
      %v2118 = vpop.f32.mrf.mxu0
      %v2119 = vadd.f32 0.0, %v2118
      %v2120 = vpop.f32.mrf.mxu0
      %2121 = vmatprep.mubr.f32.mxu0 0.0
      %2122 = vmatmul.mubr.f32.gmra.mxu0 %v1928
      %v2123 = vpop.f32.mrf.mxu0
      %v2124 = vadd.f32 0.0, %v2123
      %v2125 = vpop.f32.mrf.mxu0
      %2126 = vmatprep.mubr.f32.mxu0 0.0
      %2127 = vmatmul.mubr.f32.gmra.mxu0 %v1931
      %v2128 = vpop.f32.mrf.mxu0
      %v2129 = vadd.f32 0.0, %v2128
      %v2130 = vpop.f32.mrf.mxu0
      %2131 = vmatprep.mubr.f32.mxu0 0.0
      %2132 = vmatmul.mubr.f32.gmra.mxu0 %v1934
      %v2133 = vpop.f32.mrf.mxu0
      %v2134 = vadd.f32 0.0, %v2133
      %v2135 = vpop.f32.mrf.mxu0
      %2136 = vmatprep.mubr.f32.mxu0 0.0
      %2137 = vmatmul.mubr.f32.gmra.mxu0 %v1937
      %v2138 = vpop.f32.mrf.mxu0
      %v2139 = vadd.f32 0.0, %v2138
      %v2140 = vpop.f32.mrf.mxu0
      %2141 = vmatprep.mubr.f32.mxu0 0.0
      %2142 = vmatmul.mubr.f32.gmra.mxu0 %v1940
      %v2143 = vpop.f32.mrf.mxu0
      %v2144 = vadd.f32 0.0, %v2143
      %v2145 = vpop.f32.mrf.mxu0
      %2146 = vdwg.mxu0
      %v2148 = vsel %vm1767, %v1799, 0
      %v2151 = vsel %vm1767, %v1800, 0
      %v2154 = vsel %vm1767, %v1801, 0
      %v2157 = vsel %vm1767, %v1802, 0
      %v2160 = vsel %vm1767, %v1803, 0
      %v2163 = vsel %vm1767, %v1804, 0
      %v2166 = vsel %vm1767, %v1805, 0
      %v2169 = vsel %vm1767, %v1806, 0
      %v2172 = vsel %vm1767, %v1807, 0
      %v2175 = vsel %vm1767, %v1808, 0
      %v2178 = vsel %vm1767, %v1809, 0
      %v2181 = vsel %vm1767, %v1810, 0
      %v2184 = vsel %vm1767, %v1811, 0
      %v2187 = vsel %vm1767, %v1812, 0
      %v2190 = vsel %vm1767, %v1813, 0
      %v2193 = vsel %vm1767, %v1814, 0
      %v2196 = vsel %vm1767, %v1815, 0
      %v2199 = vsel %vm1767, %v1816, 0
      %v2202 = vsel %vm1767, %v1817, 0
      %v2205 = vsel %vm1767, %v1818, 0
      %v2208 = vsel %vm1767, %v1819, 0
      %v2211 = vsel %vm1767, %v1820, 0
      %v2214 = vsel %vm1767, %v1821, 0
      %v2217 = vsel %vm1767, %v1822, 0
      %v2220 = vsel %vm1767, %v1823, 0
      %v2223 = vsel %vm1767, %v1824, 0
      %v2226 = vsel %vm1767, %v1825, 0
      %v2229 = vsel %vm1767, %v1826, 0
      %2231 = vmatprep.subr.mxu0 0.0
      %2232 = vmatpush1.msra.mxu0 0.0
      %2233 = vmatprep.subr.mxu0 0.0
      %2234 = vmatpush1.msra.mxu0 0.0
      %2235 = vmatprep.subr.mxu0 0.0
      %2236 = vmatpush1.msra.mxu0 0.0
      %2237 = vmatprep.subr.mxu0 0.0
      %2238 = vmatpush1.msra.mxu0 0.0
      %2239 = vmatprep.subr.mxu0 0.0
      %2240 = vmatpush1.msra.mxu0 0.0
      %2241 = vmatprep.subr.mxu0 0.0
      %2242 = vmatpush1.msra.mxu0 0.0
      %2243 = vmatprep.subr.mxu0 0.0
      %2244 = vmatpush1.msra.mxu0 0.0
      %2245 = vmatprep.subr.mxu0 0.0
      %2246 = vmatpush1.msra.mxu0 0.0
      %2247 = vmatprep.subr.mxu0 0.0
      %2248 = vmatpush1.msra.mxu0 0.0
      %2249 = vmatprep.subr.mxu0 0.0
      %2250 = vmatpush1.msra.mxu0 0.0
      %2251 = vmatprep.subr.mxu0 0.0
      %2252 = vmatpush1.msra.mxu0 0.0
      %2253 = vmatprep.subr.mxu0 0.0
      %2254 = vmatpush1.msra.mxu0 0.0
      %2255 = vmatprep.subr.mxu0 0.0
      %2256 = vmatpush1.msra.mxu0 0.0
      %2257 = vmatprep.subr.mxu0 0.0
      %2258 = vmatpush1.msra.mxu0 0.0
      %2259 = vmatprep.subr.mxu0 0.0
      %2260 = vmatpush1.msra.mxu0 0.0
      %2261 = vmatprep.subr.mxu0 0.0
      %2262 = vmatpush1.msra.mxu0 %v1827
      %2263 = vmatprep.subr.mxu0 0.0
      %2264 = vmatpush2.msra.mxu0 0.0
      %2265 = vmatprep.subr.mxu0 0.0
      %2266 = vmatpush2.msra.mxu0 0.0
      %2267 = vmatprep.subr.mxu0 0.0
      %2268 = vmatpush2.msra.mxu0 0.0
      %2269 = vmatprep.subr.mxu0 0.0
      %2270 = vmatpush2.msra.mxu0 0.0
      %2271 = vmatprep.subr.mxu0 0.0
      %2272 = vmatpush2.msra.mxu0 0.0
      %2273 = vmatprep.subr.mxu0 0.0
      %2274 = vmatpush2.msra.mxu0 0.0
      %2275 = vmatprep.subr.mxu0 0.0
      %2276 = vmatpush2.msra.mxu0 0.0
      %2277 = vmatprep.subr.mxu0 0.0
      %2278 = vmatpush2.msra.mxu0 0.0
      %2279 = vmatprep.subr.mxu0 0.0
      %2280 = vmatpush2.msra.mxu0 0.0
      %2281 = vmatprep.subr.mxu0 0.0
      %2282 = vmatpush2.msra.mxu0 0.0
      %2283 = vmatprep.subr.mxu0 0.0
      %2284 = vmatpush2.msra.mxu0 0.0
      %2285 = vmatprep.subr.mxu0 0.0
      %2286 = vmatpush2.msra.mxu0 0.0
      %2287 = vmatprep.subr.mxu0 0.0
      %2288 = vmatpush2.msra.mxu0 0.0
      %2289 = vmatprep.subr.mxu0 0.0
      %2290 = vmatpush2.msra.mxu0 0.0
      %2291 = vmatprep.subr.mxu0 0.0
      %2292 = vmatpush2.msra.mxu0 0.0
      %2293 = vmatprep.subr.mxu0 0.0
      %2294 = vmatpush2.msra.mxu0 0.0
      %2295 = vmatprep.mubr.f32.mxu0 0.0
      %2296 = vmatmul.mubr.f32.gmra.mxu0 %v2148
      %v2297 = vpop.f32.mrf.mxu0
      %v2298 = vadd.f32 %v2009, %v2297
      %v2299 = vpop.f32.mrf.mxu0
      %2300 = vmatprep.mubr.f32.mxu0 0.0
      %2301 = vmatmul.mubr.f32.gmra.mxu0 %v2151
      %v2302 = vpop.f32.mrf.mxu0
      %v2303 = vadd.f32 %v2014, %v2302
      %v2304 = vpop.f32.mrf.mxu0
      %2305 = vmatprep.mubr.f32.mxu0 0.0
      %2306 = vmatmul.mubr.f32.gmra.mxu0 %v2154
      %v2307 = vpop.f32.mrf.mxu0
      %v2308 = vadd.f32 %v2019, %v2307
      %v2309 = vpop.f32.mrf.mxu0
      %2310 = vmatprep.mubr.f32.mxu0 0.0
      %2311 = vmatmul.mubr.f32.gmra.mxu0 %v2157
      %v2312 = vpop.f32.mrf.mxu0
      %v2313 = vadd.f32 %v2024, %v2312
      %v2314 = vpop.f32.mrf.mxu0
      %2315 = vmatprep.mubr.f32.mxu0 0.0
      %2316 = vmatmul.mubr.f32.gmra.mxu0 %v2160
      %v2317 = vpop.f32.mrf.mxu0
      %v2318 = vadd.f32 %v2029, %v2317
      %v2319 = vpop.f32.mrf.mxu0
      %2320 = vmatprep.mubr.f32.mxu0 0.0
      %2321 = vmatmul.mubr.f32.gmra.mxu0 %v2163
      %v2322 = vpop.f32.mrf.mxu0
      %v2323 = vadd.f32 %v2034, %v2322
      %v2324 = vpop.f32.mrf.mxu0
      %2325 = vmatprep.mubr.f32.mxu0 0.0
      %2326 = vmatmul.mubr.f32.gmra.mxu0 %v2166
      %v2327 = vpop.f32.mrf.mxu0
      %v2328 = vadd.f32 %v2039, %v2327
      %v2329 = vpop.f32.mrf.mxu0
      %2330 = vmatprep.mubr.f32.mxu0 0.0
      %2331 = vmatmul.mubr.f32.gmra.mxu0 %v2169
      %v2332 = vpop.f32.mrf.mxu0
      %v2333 = vadd.f32 %v2044, %v2332
      %v2334 = vpop.f32.mrf.mxu0
      %2335 = vmatprep.mubr.f32.mxu0 0.0
      %2336 = vmatmul.mubr.f32.gmra.mxu0 %v2172
      %v2337 = vpop.f32.mrf.mxu0
      %v2338 = vadd.f32 %v2049, %v2337
      %v2339 = vpop.f32.mrf.mxu0
      %2340 = vmatprep.mubr.f32.mxu0 0.0
      %2341 = vmatmul.mubr.f32.gmra.mxu0 %v2175
      %v2342 = vpop.f32.mrf.mxu0
      %v2343 = vadd.f32 %v2054, %v2342
      %v2344 = vpop.f32.mrf.mxu0
      %2345 = vmatprep.mubr.f32.mxu0 0.0
      %2346 = vmatmul.mubr.f32.gmra.mxu0 %v2178
      %v2347 = vpop.f32.mrf.mxu0
      %v2348 = vadd.f32 %v2059, %v2347
      %v2349 = vpop.f32.mrf.mxu0
      %2350 = vmatprep.mubr.f32.mxu0 0.0
      %2351 = vmatmul.mubr.f32.gmra.mxu0 %v2181
      %v2352 = vpop.f32.mrf.mxu0
      %v2353 = vadd.f32 %v2064, %v2352
      %v2354 = vpop.f32.mrf.mxu0
      %2355 = vmatprep.mubr.f32.mxu0 0.0
      %2356 = vmatmul.mubr.f32.gmra.mxu0 %v2184
      %v2357 = vpop.f32.mrf.mxu0
      %v2358 = vadd.f32 %v2069, %v2357
      %v2359 = vpop.f32.mrf.mxu0
      %2360 = vmatprep.mubr.f32.mxu0 0.0
      %2361 = vmatmul.mubr.f32.gmra.mxu0 %v2187
      %v2362 = vpop.f32.mrf.mxu0
      %v2363 = vadd.f32 %v2074, %v2362
      %v2364 = vpop.f32.mrf.mxu0
      %2365 = vmatprep.mubr.f32.mxu0 0.0
      %2366 = vmatmul.mubr.f32.gmra.mxu0 %v2190
      %v2367 = vpop.f32.mrf.mxu0
      %v2368 = vadd.f32 %v2079, %v2367
      %v2369 = vpop.f32.mrf.mxu0
      %2370 = vmatprep.mubr.f32.mxu0 0.0
      %2371 = vmatmul.mubr.f32.gmra.mxu0 %v2193
      %v2372 = vpop.f32.mrf.mxu0
      %v2373 = vadd.f32 %v2084, %v2372
      %v2374 = vpop.f32.mrf.mxu0
      %2375 = vmatprep.mubr.f32.mxu0 0.0
      %2376 = vmatmul.mubr.f32.gmra.mxu0 %v2196
      %v2377 = vpop.f32.mrf.mxu0
      %v2378 = vadd.f32 %v2089, %v2377
      %v2379 = vpop.f32.mrf.mxu0
      %2380 = vmatprep.mubr.f32.mxu0 0.0
      %2381 = vmatmul.mubr.f32.gmra.mxu0 %v2199
      %v2382 = vpop.f32.mrf.mxu0
      %v2383 = vadd.f32 %v2094, %v2382
      %v2384 = vpop.f32.mrf.mxu0
      %2385 = vmatprep.mubr.f32.mxu0 0.0
      %2386 = vmatmul.mubr.f32.gmra.mxu0 %v2202
      %v2387 = vpop.f32.mrf.mxu0
      %v2388 = vadd.f32 %v2099, %v2387
      %v2389 = vpop.f32.mrf.mxu0
      %2390 = vmatprep.mubr.f32.mxu0 0.0
      %2391 = vmatmul.mubr.f32.gmra.mxu0 %v2205
      %v2392 = vpop.f32.mrf.mxu0
      %v2393 = vadd.f32 %v2104, %v2392
      %v2394 = vpop.f32.mrf.mxu0
      %2395 = vmatprep.mubr.f32.mxu0 0.0
      %2396 = vmatmul.mubr.f32.gmra.mxu0 %v2208
      %v2397 = vpop.f32.mrf.mxu0
      %v2398 = vadd.f32 %v2109, %v2397
      %v2399 = vpop.f32.mrf.mxu0
      %2400 = vmatprep.mubr.f32.mxu0 0.0
      %2401 = vmatmul.mubr.f32.gmra.mxu0 %v2211
      %v2402 = vpop.f32.mrf.mxu0
      %v2403 = vadd.f32 %v2114, %v2402
      %v2404 = vpop.f32.mrf.mxu0
      %2405 = vmatprep.mubr.f32.mxu0 0.0
      %2406 = vmatmul.mubr.f32.gmra.mxu0 %v2214
      %v2407 = vpop.f32.mrf.mxu0
      %v2408 = vadd.f32 %v2119, %v2407
      %v2409 = vpop.f32.mrf.mxu0
      %2410 = vmatprep.mubr.f32.mxu0 0.0
      %2411 = vmatmul.mubr.f32.gmra.mxu0 %v2217
      %v2412 = vpop.f32.mrf.mxu0
      %v2413 = vadd.f32 %v2124, %v2412
      %v2414 = vpop.f32.mrf.mxu0
      %2415 = vmatprep.mubr.f32.mxu0 0.0
      %2416 = vmatmul.mubr.f32.gmra.mxu0 %v2220
      %v2417 = vpop.f32.mrf.mxu0
      %v2418 = vadd.f32 %v2129, %v2417
      %v2419 = vpop.f32.mrf.mxu0
      %2420 = vmatprep.mubr.f32.mxu0 0.0
      %2421 = vmatmul.mubr.f32.gmra.mxu0 %v2223
      %v2422 = vpop.f32.mrf.mxu0
      %v2423 = vadd.f32 %v2134, %v2422
      %v2424 = vpop.f32.mrf.mxu0
      %2425 = vmatprep.mubr.f32.mxu0 0.0
      %2426 = vmatmul.mubr.f32.gmra.mxu0 %v2226
      %v2427 = vpop.f32.mrf.mxu0
      %v2428 = vadd.f32 %v2139, %v2427
      %v2429 = vpop.f32.mrf.mxu0
      %2430 = vmatprep.mubr.f32.mxu0 0.0
      %2431 = vmatmul.mubr.f32.gmra.mxu0 %v2229
      %v2432 = vpop.f32.mrf.mxu0
      %v2433 = vadd.f32 %v2144, %v2432
      %v2434 = vpop.f32.mrf.mxu0
      %2435 = vdwg.mxu0
      %v2436 = vld [vmem:[#allocation2 + $0x10] sm:$0xff]
      %v2437 = vld [vmem:[#allocation2 + $0x18] sm:$0xff]
      %v2438 = vld [vmem:[#allocation2 + $0x20] sm:$0xff]
      %v2439 = vld [vmem:[#allocation2 + $0x28] sm:$0xff]
      %v2440 = vld [vmem:[#allocation2 + $0x30] sm:$0xff]
      %v2441 = vld [vmem:[#allocation2 + $0x38] sm:$0xff]
      %v2442 = vld [vmem:[#allocation2 + $0x40] sm:$0xff]
      %v2443 = vld [vmem:[#allocation2 + $0x48] sm:$0xff]
      %v2444 = vld [vmem:[#allocation2 + $0x50] sm:$0xff]
      %v2445 = vld [vmem:[#allocation2 + $0x58] sm:$0xff]
      %v2446 = vld [vmem:[#allocation2 + $0x60] sm:$0xff]
      %v2447 = vld [vmem:[#allocation2 + $0x68] sm:$0xff]
      %v2448 = vld [vmem:[#allocation2 + $0x70] sm:$0xff]
      %v2449 = vld [vmem:[#allocation2 + $0x78] sm:$0xff]
      %v2450 = vld [vmem:[#allocation2 + $0x80] sm:$0xff]
      %v2451 = vld [vmem:[#allocation2 + $0x88] sm:$0xff]
      %v2452 = vld [vmem:[#allocation2 + $0x90] sm:$0xff]
      %v2453 = vld [vmem:[#allocation2 + $0x98] sm:$0xff]
      %v2454 = vld [vmem:[#allocation2 + $0xa0] sm:$0xff]
      %v2455 = vld [vmem:[#allocation2 + $0xa8] sm:$0xff]
      %v2456 = vld [vmem:[#allocation2 + $0xb0] sm:$0xff]
      %v2457 = vld [vmem:[#allocation2 + $0xb8] sm:$0xff]
      %v2458 = vld [vmem:[#allocation2 + $0xc0] sm:$0xff]
      %v2459 = vld [vmem:[#allocation2 + $0xc8] sm:$0xff]
      %v2460 = vld [vmem:[#allocation2 + $0xd0] sm:$0xff]
      %v2461 = vld [vmem:[#allocation2 + $0xd8] sm:$0xff]
      %v2462 = vld [vmem:[#allocation2 + $0xe0] sm:$0xff]
      %v2463 = vld [vmem:[#allocation2 + $0xe8] sm:$0xff]
      %s2464 = scalar_lea.vmem %s3, 16
      %v2465 = vld [vmem:[%s2464] sm:$0xff]
      %v2467 = vsel %vm1767, %v2436, 0
      %v2470 = vsel %vm1767, %v2437, 0
      %v2473 = vsel %vm1767, %v2438, 0
      %v2476 = vsel %vm1767, %v2439, 0
      %v2479 = vsel %vm1767, %v2440, 0
      %v2482 = vsel %vm1767, %v2441, 0
      %v2485 = vsel %vm1767, %v2442, 0
      %v2488 = vsel %vm1767, %v2443, 0
      %v2491 = vsel %vm1767, %v2444, 0
      %v2494 = vsel %vm1767, %v2445, 0
      %v2497 = vsel %vm1767, %v2446, 0
      %v2500 = vsel %vm1767, %v2447, 0
      %v2503 = vsel %vm1767, %v2448, 0
      %v2506 = vsel %vm1767, %v2449, 0
      %v2509 = vsel %vm1767, %v2450, 0
      %v2512 = vsel %vm1767, %v2451, 0
      %v2515 = vsel %vm1767, %v2452, 0
      %v2518 = vsel %vm1767, %v2453, 0
      %v2521 = vsel %vm1767, %v2454, 0
      %v2524 = vsel %vm1767, %v2455, 0
      %v2527 = vsel %vm1767, %v2456, 0
      %v2530 = vsel %vm1767, %v2457, 0
      %v2533 = vsel %vm1767, %v2458, 0
      %v2536 = vsel %vm1767, %v2459, 0
      %v2539 = vsel %vm1767, %v2460, 0
      %v2542 = vsel %vm1767, %v2461, 0
      %v2545 = vsel %vm1767, %v2462, 0
      %v2548 = vsel %vm1767, %v2463, 0
      %2550 = vmatprep.subr.mxu0 0.0
      %2551 = vmatpush1.msra.mxu0 0.0
      %2552 = vmatprep.subr.mxu0 0.0
      %2553 = vmatpush1.msra.mxu0 0.0
      %2554 = vmatprep.subr.mxu0 0.0
      %2555 = vmatpush1.msra.mxu0 0.0
      %2556 = vmatprep.subr.mxu0 0.0
      %2557 = vmatpush1.msra.mxu0 0.0
      %2558 = vmatprep.subr.mxu0 0.0
      %2559 = vmatpush1.msra.mxu0 0.0
      %2560 = vmatprep.subr.mxu0 0.0
      %2561 = vmatpush1.msra.mxu0 0.0
      %2562 = vmatprep.subr.mxu0 0.0
      %2563 = vmatpush1.msra.mxu0 0.0
      %2564 = vmatprep.subr.mxu0 0.0
      %2565 = vmatpush1.msra.mxu0 0.0
      %2566 = vmatprep.subr.mxu0 0.0
      %2567 = vmatpush1.msra.mxu0 0.0
      %2568 = vmatprep.subr.mxu0 0.0
      %2569 = vmatpush1.msra.mxu0 0.0
      %2570 = vmatprep.subr.mxu0 0.0
      %2571 = vmatpush1.msra.mxu0 0.0
      %2572 = vmatprep.subr.mxu0 0.0
      %2573 = vmatpush1.msra.mxu0 0.0
      %2574 = vmatprep.subr.mxu0 0.0
      %2575 = vmatpush1.msra.mxu0 0.0
      %2576 = vmatprep.subr.mxu0 0.0
      %2577 = vmatpush1.msra.mxu0 0.0
      %2578 = vmatprep.subr.mxu0 0.0
      %2579 = vmatpush1.msra.mxu0 0.0
      %2580 = vmatprep.subr.mxu0 0.0
      %2581 = vmatpush1.msra.mxu0 %v2465
      %2582 = vmatprep.subr.mxu0 0.0
      %2583 = vmatpush2.msra.mxu0 0.0
      %2584 = vmatprep.subr.mxu0 0.0
      %2585 = vmatpush2.msra.mxu0 0.0
      %2586 = vmatprep.subr.mxu0 0.0
      %2587 = vmatpush2.msra.mxu0 0.0
      %2588 = vmatprep.subr.mxu0 0.0
      %2589 = vmatpush2.msra.mxu0 0.0
      %2590 = vmatprep.subr.mxu0 0.0
      %2591 = vmatpush2.msra.mxu0 0.0
      %2592 = vmatprep.subr.mxu0 0.0
      %2593 = vmatpush2.msra.mxu0 0.0
      %2594 = vmatprep.subr.mxu0 0.0
      %2595 = vmatpush2.msra.mxu0 0.0
      %2596 = vmatprep.subr.mxu0 0.0
      %2597 = vmatpush2.msra.mxu0 0.0
      %2598 = vmatprep.subr.mxu0 0.0
      %2599 = vmatpush2.msra.mxu0 0.0
      %2600 = vmatprep.subr.mxu0 0.0
      %2601 = vmatpush2.msra.mxu0 0.0
      %2602 = vmatprep.subr.mxu0 0.0
      %2603 = vmatpush2.msra.mxu0 0.0
      %2604 = vmatprep.subr.mxu0 0.0
      %2605 = vmatpush2.msra.mxu0 0.0
      %2606 = vmatprep.subr.mxu0 0.0
      %2607 = vmatpush2.msra.mxu0 0.0
      %2608 = vmatprep.subr.mxu0 0.0
      %2609 = vmatpush2.msra.mxu0 0.0
      %2610 = vmatprep.subr.mxu0 0.0
      %2611 = vmatpush2.msra.mxu0 0.0
      %2612 = vmatprep.subr.mxu0 0.0
      %2613 = vmatpush2.msra.mxu0 0.0
      %2614 = vmatprep.mubr.f32.mxu0 0.0
      %2615 = vmatmul.mubr.f32.gmra.mxu0 %v2467
      %v2616 = vpop.f32.mrf.mxu0
      %v2617 = vadd.f32 0.0, %v2616
      %v2618 = vpop.f32.mrf.mxu0
      %2619 = vmatprep.mubr.f32.mxu0 0.0
      %2620 = vmatmul.mubr.f32.gmra.mxu0 %v2470
      %v2621 = vpop.f32.mrf.mxu0
      %v2622 = vadd.f32 0.0, %v2621
      %v2623 = vpop.f32.mrf.mxu0
      %2624 = vmatprep.mubr.f32.mxu0 0.0
      %2625 = vmatmul.mubr.f32.gmra.mxu0 %v2473
      %v2626 = vpop.f32.mrf.mxu0
      %v2627 = vadd.f32 0.0, %v2626
      %v2628 = vpop.f32.mrf.mxu0
      %2629 = vmatprep.mubr.f32.mxu0 0.0
      %2630 = vmatmul.mubr.f32.gmra.mxu0 %v2476
      %v2631 = vpop.f32.mrf.mxu0
      %v2632 = vadd.f32 0.0, %v2631
      %v2633 = vpop.f32.mrf.mxu0
      %2634 = vmatprep.mubr.f32.mxu0 0.0
      %2635 = vmatmul.mubr.f32.gmra.mxu0 %v2479
      %v2636 = vpop.f32.mrf.mxu0
      %v2637 = vadd.f32 0.0, %v2636
      %v2638 = vpop.f32.mrf.mxu0
      %2639 = vmatprep.mubr.f32.mxu0 0.0
      %2640 = vmatmul.mubr.f32.gmra.mxu0 %v2482
      %v2641 = vpop.f32.mrf.mxu0
      %v2642 = vadd.f32 0.0, %v2641
      %v2643 = vpop.f32.mrf.mxu0
      %2644 = vmatprep.mubr.f32.mxu0 0.0
      %2645 = vmatmul.mubr.f32.gmra.mxu0 %v2485
      %v2646 = vpop.f32.mrf.mxu0
      %v2647 = vadd.f32 0.0, %v2646
      %v2648 = vpop.f32.mrf.mxu0
      %2649 = vmatprep.mubr.f32.mxu0 0.0
      %2650 = vmatmul.mubr.f32.gmra.mxu0 %v2488
      %v2651 = vpop.f32.mrf.mxu0
      %v2652 = vadd.f32 0.0, %v2651
      %v2653 = vpop.f32.mrf.mxu0
      %2654 = vmatprep.mubr.f32.mxu0 0.0
      %2655 = vmatmul.mubr.f32.gmra.mxu0 %v2491
      %v2656 = vpop.f32.mrf.mxu0
      %v2657 = vadd.f32 0.0, %v2656
      %v2658 = vpop.f32.mrf.mxu0
      %2659 = vmatprep.mubr.f32.mxu0 0.0
      %2660 = vmatmul.mubr.f32.gmra.mxu0 %v2494
      %v2661 = vpop.f32.mrf.mxu0
      %v2662 = vadd.f32 0.0, %v2661
      %v2663 = vpop.f32.mrf.mxu0
      %2664 = vmatprep.mubr.f32.mxu0 0.0
      %2665 = vmatmul.mubr.f32.gmra.mxu0 %v2497
      %v2666 = vpop.f32.mrf.mxu0
      %v2667 = vadd.f32 0.0, %v2666
      %v2668 = vpop.f32.mrf.mxu0
      %2669 = vmatprep.mubr.f32.mxu0 0.0
      %2670 = vmatmul.mubr.f32.gmra.mxu0 %v2500
      %v2671 = vpop.f32.mrf.mxu0
      %v2672 = vadd.f32 0.0, %v2671
      %v2673 = vpop.f32.mrf.mxu0
      %2674 = vmatprep.mubr.f32.mxu0 0.0
      %2675 = vmatmul.mubr.f32.gmra.mxu0 %v2503
      %v2676 = vpop.f32.mrf.mxu0
      %v2677 = vadd.f32 0.0, %v2676
      %v2678 = vpop.f32.mrf.mxu0
      %2679 = vmatprep.mubr.f32.mxu0 0.0
      %2680 = vmatmul.mubr.f32.gmra.mxu0 %v2506
      %v2681 = vpop.f32.mrf.mxu0
      %v2682 = vadd.f32 0.0, %v2681
      %v2683 = vpop.f32.mrf.mxu0
      %2684 = vmatprep.mubr.f32.mxu0 0.0
      %2685 = vmatmul.mubr.f32.gmra.mxu0 %v2509
      %v2686 = vpop.f32.mrf.mxu0
      %v2687 = vadd.f32 0.0, %v2686
      %v2688 = vpop.f32.mrf.mxu0
      %2689 = vmatprep.mubr.f32.mxu0 0.0
      %2690 = vmatmul.mubr.f32.gmra.mxu0 %v2512
      %v2691 = vpop.f32.mrf.mxu0
      %v2692 = vadd.f32 0.0, %v2691
      %v2693 = vpop.f32.mrf.mxu0
      %2694 = vmatprep.mubr.f32.mxu0 0.0
      %2695 = vmatmul.mubr.f32.gmra.mxu0 %v2515
      %v2696 = vpop.f32.mrf.mxu0
      %v2697 = vadd.f32 0.0, %v2696
      %v2698 = vpop.f32.mrf.mxu0
      %2699 = vmatprep.mubr.f32.mxu0 0.0
      %2700 = vmatmul.mubr.f32.gmra.mxu0 %v2518
      %v2701 = vpop.f32.mrf.mxu0
      %v2702 = vadd.f32 0.0, %v2701
      %v2703 = vpop.f32.mrf.mxu0
      %2704 = vmatprep.mubr.f32.mxu0 0.0
      %2705 = vmatmul.mubr.f32.gmra.mxu0 %v2521
      %v2706 = vpop.f32.mrf.mxu0
      %v2707 = vadd.f32 0.0, %v2706
      %v2708 = vpop.f32.mrf.mxu0
      %2709 = vmatprep.mubr.f32.mxu0 0.0
      %2710 = vmatmul.mubr.f32.gmra.mxu0 %v2524
      %v2711 = vpop.f32.mrf.mxu0
      %v2712 = vadd.f32 0.0, %v2711
      %v2713 = vpop.f32.mrf.mxu0
      %2714 = vmatprep.mubr.f32.mxu0 0.0
      %2715 = vmatmul.mubr.f32.gmra.mxu0 %v2527
      %v2716 = vpop.f32.mrf.mxu0
      %v2717 = vadd.f32 0.0, %v2716
      %v2718 = vpop.f32.mrf.mxu0
      %2719 = vmatprep.mubr.f32.mxu0 0.0
      %2720 = vmatmul.mubr.f32.gmra.mxu0 %v2530
      %v2721 = vpop.f32.mrf.mxu0
      %v2722 = vadd.f32 0.0, %v2721
      %v2723 = vpop.f32.mrf.mxu0
      %2724 = vmatprep.mubr.f32.mxu0 0.0
      %2725 = vmatmul.mubr.f32.gmra.mxu0 %v2533
      %v2726 = vpop.f32.mrf.mxu0
      %v2727 = vadd.f32 0.0, %v2726
      %v2728 = vpop.f32.mrf.mxu0
      %2729 = vmatprep.mubr.f32.mxu0 0.0
      %2730 = vmatmul.mubr.f32.gmra.mxu0 %v2536
      %v2731 = vpop.f32.mrf.mxu0
      %v2732 = vadd.f32 0.0, %v2731
      %v2733 = vpop.f32.mrf.mxu0
      %2734 = vmatprep.mubr.f32.mxu0 0.0
      %2735 = vmatmul.mubr.f32.gmra.mxu0 %v2539
      %v2736 = vpop.f32.mrf.mxu0
      %v2737 = vadd.f32 0.0, %v2736
      %v2738 = vpop.f32.mrf.mxu0
      %2739 = vmatprep.mubr.f32.mxu0 0.0
      %2740 = vmatmul.mubr.f32.gmra.mxu0 %v2542
      %v2741 = vpop.f32.mrf.mxu0
      %v2742 = vadd.f32 0.0, %v2741
      %v2743 = vpop.f32.mrf.mxu0
      %2744 = vmatprep.mubr.f32.mxu0 0.0
      %2745 = vmatmul.mubr.f32.gmra.mxu0 %v2545
      %v2746 = vpop.f32.mrf.mxu0
      %v2747 = vadd.f32 0.0, %v2746
      %v2748 = vpop.f32.mrf.mxu0
      %2749 = vmatprep.mubr.f32.mxu0 0.0
      %2750 = vmatmul.mubr.f32.gmra.mxu0 %v2548
      %v2751 = vpop.f32.mrf.mxu0
      %v2752 = vadd.f32 0.0, %v2751
      %v2753 = vpop.f32.mrf.mxu0
      %2754 = vdwg.mxu0
      %v2755 = vadd.f32 %v2298, %v2617
      %v2756 = vadd.f32 %v2303, %v2622
      %v2757 = vadd.f32 %v2308, %v2627
      %v2758 = vadd.f32 %v2313, %v2632
      %v2759 = vadd.f32 %v2318, %v2637
      %v2760 = vadd.f32 %v2323, %v2642
      %v2761 = vadd.f32 %v2328, %v2647
      %v2762 = vadd.f32 %v2333, %v2652
      %v2763 = vadd.f32 %v2338, %v2657
      %v2764 = vadd.f32 %v2343, %v2662
      %v2765 = vadd.f32 %v2348, %v2667
      %v2766 = vadd.f32 %v2353, %v2672
      %v2767 = vadd.f32 %v2358, %v2677
      %v2768 = vadd.f32 %v2363, %v2682
      %v2769 = vadd.f32 %v2368, %v2687
      %v2770 = vadd.f32 %v2373, %v2692
      %v2771 = vadd.f32 %v2378, %v2697
      %v2772 = vadd.f32 %v2383, %v2702
      %v2773 = vadd.f32 %v2388, %v2707
      %v2774 = vadd.f32 %v2393, %v2712
      %v2775 = vadd.f32 %v2398, %v2717
      %v2776 = vadd.f32 %v2403, %v2722
      %v2777 = vadd.f32 %v2408, %v2727
      %v2778 = vadd.f32 %v2413, %v2732
      %v2779 = vadd.f32 %v2418, %v2737
      %v2780 = vadd.f32 %v2423, %v2742
      %v2781 = vadd.f32 %v2428, %v2747
      %v2782 = vadd.f32 %v2433, %v2752
      %v2783 = vld [vmem:[#allocation2 + $0x11] sm:$0xff]
      %v2784 = vld [vmem:[#allocation2 + $0x19] sm:$0xff]
      %v2785 = vld [vmem:[#allocation2 + $0x21] sm:$0xff]
      %v2786 = vld [vmem:[#allocation2 + $0x29] sm:$0xff]
      %v2787 = vld [vmem:[#allocation2 + $0x31] sm:$0xff]
      %v2788 = vld [vmem:[#allocation2 + $0x39] sm:$0xff]
      %v2789 = vld [vmem:[#allocation2 + $0x41] sm:$0xff]
      %v2790 = vld [vmem:[#allocation2 + $0x49] sm:$0xff]
      %v2791 = vld [vmem:[#allocation2 + $0x51] sm:$0xff]
      %v2792 = vld [vmem:[#allocation2 + $0x59] sm:$0xff]
      %v2793 = vld [vmem:[#allocation2 + $0x61] sm:$0xff]
      %v2794 = vld [vmem:[#allocation2 + $0x69] sm:$0xff]
      %v2795 = vld [vmem:[#allocation2 + $0x71] sm:$0xff]
      %v2796 = vld [vmem:[#allocation2 + $0x79] sm:$0xff]
      %v2797 = vld [vmem:[#allocation2 + $0x81] sm:$0xff]
      %v2798 = vld [vmem:[#allocation2 + $0x89] sm:$0xff]
      %v2799 = vld [vmem:[#allocation2 + $0x91] sm:$0xff]
      %v2800 = vld [vmem:[#allocation2 + $0x99] sm:$0xff]
      %v2801 = vld [vmem:[#allocation2 + $0xa1] sm:$0xff]
      %v2802 = vld [vmem:[#allocation2 + $0xa9] sm:$0xff]
      %v2803 = vld [vmem:[#allocation2 + $0xb1] sm:$0xff]
      %v2804 = vld [vmem:[#allocation2 + $0xb9] sm:$0xff]
      %v2805 = vld [vmem:[#allocation2 + $0xc1] sm:$0xff]
      %v2806 = vld [vmem:[#allocation2 + $0xc9] sm:$0xff]
      %v2807 = vld [vmem:[#allocation2 + $0xd1] sm:$0xff]
      %v2808 = vld [vmem:[#allocation2 + $0xd9] sm:$0xff]
      %v2809 = vld [vmem:[#allocation2 + $0xe1] sm:$0xff]
      %v2810 = vld [vmem:[#allocation2 + $0xe9] sm:$0xff]
      %s2811 = scalar_lea.vmem %s3, 24
      %v2812 = vld [vmem:[%s2811] sm:$0xff]
      %v2814 = vsel %vm1767, %v2783, 0
      %v2817 = vsel %vm1767, %v2784, 0
      %v2820 = vsel %vm1767, %v2785, 0
      %v2823 = vsel %vm1767, %v2786, 0
      %v2826 = vsel %vm1767, %v2787, 0
      %v2829 = vsel %vm1767, %v2788, 0
      %v2832 = vsel %vm1767, %v2789, 0
      %v2835 = vsel %vm1767, %v2790, 0
      %v2838 = vsel %vm1767, %v2791, 0
      %v2841 = vsel %vm1767, %v2792, 0
      %v2844 = vsel %vm1767, %v2793, 0
      %v2847 = vsel %vm1767, %v2794, 0
      %v2850 = vsel %vm1767, %v2795, 0
      %v2853 = vsel %vm1767, %v2796, 0
      %v2856 = vsel %vm1767, %v2797, 0
      %v2859 = vsel %vm1767, %v2798, 0
      %v2862 = vsel %vm1767, %v2799, 0
      %v2865 = vsel %vm1767, %v2800, 0
      %v2868 = vsel %vm1767, %v2801, 0
      %v2871 = vsel %vm1767, %v2802, 0
      %v2874 = vsel %vm1767, %v2803, 0
      %v2877 = vsel %vm1767, %v2804, 0
      %v2880 = vsel %vm1767, %v2805, 0
      %v2883 = vsel %vm1767, %v2806, 0
      %v2886 = vsel %vm1767, %v2807, 0
      %v2889 = vsel %vm1767, %v2808, 0
      %v2892 = vsel %vm1767, %v2809, 0
      %v2895 = vsel %vm1767, %v2810, 0
      %2897 = vmatprep.subr.mxu0 0.0
      %2898 = vmatpush1.msra.mxu0 0.0
      %2899 = vmatprep.subr.mxu0 0.0
      %2900 = vmatpush1.msra.mxu0 0.0
      %2901 = vmatprep.subr.mxu0 0.0
      %2902 = vmatpush1.msra.mxu0 0.0
      %2903 = vmatprep.subr.mxu0 0.0
      %2904 = vmatpush1.msra.mxu0 0.0
      %2905 = vmatprep.subr.mxu0 0.0
      %2906 = vmatpush1.msra.mxu0 0.0
      %2907 = vmatprep.subr.mxu0 0.0
      %2908 = vmatpush1.msra.mxu0 0.0
      %2909 = vmatprep.subr.mxu0 0.0
      %2910 = vmatpush1.msra.mxu0 0.0
      %2911 = vmatprep.subr.mxu0 0.0
      %2912 = vmatpush1.msra.mxu0 0.0
      %2913 = vmatprep.subr.mxu0 0.0
      %2914 = vmatpush1.msra.mxu0 0.0
      %2915 = vmatprep.subr.mxu0 0.0
      %2916 = vmatpush1.msra.mxu0 0.0
      %2917 = vmatprep.subr.mxu0 0.0
      %2918 = vmatpush1.msra.mxu0 0.0
      %2919 = vmatprep.subr.mxu0 0.0
      %2920 = vmatpush1.msra.mxu0 0.0
      %2921 = vmatprep.subr.mxu0 0.0
      %2922 = vmatpush1.msra.mxu0 0.0
      %2923 = vmatprep.subr.mxu0 0.0
      %2924 = vmatpush1.msra.mxu0 0.0
      %2925 = vmatprep.subr.mxu0 0.0
      %2926 = vmatpush1.msra.mxu0 0.0
      %2927 = vmatprep.subr.mxu0 0.0
      %2928 = vmatpush1.msra.mxu0 %v2812
      %2929 = vmatprep.subr.mxu0 0.0
      %2930 = vmatpush2.msra.mxu0 0.0
      %2931 = vmatprep.subr.mxu0 0.0
      %2932 = vmatpush2.msra.mxu0 0.0
      %2933 = vmatprep.subr.mxu0 0.0
      %2934 = vmatpush2.msra.mxu0 0.0
      %2935 = vmatprep.subr.mxu0 0.0
      %2936 = vmatpush2.msra.mxu0 0.0
      %2937 = vmatprep.subr.mxu0 0.0
      %2938 = vmatpush2.msra.mxu0 0.0
      %2939 = vmatprep.subr.mxu0 0.0
      %2940 = vmatpush2.msra.mxu0 0.0
      %2941 = vmatprep.subr.mxu0 0.0
      %2942 = vmatpush2.msra.mxu0 0.0
      %2943 = vmatprep.subr.mxu0 0.0
      %2944 = vmatpush2.msra.mxu0 0.0
      %2945 = vmatprep.subr.mxu0 0.0
      %2946 = vmatpush2.msra.mxu0 0.0
      %2947 = vmatprep.subr.mxu0 0.0
      %2948 = vmatpush2.msra.mxu0 0.0
      %2949 = vmatprep.subr.mxu0 0.0
      %2950 = vmatpush2.msra.mxu0 0.0
      %2951 = vmatprep.subr.mxu0 0.0
      %2952 = vmatpush2.msra.mxu0 0.0
      %2953 = vmatprep.subr.mxu0 0.0
      %2954 = vmatpush2.msra.mxu0 0.0
      %2955 = vmatprep.subr.mxu0 0.0
      %2956 = vmatpush2.msra.mxu0 0.0
      %2957 = vmatprep.subr.mxu0 0.0
      %2958 = vmatpush2.msra.mxu0 0.0
      %2959 = vmatprep.subr.mxu0 0.0
      %2960 = vmatpush2.msra.mxu0 0.0
      %2961 = vmatprep.mubr.f32.mxu0 0.0
      %2962 = vmatmul.mubr.f32.gmra.mxu0 %v2814
      %v2963 = vpop.f32.mrf.mxu0
      %v2964 = vadd.f32 0.0, %v2963
      %v2965 = vpop.f32.mrf.mxu0
      %2966 = vmatprep.mubr.f32.mxu0 0.0
      %2967 = vmatmul.mubr.f32.gmra.mxu0 %v2817
      %v2968 = vpop.f32.mrf.mxu0
      %v2969 = vadd.f32 0.0, %v2968
      %v2970 = vpop.f32.mrf.mxu0
      %2971 = vmatprep.mubr.f32.mxu0 0.0
      %2972 = vmatmul.mubr.f32.gmra.mxu0 %v2820
      %v2973 = vpop.f32.mrf.mxu0
      %v2974 = vadd.f32 0.0, %v2973
      %v2975 = vpop.f32.mrf.mxu0
      %2976 = vmatprep.mubr.f32.mxu0 0.0
      %2977 = vmatmul.mubr.f32.gmra.mxu0 %v2823
      %v2978 = vpop.f32.mrf.mxu0
      %v2979 = vadd.f32 0.0, %v2978
      %v2980 = vpop.f32.mrf.mxu0
      %2981 = vmatprep.mubr.f32.mxu0 0.0
      %2982 = vmatmul.mubr.f32.gmra.mxu0 %v2826
      %v2983 = vpop.f32.mrf.mxu0
      %v2984 = vadd.f32 0.0, %v2983
      %v2985 = vpop.f32.mrf.mxu0
      %2986 = vmatprep.mubr.f32.mxu0 0.0
      %2987 = vmatmul.mubr.f32.gmra.mxu0 %v2829
      %v2988 = vpop.f32.mrf.mxu0
      %v2989 = vadd.f32 0.0, %v2988
      %v2990 = vpop.f32.mrf.mxu0
      %2991 = vmatprep.mubr.f32.mxu0 0.0
      %2992 = vmatmul.mubr.f32.gmra.mxu0 %v2832
      %v2993 = vpop.f32.mrf.mxu0
      %v2994 = vadd.f32 0.0, %v2993
      %v2995 = vpop.f32.mrf.mxu0
      %2996 = vmatprep.mubr.f32.mxu0 0.0
      %2997 = vmatmul.mubr.f32.gmra.mxu0 %v2835
      %v2998 = vpop.f32.mrf.mxu0
      %v2999 = vadd.f32 0.0, %v2998
      %v3000 = vpop.f32.mrf.mxu0
      %3001 = vmatprep.mubr.f32.mxu0 0.0
      %3002 = vmatmul.mubr.f32.gmra.mxu0 %v2838
      %v3003 = vpop.f32.mrf.mxu0
      %v3004 = vadd.f32 0.0, %v3003
      %v3005 = vpop.f32.mrf.mxu0
      %3006 = vmatprep.mubr.f32.mxu0 0.0
      %3007 = vmatmul.mubr.f32.gmra.mxu0 %v2841
      %v3008 = vpop.f32.mrf.mxu0
      %v3009 = vadd.f32 0.0, %v3008
      %v3010 = vpop.f32.mrf.mxu0
      %3011 = vmatprep.mubr.f32.mxu0 0.0
      %3012 = vmatmul.mubr.f32.gmra.mxu0 %v2844
      %v3013 = vpop.f32.mrf.mxu0
      %v3014 = vadd.f32 0.0, %v3013
      %v3015 = vpop.f32.mrf.mxu0
      %3016 = vmatprep.mubr.f32.mxu0 0.0
      %3017 = vmatmul.mubr.f32.gmra.mxu0 %v2847
      %v3018 = vpop.f32.mrf.mxu0
      %v3019 = vadd.f32 0.0, %v3018
      %v3020 = vpop.f32.mrf.mxu0
      %3021 = vmatprep.mubr.f32.mxu0 0.0
      %3022 = vmatmul.mubr.f32.gmra.mxu0 %v2850
      %v3023 = vpop.f32.mrf.mxu0
      %v3024 = vadd.f32 0.0, %v3023
      %v3025 = vpop.f32.mrf.mxu0
      %3026 = vmatprep.mubr.f32.mxu0 0.0
      %3027 = vmatmul.mubr.f32.gmra.mxu0 %v2853
      %v3028 = vpop.f32.mrf.mxu0
      %v3029 = vadd.f32 0.0, %v3028
      %v3030 = vpop.f32.mrf.mxu0
      %3031 = vmatprep.mubr.f32.mxu0 0.0
      %3032 = vmatmul.mubr.f32.gmra.mxu0 %v2856
      %v3033 = vpop.f32.mrf.mxu0
      %v3034 = vadd.f32 0.0, %v3033
      %v3035 = vpop.f32.mrf.mxu0
      %3036 = vmatprep.mubr.f32.mxu0 0.0
      %3037 = vmatmul.mubr.f32.gmra.mxu0 %v2859
      %v3038 = vpop.f32.mrf.mxu0
      %v3039 = vadd.f32 0.0, %v3038
      %v3040 = vpop.f32.mrf.mxu0
      %3041 = vmatprep.mubr.f32.mxu0 0.0
      %3042 = vmatmul.mubr.f32.gmra.mxu0 %v2862
      %v3043 = vpop.f32.mrf.mxu0
      %v3044 = vadd.f32 0.0, %v3043
      %v3045 = vpop.f32.mrf.mxu0
      %3046 = vmatprep.mubr.f32.mxu0 0.0
      %3047 = vmatmul.mubr.f32.gmra.mxu0 %v2865
      %v3048 = vpop.f32.mrf.mxu0
      %v3049 = vadd.f32 0.0, %v3048
      %v3050 = vpop.f32.mrf.mxu0
      %3051 = vmatprep.mubr.f32.mxu0 0.0
      %3052 = vmatmul.mubr.f32.gmra.mxu0 %v2868
      %v3053 = vpop.f32.mrf.mxu0
      %v3054 = vadd.f32 0.0, %v3053
      %v3055 = vpop.f32.mrf.mxu0
      %3056 = vmatprep.mubr.f32.mxu0 0.0
      %3057 = vmatmul.mubr.f32.gmra.mxu0 %v2871
      %v3058 = vpop.f32.mrf.mxu0
      %v3059 = vadd.f32 0.0, %v3058
      %v3060 = vpop.f32.mrf.mxu0
      %3061 = vmatprep.mubr.f32.mxu0 0.0
      %3062 = vmatmul.mubr.f32.gmra.mxu0 %v2874
      %v3063 = vpop.f32.mrf.mxu0
      %v3064 = vadd.f32 0.0, %v3063
      %v3065 = vpop.f32.mrf.mxu0
      %3066 = vmatprep.mubr.f32.mxu0 0.0
      %3067 = vmatmul.mubr.f32.gmra.mxu0 %v2877
      %v3068 = vpop.f32.mrf.mxu0
      %v3069 = vadd.f32 0.0, %v3068
      %v3070 = vpop.f32.mrf.mxu0
      %3071 = vmatprep.mubr.f32.mxu0 0.0
      %3072 = vmatmul.mubr.f32.gmra.mxu0 %v2880
      %v3073 = vpop.f32.mrf.mxu0
      %v3074 = vadd.f32 0.0, %v3073
      %v3075 = vpop.f32.mrf.mxu0
      %3076 = vmatprep.mubr.f32.mxu0 0.0
      %3077 = vmatmul.mubr.f32.gmra.mxu0 %v2883
      %v3078 = vpop.f32.mrf.mxu0
      %v3079 = vadd.f32 0.0, %v3078
      %v3080 = vpop.f32.mrf.mxu0
      %3081 = vmatprep.mubr.f32.mxu0 0.0
      %3082 = vmatmul.mubr.f32.gmra.mxu0 %v2886
      %v3083 = vpop.f32.mrf.mxu0
      %v3084 = vadd.f32 0.0, %v3083
      %v3085 = vpop.f32.mrf.mxu0
      %3086 = vmatprep.mubr.f32.mxu0 0.0
      %3087 = vmatmul.mubr.f32.gmra.mxu0 %v2889
      %v3088 = vpop.f32.mrf.mxu0
      %v3089 = vadd.f32 0.0, %v3088
      %v3090 = vpop.f32.mrf.mxu0
      %3091 = vmatprep.mubr.f32.mxu0 0.0
      %3092 = vmatmul.mubr.f32.gmra.mxu0 %v2892
      %v3093 = vpop.f32.mrf.mxu0
      %v3094 = vadd.f32 0.0, %v3093
      %v3095 = vpop.f32.mrf.mxu0
      %3096 = vmatprep.mubr.f32.mxu0 0.0
      %3097 = vmatmul.mubr.f32.gmra.mxu0 %v2895
      %v3098 = vpop.f32.mrf.mxu0
      %v3099 = vadd.f32 0.0, %v3098
      %v3100 = vpop.f32.mrf.mxu0
      %3101 = vdwg.mxu0
      %v3102 = vadd.f32 %v2755, %v2964
      %v3103 = vadd.f32 %v2756, %v2969
      %v3104 = vadd.f32 %v2757, %v2974
      %v3105 = vadd.f32 %v2758, %v2979
      %v3106 = vadd.f32 %v2759, %v2984
      %v3107 = vadd.f32 %v2760, %v2989
      %v3108 = vadd.f32 %v2761, %v2994
      %v3109 = vadd.f32 %v2762, %v2999
      %v3110 = vadd.f32 %v2763, %v3004
      %v3111 = vadd.f32 %v2764, %v3009
      %v3112 = vadd.f32 %v2765, %v3014
      %v3113 = vadd.f32 %v2766, %v3019
      %v3114 = vadd.f32 %v2767, %v3024
      %v3115 = vadd.f32 %v2768, %v3029
      %v3116 = vadd.f32 %v2769, %v3034
      %v3117 = vadd.f32 %v2770, %v3039
      %v3118 = vadd.f32 %v2771, %v3044
      %v3119 = vadd.f32 %v2772, %v3049
      %v3120 = vadd.f32 %v2773, %v3054
      %v3121 = vadd.f32 %v2774, %v3059
      %v3122 = vadd.f32 %v2775, %v3064
      %v3123 = vadd.f32 %v2776, %v3069
      %v3124 = vadd.f32 %v2777, %v3074
      %v3125 = vadd.f32 %v2778, %v3079
      %v3126 = vadd.f32 %v2779, %v3084
      %v3127 = vadd.f32 %v2780, %v3089
      %v3128 = vadd.f32 %v2781, %v3094
      %v3129 = vadd.f32 %v2782, %v3099
      %v3130 = vld [vmem:[%s4] sm:$0x1]
      %v3132 = vlaneseq
      %v3133 = vshrl.u32 %v3132, 7
      %v3134 = vsub.s32 0, %v3133
      %v3135 = vrot.slane %v3130, %v3134
      %v3137 = vadd.f32 %v3102, %v3135
      %v3138 = vadd.f32 %v3103, %v3135
      %v3139 = vadd.f32 %v3104, %v3135
      %v3140 = vadd.f32 %v3105, %v3135
      %v3141 = vadd.f32 %v3106, %v3135
      %v3142 = vadd.f32 %v3107, %v3135
      %v3143 = vadd.f32 %v3108, %v3135
      %v3144 = vadd.f32 %v3109, %v3135
      %v3145 = vadd.f32 %v3110, %v3135
      %v3146 = vadd.f32 %v3111, %v3135
      %v3147 = vadd.f32 %v3112, %v3135
      %v3148 = vadd.f32 %v3113, %v3135
      %v3149 = vadd.f32 %v3114, %v3135
      %v3150 = vadd.f32 %v3115, %v3135
      %v3151 = vadd.f32 %v3116, %v3135
      %v3152 = vadd.f32 %v3117, %v3135
      %v3153 = vadd.f32 %v3118, %v3135
      %v3154 = vadd.f32 %v3119, %v3135
      %v3155 = vadd.f32 %v3120, %v3135
      %v3156 = vadd.f32 %v3121, %v3135
      %v3157 = vadd.f32 %v3122, %v3135
      %v3158 = vadd.f32 %v3123, %v3135
      %v3159 = vadd.f32 %v3124, %v3135
      %v3160 = vadd.f32 %v3125, %v3135
      %v3161 = vadd.f32 %v3126, %v3135
      %v3162 = vadd.f32 %v3127, %v3135
      %v3163 = vadd.f32 %v3128, %v3135
      %v3164 = vadd.f32 %v3129, %v3135
      %v3165 = vmax.f32 %v3137, 0.0
      %v3166 = vmax.f32 %v3138, 0.0
      %v3167 = vmax.f32 %v3139, 0.0
      %v3168 = vmax.f32 %v3140, 0.0
      %v3169 = vmax.f32 %v3141, 0.0
      %v3170 = vmax.f32 %v3142, 0.0
      %v3171 = vmax.f32 %v3143, 0.0
      %v3172 = vmax.f32 %v3144, 0.0
      %v3173 = vmax.f32 %v3145, 0.0
      %v3174 = vmax.f32 %v3146, 0.0
      %v3175 = vmax.f32 %v3147, 0.0
      %v3176 = vmax.f32 %v3148, 0.0
      %v3177 = vmax.f32 %v3149, 0.0
      %v3178 = vmax.f32 %v3150, 0.0
      %v3179 = vmax.f32 %v3151, 0.0
      %v3180 = vmax.f32 %v3152, 0.0
      %v3181 = vmax.f32 %v3153, 0.0
      %v3182 = vmax.f32 %v3154, 0.0
      %v3183 = vmax.f32 %v3155, 0.0
      %v3184 = vmax.f32 %v3156, 0.0
      %v3185 = vmax.f32 %v3157, 0.0
      %v3186 = vmax.f32 %v3158, 0.0
      %v3187 = vmax.f32 %v3159, 0.0
      %v3188 = vmax.f32 %v3160, 0.0
      %v3189 = vmax.f32 %v3161, 0.0
      %v3190 = vmax.f32 %v3162, 0.0
      %v3191 = vmax.f32 %v3163, 0.0
      %v3192 = vmax.f32 %v3164, 0.0
      %v3193 = vld [vmem:[%s5] sm:$0xff]
      %v3194 = vld [vmem:[%s5 + $0x8] sm:$0xff]
      %v3195 = vld [vmem:[%s5 + $0x10] sm:$0xff]
      %v3196 = vld [vmem:[%s5 + $0x18] sm:$0xff]
      %v3197 = vld [vmem:[%s5 + $0x20] sm:$0xff]
      %v3198 = vld [vmem:[%s5 + $0x28] sm:$0xff]
      %v3199 = vld [vmem:[%s5 + $0x30] sm:$0xff]
      %v3200 = vld [vmem:[%s5 + $0x38] sm:$0xff]
      %v3201 = vld [vmem:[%s5 + $0x40] sm:$0xff]
      %v3202 = vld [vmem:[%s5 + $0x48] sm:$0xff]
      %v3203 = vld [vmem:[%s5 + $0x50] sm:$0xff]
      %v3204 = vld [vmem:[%s5 + $0x58] sm:$0xff]
      %v3205 = vld [vmem:[%s5 + $0x60] sm:$0xff]
      %v3206 = vld [vmem:[%s5 + $0x68] sm:$0xff]
      %v3207 = vld [vmem:[%s5 + $0x70] sm:$0xff]
      %v3208 = vld [vmem:[%s5 + $0x78] sm:$0xff]
      %v3209 = vld [vmem:[%s5 + $0x80] sm:$0xff]
      %v3210 = vld [vmem:[%s5 + $0x88] sm:$0xff]
      %v3211 = vld [vmem:[%s5 + $0x90] sm:$0xff]
      %v3212 = vld [vmem:[%s5 + $0x98] sm:$0xff]
      %v3213 = vld [vmem:[%s5 + $0xa0] sm:$0xff]
      %v3214 = vld [vmem:[%s5 + $0xa8] sm:$0xff]
      %v3215 = vld [vmem:[%s5 + $0xb0] sm:$0xff]
      %v3216 = vld [vmem:[%s5 + $0xb8] sm:$0xff]
      %v3217 = vld [vmem:[%s5 + $0xc0] sm:$0xff]
      %v3218 = vld [vmem:[%s5 + $0xc8] sm:$0xff]
      %v3219 = vld [vmem:[%s5 + $0xd0] sm:$0xff]
      %v3220 = vld [vmem:[%s5 + $0xd8] sm:$0xff]
      %v3221 = vld [vmem:[%s5 + $0xe0] sm:$0xff]
      %v3222 = vld [vmem:[%s5 + $0xe8] sm:$0xff]
      %v3223 = vld [vmem:[%s5 + $0xf0] sm:$0xff]
      %v3224 = vld [vmem:[%s5 + $0xf8] sm:$0xff]
      %v3225 = vld [vmem:[%s5 + $0x100] sm:$0xff]
      %v3226 = vld [vmem:[%s5 + $0x108] sm:$0xff]
      %v3227 = vld [vmem:[%s5 + $0x110] sm:$0xff]
      %v3228 = vld [vmem:[%s5 + $0x118] sm:$0xff]
      %v3229 = vld [vmem:[%s5 + $0x120] sm:$0xff]
      %v3230 = vld [vmem:[%s5 + $0x128] sm:$0xff]
      %v3231 = vld [vmem:[%s5 + $0x130] sm:$0xff]
      %v3232 = vld [vmem:[%s5 + $0x138] sm:$0xff]
      %v3233 = vld [vmem:[%s5 + $0x140] sm:$0xff]
      %v3234 = vld [vmem:[%s5 + $0x148] sm:$0xff]
      %v3235 = vld [vmem:[%s5 + $0x150] sm:$0xff]
      %v3236 = vld [vmem:[%s5 + $0x158] sm:$0xff]
      %v3237 = vld [vmem:[%s5 + $0x160] sm:$0xff]
      %v3238 = vld [vmem:[%s5 + $0x168] sm:$0xff]
      %v3239 = vld [vmem:[%s5 + $0x170] sm:$0xff]
      %v3240 = vld [vmem:[%s5 + $0x178] sm:$0xff]
      %v3241 = vld [vmem:[%s5 + $0x180] sm:$0xff]
      %v3242 = vld [vmem:[%s5 + $0x188] sm:$0xff]
      %v3243 = vld [vmem:[%s5 + $0x190] sm:$0xff]
      %v3244 = vld [vmem:[%s5 + $0x198] sm:$0xff]
      %v3245 = vld [vmem:[%s5 + $0x1a0] sm:$0xff]
      %v3246 = vld [vmem:[%s5 + $0x1a8] sm:$0xff]
      %v3247 = vld [vmem:[%s5 + $0x1b0] sm:$0xff]
      %v3248 = vld [vmem:[%s5 + $0x1b8] sm:$0xff]
      %v3249 = vld [vmem:[%s5 + $0x1c0] sm:$0xff]
      %v3250 = vld [vmem:[%s5 + $0x1c8] sm:$0xff]
      %v3251 = vld [vmem:[%s5 + $0x1d0] sm:$0xff]
      %v3252 = vld [vmem:[%s5 + $0x1d8] sm:$0xff]
      %v3253 = vld [vmem:[%s5 + $0x1e0] sm:$0xff]
      %v3254 = vld [vmem:[%s5 + $0x1e8] sm:$0xff]
      %v3255 = vld [vmem:[%s5 + $0x1f0] sm:$0xff]
      %v3256 = vld [vmem:[%s5 + $0x1f8] sm:$0xff]
      %v3257 = vld [vmem:[%s5 + $0x200] sm:$0xff]
      %v3258 = vld [vmem:[%s5 + $0x208] sm:$0xff]
      %v3259 = vld [vmem:[%s5 + $0x210] sm:$0xff]
      %v3260 = vld [vmem:[%s5 + $0x218] sm:$0xff]
      %v3261 = vld [vmem:[%s5 + $0x220] sm:$0xff]
      %v3262 = vld [vmem:[%s5 + $0x228] sm:$0xff]
      %v3263 = vld [vmem:[%s5 + $0x230] sm:$0xff]
      %v3264 = vld [vmem:[%s5 + $0x238] sm:$0xff]
      %v3265 = vld [vmem:[%s5 + $0x240] sm:$0xff]
      %v3266 = vld [vmem:[%s5 + $0x248] sm:$0xff]
      %v3267 = vld [vmem:[%s5 + $0x250] sm:$0xff]
      %v3268 = vld [vmem:[%s5 + $0x258] sm:$0xff]
      %v3269 = vld [vmem:[%s5 + $0x260] sm:$0xff]
      %v3270 = vld [vmem:[%s5 + $0x268] sm:$0xff]
      %v3271 = vld [vmem:[%s5 + $0x270] sm:$0xff]
      %v3272 = vld [vmem:[%s5 + $0x278] sm:$0xff]
      %v3273 = vld [vmem:[%s5 + $0x280] sm:$0xff]
      %v3274 = vld [vmem:[%s5 + $0x288] sm:$0xff]
      %v3275 = vld [vmem:[%s5 + $0x290] sm:$0xff]
      %v3276 = vld [vmem:[%s5 + $0x298] sm:$0xff]
      %v3277 = vld [vmem:[%s5 + $0x2a0] sm:$0xff]
      %v3278 = vld [vmem:[%s5 + $0x2a8] sm:$0xff]
      %v3279 = vld [vmem:[%s5 + $0x2b0] sm:$0xff]
      %v3280 = vld [vmem:[%s5 + $0x2b8] sm:$0xff]
      %v3281 = vld [vmem:[%s5 + $0x2c0] sm:$0xff]
      %v3282 = vld [vmem:[%s5 + $0x2c8] sm:$0xff]
      %v3283 = vld [vmem:[%s5 + $0x2d0] sm:$0xff]
      %v3284 = vld [vmem:[%s5 + $0x2d8] sm:$0xff]
      %v3285 = vld [vmem:[%s5 + $0x2e0] sm:$0xff]
      %v3286 = vld [vmem:[%s5 + $0x2e8] sm:$0xff]
      %v3287 = vld [vmem:[%s5 + $0x2f0] sm:$0xff]
      %v3288 = vld [vmem:[%s5 + $0x2f8] sm:$0xff]
      %v3289 = vld [vmem:[%s5 + $0x300] sm:$0xff]
      %v3290 = vld [vmem:[%s5 + $0x308] sm:$0xff]
      %v3291 = vld [vmem:[%s5 + $0x310] sm:$0xff]
      %v3292 = vld [vmem:[%s5 + $0x318] sm:$0xff]
      %v3293 = vld [vmem:[%s5 + $0x320] sm:$0xff]
      %v3294 = vld [vmem:[%s5 + $0x328] sm:$0xff]
      %v3295 = vld [vmem:[%s5 + $0x330] sm:$0xff]
      %v3296 = vld [vmem:[%s5 + $0x338] sm:$0xff]
      %v3297 = vld [vmem:[%s5 + $0x340] sm:$0xff]
      %v3298 = vld [vmem:[%s5 + $0x348] sm:$0xff]
      %v3299 = vld [vmem:[%s5 + $0x350] sm:$0xff]
      %v3300 = vld [vmem:[%s5 + $0x358] sm:$0xff]
      %v3301 = vld [vmem:[%s5 + $0x360] sm:$0xff]
      %v3302 = vld [vmem:[%s5 + $0x368] sm:$0xff]
      %v3303 = vld [vmem:[%s5 + $0x370] sm:$0xff]
      %v3304 = vld [vmem:[%s5 + $0x378] sm:$0xff]
      %v3305 = vld [vmem:[%s5 + $0x380] sm:$0xff]
      %v3306 = vld [vmem:[%s5 + $0x388] sm:$0xff]
      %v3307 = vld [vmem:[%s5 + $0x390] sm:$0xff]
      %v3308 = vld [vmem:[%s5 + $0x398] sm:$0xff]
      %v3309 = vld [vmem:[%s5 + $0x3a0] sm:$0xff]
      %v3310 = vld [vmem:[%s5 + $0x3a8] sm:$0xff]
      %v3311 = vld [vmem:[%s5 + $0x3b0] sm:$0xff]
      %v3312 = vld [vmem:[%s5 + $0x3b8] sm:$0xff]
      %v3313 = vld [vmem:[%s5 + $0x3c0] sm:$0xff]
      %v3314 = vld [vmem:[%s5 + $0x3c8] sm:$0xff]
      %v3315 = vld [vmem:[%s5 + $0x3d0] sm:$0xff]
      %v3316 = vld [vmem:[%s5 + $0x3d8] sm:$0xff]
      %v3317 = vld [vmem:[%s5 + $0x3e0] sm:$0xff]
      %v3318 = vld [vmem:[%s5 + $0x3e8] sm:$0xff]
      %v3319 = vld [vmem:[%s5 + $0x3f0] sm:$0xff]
      %v3320 = vld [vmem:[%s5 + $0x3f8] sm:$0xff]
      %vm3321 = vcmask 785408
      %v3323 = vsel %vm3321, %v3194, 0
      %v3326 = vsel %vm3321, %v3196, 0
      %v3329 = vsel %vm3321, %v3198, 0
      %v3332 = vsel %vm3321, %v3200, 0
      %v3335 = vsel %vm3321, %v3202, 0
      %v3338 = vsel %vm3321, %v3204, 0
      %v3341 = vsel %vm3321, %v3206, 0
      %v3344 = vsel %vm3321, %v3208, 0
      %v3347 = vsel %vm3321, %v3210, 0
      %v3350 = vsel %vm3321, %v3212, 0
      %v3353 = vsel %vm3321, %v3214, 0
      %v3356 = vsel %vm3321, %v3216, 0
      %v3359 = vsel %vm3321, %v3218, 0
      %v3362 = vsel %vm3321, %v3220, 0
      %v3365 = vsel %vm3321, %v3222, 0
      %v3368 = vsel %vm3321, %v3224, 0
      %v3371 = vsel %vm3321, %v3226, 0
      %v3374 = vsel %vm3321, %v3228, 0
      %v3377 = vsel %vm3321, %v3230, 0
      %v3380 = vsel %vm3321, %v3232, 0
      %v3383 = vsel %vm3321, %v3234, 0
      %v3386 = vsel %vm3321, %v3236, 0
      %v3389 = vsel %vm3321, %v3238, 0
      %v3392 = vsel %vm3321, %v3240, 0
      %v3395 = vsel %vm3321, %v3242, 0
      %v3398 = vsel %vm3321, %v3244, 0
      %v3401 = vsel %vm3321, %v3246, 0
      %v3404 = vsel %vm3321, %v3248, 0
      %v3407 = vsel %vm3321, %v3250, 0
      %v3410 = vsel %vm3321, %v3252, 0
      %v3413 = vsel %vm3321, %v3254, 0
      %v3416 = vsel %vm3321, %v3256, 0
      %v3419 = vsel %vm3321, %v3258, 0
      %v3422 = vsel %vm3321, %v3260, 0
      %v3425 = vsel %vm3321, %v3262, 0
      %v3428 = vsel %vm3321, %v3264, 0
      %v3431 = vsel %vm3321, %v3266, 0
      %v3434 = vsel %vm3321, %v3268, 0
      %v3437 = vsel %vm3321, %v3270, 0
      %v3440 = vsel %vm3321, %v3272, 0
      %v3443 = vsel %vm3321, %v3274, 0
      %v3446 = vsel %vm3321, %v3276, 0
      %v3449 = vsel %vm3321, %v3278, 0
      %v3452 = vsel %vm3321, %v3280, 0
      %v3455 = vsel %vm3321, %v3282, 0
      %v3458 = vsel %vm3321, %v3284, 0
      %v3461 = vsel %vm3321, %v3286, 0
      %v3464 = vsel %vm3321, %v3288, 0
      %v3467 = vsel %vm3321, %v3290, 0
      %v3470 = vsel %vm3321, %v3292, 0
      %v3473 = vsel %vm3321, %v3294, 0
      %v3476 = vsel %vm3321, %v3296, 0
      %v3479 = vsel %vm3321, %v3298, 0
      %v3482 = vsel %vm3321, %v3300, 0
      %v3485 = vsel %vm3321, %v3302, 0
      %v3488 = vsel %vm3321, %v3304, 0
      %v3491 = vsel %vm3321, %v3306, 0
      %v3494 = vsel %vm3321, %v3308, 0
      %v3497 = vsel %vm3321, %v3310, 0
      %v3500 = vsel %vm3321, %v3312, 0
      %v3503 = vsel %vm3321, %v3314, 0
      %v3506 = vsel %vm3321, %v3316, 0
      %v3509 = vsel %vm3321, %v3318, 0
      %v3512 = vsel %vm3321, %v3320, 0
      %3514 = vmatprep.subr.mxu0 0.0
      %3515 = vmatpush1.msra.mxu0 %v3180
      %3516 = vmatprep.subr.mxu0 0.0
      %3517 = vmatpush1.msra.mxu0 %v3179
      %3518 = vmatprep.subr.mxu0 0.0
      %3519 = vmatpush1.msra.mxu0 %v3178
      %3520 = vmatprep.subr.mxu0 0.0
      %3521 = vmatpush1.msra.mxu0 %v3177
      %3522 = vmatprep.subr.mxu0 0.0
      %3523 = vmatpush1.msra.mxu0 %v3176
      %3524 = vmatprep.subr.mxu0 0.0
      %3525 = vmatpush1.msra.mxu0 %v3175
      %3526 = vmatprep.subr.mxu0 0.0
      %3527 = vmatpush1.msra.mxu0 %v3174
      %3528 = vmatprep.subr.mxu0 0.0
      %3529 = vmatpush1.msra.mxu0 %v3173
      %3530 = vmatprep.subr.mxu0 0.0
      %3531 = vmatpush1.msra.mxu0 %v3172
      %3532 = vmatprep.subr.mxu0 0.0
      %3533 = vmatpush1.msra.mxu0 %v3171
      %3534 = vmatprep.subr.mxu0 0.0
      %3535 = vmatpush1.msra.mxu0 %v3170
      %3536 = vmatprep.subr.mxu0 0.0
      %3537 = vmatpush1.msra.mxu0 %v3169
      %3538 = vmatprep.subr.mxu0 0.0
      %3539 = vmatpush1.msra.mxu0 %v3168
      %3540 = vmatprep.subr.mxu0 0.0
      %3541 = vmatpush1.msra.mxu0 %v3167
      %3542 = vmatprep.subr.mxu0 0.0
      %3543 = vmatpush1.msra.mxu0 %v3166
      %3544 = vmatprep.subr.mxu0 0.0
      %3545 = vmatpush1.msra.mxu0 %v3165
      %3546 = vmatprep.subr.mxu0 0.0
      %3547 = vmatpush2.msra.mxu0 0.0
      %3548 = vmatprep.subr.mxu0 0.0
      %3549 = vmatpush2.msra.mxu0 0.0
      %3550 = vmatprep.subr.mxu0 0.0
      %3551 = vmatpush2.msra.mxu0 0.0
      %3552 = vmatprep.subr.mxu0 0.0
      %3553 = vmatpush2.msra.mxu0 0.0
      %3554 = vmatprep.subr.mxu0 0.0
      %3555 = vmatpush2.msra.mxu0 %v3192
      %3556 = vmatprep.subr.mxu0 0.0
      %3557 = vmatpush2.msra.mxu0 %v3191
      %3558 = vmatprep.subr.mxu0 0.0
      %3559 = vmatpush2.msra.mxu0 %v3190
      %3560 = vmatprep.subr.mxu0 0.0
      %3561 = vmatpush2.msra.mxu0 %v3189
      %3562 = vmatprep.subr.mxu0 0.0
      %3563 = vmatpush2.msra.mxu0 %v3188
      %3564 = vmatprep.subr.mxu0 0.0
      %3565 = vmatpush2.msra.mxu0 %v3187
      %3566 = vmatprep.subr.mxu0 0.0
      %3567 = vmatpush2.msra.mxu0 %v3186
      %3568 = vmatprep.subr.mxu0 0.0
      %3569 = vmatpush2.msra.mxu0 %v3185
      %3570 = vmatprep.subr.mxu0 0.0
      %3571 = vmatpush2.msra.mxu0 %v3184
      %3572 = vmatprep.subr.mxu0 0.0
      %3573 = vmatpush2.msra.mxu0 %v3183
      %3574 = vmatprep.subr.mxu0 0.0
      %3575 = vmatpush2.msra.mxu0 %v3182
      %3576 = vmatprep.subr.mxu0 0.0
      %3577 = vmatpush2.msra.mxu0 %v3181
      %3578 = vmatprep.mubr.f32.mxu0 %v3323
      %3579 = vmatmul.mubr.f32.gmra.mxu0 %v3193
      %v3580 = vpop.f32.mrf.mxu0
      %v3581 = vadd.f32 0.0, %v3580
      %v3582 = vpop.f32.mrf.mxu0
      %3583 = vmatprep.mubr.f32.mxu0 %v3326
      %3584 = vmatmul.mubr.f32.gmra.mxu0 %v3195
      %v3585 = vpop.f32.mrf.mxu0
      %v3586 = vadd.f32 0.0, %v3585
      %v3587 = vpop.f32.mrf.mxu0
      %3588 = vmatprep.mubr.f32.mxu0 %v3329
      %3589 = vmatmul.mubr.f32.gmra.mxu0 %v3197
      %v3590 = vpop.f32.mrf.mxu0
      %v3591 = vadd.f32 0.0, %v3590
      %v3592 = vpop.f32.mrf.mxu0
      %3593 = vmatprep.mubr.f32.mxu0 %v3332
      %3594 = vmatmul.mubr.f32.gmra.mxu0 %v3199
      %v3595 = vpop.f32.mrf.mxu0
      %v3596 = vadd.f32 0.0, %v3595
      %v3597 = vpop.f32.mrf.mxu0
      %3598 = vmatprep.mubr.f32.mxu0 %v3335
      %3599 = vmatmul.mubr.f32.gmra.mxu0 %v3201
      %v3600 = vpop.f32.mrf.mxu0
      %v3601 = vadd.f32 0.0, %v3600
      %v3602 = vpop.f32.mrf.mxu0
      %3603 = vmatprep.mubr.f32.mxu0 %v3338
      %3604 = vmatmul.mubr.f32.gmra.mxu0 %v3203
      %v3605 = vpop.f32.mrf.mxu0
      %v3606 = vadd.f32 0.0, %v3605
      %v3607 = vpop.f32.mrf.mxu0
      %3608 = vmatprep.mubr.f32.mxu0 %v3341
      %3609 = vmatmul.mubr.f32.gmra.mxu0 %v3205
      %v3610 = vpop.f32.mrf.mxu0
      %v3611 = vadd.f32 0.0, %v3610
      %v3612 = vpop.f32.mrf.mxu0
      %3613 = vmatprep.mubr.f32.mxu0 %v3344
      %3614 = vmatmul.mubr.f32.gmra.mxu0 %v3207
      %v3615 = vpop.f32.mrf.mxu0
      %v3616 = vadd.f32 0.0, %v3615
      %v3617 = vpop.f32.mrf.mxu0
      %3618 = vmatprep.mubr.f32.mxu0 %v3347
      %3619 = vmatmul.mubr.f32.gmra.mxu0 %v3209
      %v3620 = vpop.f32.mrf.mxu0
      %v3621 = vadd.f32 0.0, %v3620
      %v3622 = vpop.f32.mrf.mxu0
      %3623 = vmatprep.mubr.f32.mxu0 %v3350
      %3624 = vmatmul.mubr.f32.gmra.mxu0 %v3211
      %v3625 = vpop.f32.mrf.mxu0
      %v3626 = vadd.f32 0.0, %v3625
      %v3627 = vpop.f32.mrf.mxu0
      %3628 = vmatprep.mubr.f32.mxu0 %v3353
      %3629 = vmatmul.mubr.f32.gmra.mxu0 %v3213
      %v3630 = vpop.f32.mrf.mxu0
      %v3631 = vadd.f32 0.0, %v3630
      %v3632 = vpop.f32.mrf.mxu0
      %3633 = vmatprep.mubr.f32.mxu0 %v3356
      %3634 = vmatmul.mubr.f32.gmra.mxu0 %v3215
      %v3635 = vpop.f32.mrf.mxu0
      %v3636 = vadd.f32 0.0, %v3635
      %v3637 = vpop.f32.mrf.mxu0
      %3638 = vmatprep.mubr.f32.mxu0 %v3359
      %3639 = vmatmul.mubr.f32.gmra.mxu0 %v3217
      %v3640 = vpop.f32.mrf.mxu0
      %v3641 = vadd.f32 0.0, %v3640
      %v3642 = vpop.f32.mrf.mxu0
      %3643 = vmatprep.mubr.f32.mxu0 %v3362
      %3644 = vmatmul.mubr.f32.gmra.mxu0 %v3219
      %v3645 = vpop.f32.mrf.mxu0
      %v3646 = vadd.f32 0.0, %v3645
      %v3647 = vpop.f32.mrf.mxu0
      %3648 = vmatprep.mubr.f32.mxu0 %v3365
      %3649 = vmatmul.mubr.f32.gmra.mxu0 %v3221
      %v3650 = vpop.f32.mrf.mxu0
      %v3651 = vadd.f32 0.0, %v3650
      %v3652 = vpop.f32.mrf.mxu0
      %3653 = vmatprep.mubr.f32.mxu0 %v3368
      %3654 = vmatmul.mubr.f32.gmra.mxu0 %v3223
      %v3655 = vpop.f32.mrf.mxu0
      %v3656 = vadd.f32 0.0, %v3655
      %v3657 = vpop.f32.mrf.mxu0
      %3658 = vmatprep.mubr.f32.mxu0 %v3371
      %3659 = vmatmul.mubr.f32.gmra.mxu0 %v3225
      %v3660 = vpop.f32.mrf.mxu0
      %v3661 = vadd.f32 0.0, %v3660
      %v3662 = vpop.f32.mrf.mxu0
      %3663 = vmatprep.mubr.f32.mxu0 %v3374
      %3664 = vmatmul.mubr.f32.gmra.mxu0 %v3227
      %v3665 = vpop.f32.mrf.mxu0
      %v3666 = vadd.f32 0.0, %v3665
      %v3667 = vpop.f32.mrf.mxu0
      %3668 = vmatprep.mubr.f32.mxu0 %v3377
      %3669 = vmatmul.mubr.f32.gmra.mxu0 %v3229
      %v3670 = vpop.f32.mrf.mxu0
      %v3671 = vadd.f32 0.0, %v3670
      %v3672 = vpop.f32.mrf.mxu0
      %3673 = vmatprep.mubr.f32.mxu0 %v3380
      %3674 = vmatmul.mubr.f32.gmra.mxu0 %v3231
      %v3675 = vpop.f32.mrf.mxu0
      %v3676 = vadd.f32 0.0, %v3675
      %v3677 = vpop.f32.mrf.mxu0
      %3678 = vmatprep.mubr.f32.mxu0 %v3383
      %3679 = vmatmul.mubr.f32.gmra.mxu0 %v3233
      %v3680 = vpop.f32.mrf.mxu0
      %v3681 = vadd.f32 0.0, %v3680
      %v3682 = vpop.f32.mrf.mxu0
      %3683 = vmatprep.mubr.f32.mxu0 %v3386
      %3684 = vmatmul.mubr.f32.gmra.mxu0 %v3235
      %v3685 = vpop.f32.mrf.mxu0
      %v3686 = vadd.f32 0.0, %v3685
      %v3687 = vpop.f32.mrf.mxu0
      %3688 = vmatprep.mubr.f32.mxu0 %v3389
      %3689 = vmatmul.mubr.f32.gmra.mxu0 %v3237
      %v3690 = vpop.f32.mrf.mxu0
      %v3691 = vadd.f32 0.0, %v3690
      %v3692 = vpop.f32.mrf.mxu0
      %3693 = vmatprep.mubr.f32.mxu0 %v3392
      %3694 = vmatmul.mubr.f32.gmra.mxu0 %v3239
      %v3695 = vpop.f32.mrf.mxu0
      %v3696 = vadd.f32 0.0, %v3695
      %v3697 = vpop.f32.mrf.mxu0
      %3698 = vmatprep.mubr.f32.mxu0 %v3395
      %3699 = vmatmul.mubr.f32.gmra.mxu0 %v3241
      %v3700 = vpop.f32.mrf.mxu0
      %v3701 = vadd.f32 0.0, %v3700
      %v3702 = vpop.f32.mrf.mxu0
      %3703 = vmatprep.mubr.f32.mxu0 %v3398
      %3704 = vmatmul.mubr.f32.gmra.mxu0 %v3243
      %v3705 = vpop.f32.mrf.mxu0
      %v3706 = vadd.f32 0.0, %v3705
      %v3707 = vpop.f32.mrf.mxu0
      %3708 = vmatprep.mubr.f32.mxu0 %v3401
      %3709 = vmatmul.mubr.f32.gmra.mxu0 %v3245
      %v3710 = vpop.f32.mrf.mxu0
      %v3711 = vadd.f32 0.0, %v3710
      %v3712 = vpop.f32.mrf.mxu0
      %3713 = vmatprep.mubr.f32.mxu0 %v3404
      %3714 = vmatmul.mubr.f32.gmra.mxu0 %v3247
      %v3715 = vpop.f32.mrf.mxu0
      %v3716 = vadd.f32 0.0, %v3715
      %v3717 = vpop.f32.mrf.mxu0
      %3718 = vmatprep.mubr.f32.mxu0 %v3407
      %3719 = vmatmul.mubr.f32.gmra.mxu0 %v3249
      %v3720 = vpop.f32.mrf.mxu0
      %v3721 = vadd.f32 0.0, %v3720
      %v3722 = vpop.f32.mrf.mxu0
      %3723 = vmatprep.mubr.f32.mxu0 %v3410
      %3724 = vmatmul.mubr.f32.gmra.mxu0 %v3251
      %v3725 = vpop.f32.mrf.mxu0
      %v3726 = vadd.f32 0.0, %v3725
      %v3727 = vpop.f32.mrf.mxu0
      %3728 = vmatprep.mubr.f32.mxu0 %v3413
      %3729 = vmatmul.mubr.f32.gmra.mxu0 %v3253
      %v3730 = vpop.f32.mrf.mxu0
      %v3731 = vadd.f32 0.0, %v3730
      %v3732 = vpop.f32.mrf.mxu0
      %3733 = vmatprep.mubr.f32.mxu0 %v3416
      %3734 = vmatmul.mubr.f32.gmra.mxu0 %v3255
      %v3735 = vpop.f32.mrf.mxu0
      %v3736 = vadd.f32 0.0, %v3735
      %v3737 = vpop.f32.mrf.mxu0
      %3738 = vmatprep.mubr.f32.mxu0 %v3419
      %3739 = vmatmul.mubr.f32.gmra.mxu0 %v3257
      %v3740 = vpop.f32.mrf.mxu0
      %v3741 = vadd.f32 0.0, %v3740
      %v3742 = vpop.f32.mrf.mxu0
      %3743 = vmatprep.mubr.f32.mxu0 %v3422
      %3744 = vmatmul.mubr.f32.gmra.mxu0 %v3259
      %v3745 = vpop.f32.mrf.mxu0
      %v3746 = vadd.f32 0.0, %v3745
      %v3747 = vpop.f32.mrf.mxu0
      %3748 = vmatprep.mubr.f32.mxu0 %v3425
      %3749 = vmatmul.mubr.f32.gmra.mxu0 %v3261
      %v3750 = vpop.f32.mrf.mxu0
      %v3751 = vadd.f32 0.0, %v3750
      %v3752 = vpop.f32.mrf.mxu0
      %3753 = vmatprep.mubr.f32.mxu0 %v3428
      %3754 = vmatmul.mubr.f32.gmra.mxu0 %v3263
      %v3755 = vpop.f32.mrf.mxu0
      %v3756 = vadd.f32 0.0, %v3755
      %v3757 = vpop.f32.mrf.mxu0
      %3758 = vmatprep.mubr.f32.mxu0 %v3431
      %3759 = vmatmul.mubr.f32.gmra.mxu0 %v3265
      %v3760 = vpop.f32.mrf.mxu0
      %v3761 = vadd.f32 0.0, %v3760
      %v3762 = vpop.f32.mrf.mxu0
      %3763 = vmatprep.mubr.f32.mxu0 %v3434
      %3764 = vmatmul.mubr.f32.gmra.mxu0 %v3267
      %v3765 = vpop.f32.mrf.mxu0
      %v3766 = vadd.f32 0.0, %v3765
      %v3767 = vpop.f32.mrf.mxu0
      %3768 = vmatprep.mubr.f32.mxu0 %v3437
      %3769 = vmatmul.mubr.f32.gmra.mxu0 %v3269
      %v3770 = vpop.f32.mrf.mxu0
      %v3771 = vadd.f32 0.0, %v3770
      %v3772 = vpop.f32.mrf.mxu0
      %3773 = vmatprep.mubr.f32.mxu0 %v3440
      %3774 = vmatmul.mubr.f32.gmra.mxu0 %v3271
      %v3775 = vpop.f32.mrf.mxu0
      %v3776 = vadd.f32 0.0, %v3775
      %v3777 = vpop.f32.mrf.mxu0
      %3778 = vmatprep.mubr.f32.mxu0 %v3443
      %3779 = vmatmul.mubr.f32.gmra.mxu0 %v3273
      %v3780 = vpop.f32.mrf.mxu0
      %v3781 = vadd.f32 0.0, %v3780
      %v3782 = vpop.f32.mrf.mxu0
      %3783 = vmatprep.mubr.f32.mxu0 %v3446
      %3784 = vmatmul.mubr.f32.gmra.mxu0 %v3275
      %v3785 = vpop.f32.mrf.mxu0
      %v3786 = vadd.f32 0.0, %v3785
      %v3787 = vpop.f32.mrf.mxu0
      %3788 = vmatprep.mubr.f32.mxu0 %v3449
      %3789 = vmatmul.mubr.f32.gmra.mxu0 %v3277
      %v3790 = vpop.f32.mrf.mxu0
      %v3791 = vadd.f32 0.0, %v3790
      %v3792 = vpop.f32.mrf.mxu0
      %3793 = vmatprep.mubr.f32.mxu0 %v3452
      %3794 = vmatmul.mubr.f32.gmra.mxu0 %v3279
      %v3795 = vpop.f32.mrf.mxu0
      %v3796 = vadd.f32 0.0, %v3795
      %v3797 = vpop.f32.mrf.mxu0
      %3798 = vmatprep.mubr.f32.mxu0 %v3455
      %3799 = vmatmul.mubr.f32.gmra.mxu0 %v3281
      %v3800 = vpop.f32.mrf.mxu0
      %v3801 = vadd.f32 0.0, %v3800
      %v3802 = vpop.f32.mrf.mxu0
      %3803 = vmatprep.mubr.f32.mxu0 %v3458
      %3804 = vmatmul.mubr.f32.gmra.mxu0 %v3283
      %v3805 = vpop.f32.mrf.mxu0
      %v3806 = vadd.f32 0.0, %v3805
      %v3807 = vpop.f32.mrf.mxu0
      %3808 = vmatprep.mubr.f32.mxu0 %v3461
      %3809 = vmatmul.mubr.f32.gmra.mxu0 %v3285
      %v3810 = vpop.f32.mrf.mxu0
      %v3811 = vadd.f32 0.0, %v3810
      %v3812 = vpop.f32.mrf.mxu0
      %3813 = vmatprep.mubr.f32.mxu0 %v3464
      %3814 = vmatmul.mubr.f32.gmra.mxu0 %v3287
      %v3815 = vpop.f32.mrf.mxu0
      %v3816 = vadd.f32 0.0, %v3815
      %v3817 = vpop.f32.mrf.mxu0
      %3818 = vmatprep.mubr.f32.mxu0 %v3467
      %3819 = vmatmul.mubr.f32.gmra.mxu0 %v3289
      %v3820 = vpop.f32.mrf.mxu0
      %v3821 = vadd.f32 0.0, %v3820
      %v3822 = vpop.f32.mrf.mxu0
      %3823 = vmatprep.mubr.f32.mxu0 %v3470
      %3824 = vmatmul.mubr.f32.gmra.mxu0 %v3291
      %v3825 = vpop.f32.mrf.mxu0
      %v3826 = vadd.f32 0.0, %v3825
      %v3827 = vpop.f32.mrf.mxu0
      %3828 = vmatprep.mubr.f32.mxu0 %v3473
      %3829 = vmatmul.mubr.f32.gmra.mxu0 %v3293
      %v3830 = vpop.f32.mrf.mxu0
      %v3831 = vadd.f32 0.0, %v3830
      %v3832 = vpop.f32.mrf.mxu0
      %3833 = vmatprep.mubr.f32.mxu0 %v3476
      %3834 = vmatmul.mubr.f32.gmra.mxu0 %v3295
      %v3835 = vpop.f32.mrf.mxu0
      %v3836 = vadd.f32 0.0, %v3835
      %v3837 = vpop.f32.mrf.mxu0
      %3838 = vmatprep.mubr.f32.mxu0 %v3479
      %3839 = vmatmul.mubr.f32.gmra.mxu0 %v3297
      %v3840 = vpop.f32.mrf.mxu0
      %v3841 = vadd.f32 0.0, %v3840
      %v3842 = vpop.f32.mrf.mxu0
      %3843 = vmatprep.mubr.f32.mxu0 %v3482
      %3844 = vmatmul.mubr.f32.gmra.mxu0 %v3299
      %v3845 = vpop.f32.mrf.mxu0
      %v3846 = vadd.f32 0.0, %v3845
      %v3847 = vpop.f32.mrf.mxu0
      %3848 = vmatprep.mubr.f32.mxu0 %v3485
      %3849 = vmatmul.mubr.f32.gmra.mxu0 %v3301
      %v3850 = vpop.f32.mrf.mxu0
      %v3851 = vadd.f32 0.0, %v3850
      %v3852 = vpop.f32.mrf.mxu0
      %3853 = vmatprep.mubr.f32.mxu0 %v3488
      %3854 = vmatmul.mubr.f32.gmra.mxu0 %v3303
      %v3855 = vpop.f32.mrf.mxu0
      %v3856 = vadd.f32 0.0, %v3855
      %v3857 = vpop.f32.mrf.mxu0
      %3858 = vmatprep.mubr.f32.mxu0 %v3491
      %3859 = vmatmul.mubr.f32.gmra.mxu0 %v3305
      %v3860 = vpop.f32.mrf.mxu0
      %v3861 = vadd.f32 0.0, %v3860
      %v3862 = vpop.f32.mrf.mxu0
      %3863 = vmatprep.mubr.f32.mxu0 %v3494
      %3864 = vmatmul.mubr.f32.gmra.mxu0 %v3307
      %v3865 = vpop.f32.mrf.mxu0
      %v3866 = vadd.f32 0.0, %v3865
      %v3867 = vpop.f32.mrf.mxu0
      %3868 = vmatprep.mubr.f32.mxu0 %v3497
      %3869 = vmatmul.mubr.f32.gmra.mxu0 %v3309
      %v3870 = vpop.f32.mrf.mxu0
      %v3871 = vadd.f32 0.0, %v3870
      %v3872 = vpop.f32.mrf.mxu0
      %3873 = vmatprep.mubr.f32.mxu0 %v3500
      %3874 = vmatmul.mubr.f32.gmra.mxu0 %v3311
      %v3875 = vpop.f32.mrf.mxu0
      %v3876 = vadd.f32 0.0, %v3875
      %v3877 = vpop.f32.mrf.mxu0
      %3878 = vmatprep.mubr.f32.mxu0 %v3503
      %3879 = vmatmul.mubr.f32.gmra.mxu0 %v3313
      %v3880 = vpop.f32.mrf.mxu0
      %v3881 = vadd.f32 0.0, %v3880
      %v3882 = vpop.f32.mrf.mxu0
      %3883 = vmatprep.mubr.f32.mxu0 %v3506
      %3884 = vmatmul.mubr.f32.gmra.mxu0 %v3315
      %v3885 = vpop.f32.mrf.mxu0
      %v3886 = vadd.f32 0.0, %v3885
      %v3887 = vpop.f32.mrf.mxu0
      %3888 = vmatprep.mubr.f32.mxu0 %v3509
      %3889 = vmatmul.mubr.f32.gmra.mxu0 %v3317
      %v3890 = vpop.f32.mrf.mxu0
      %v3891 = vadd.f32 0.0, %v3890
      %v3892 = vpop.f32.mrf.mxu0
      %3893 = vmatprep.mubr.f32.mxu0 %v3512
      %3894 = vmatmul.mubr.f32.gmra.mxu0 %v3319
      %v3895 = vpop.f32.mrf.mxu0
      %v3896 = vadd.f32 0.0, %v3895
      %v3897 = vpop.f32.mrf.mxu0
      %3898 = vdwg.mxu0
      %v3899 = vld [vmem:[%s6] sm:$0xff]
      %v3900 = vld [vmem:[%s6 + $0x8] sm:$0xff]
      %v3901 = vld [vmem:[%s6 + $0x10] sm:$0xff]
      %v3902 = vld [vmem:[%s6 + $0x18] sm:$0xff]
      %v3903 = vadd.f32 %v3899, %v3581
      %v3904 = vadd.f32 %v3900, %v3586
      %v3905 = vadd.f32 %v3901, %v3591
      %v3906 = vadd.f32 %v3902, %v3596
      %3911 = vrot.lane.b32.xlu0 %v3601, 127
      %v3912 = vpop.permute.xlu0 %3911
      %3913 = vrot.lane.b32.xlu0 %v3606, 127
      %v3914 = vpop.permute.xlu0 %3913
      %3915 = vrot.lane.b32.xlu0 %v3611, 127
      %v3916 = vpop.permute.xlu0 %3915
      %3917 = vrot.lane.b32.xlu0 %v3616, 127
      %v3918 = vpop.permute.xlu0 %3917
      %v3923 = vadd.f32 %v3903, %v3912
      %v3924 = vadd.f32 %v3904, %v3914
      %v3925 = vadd.f32 %v3905, %v3916
      %v3926 = vadd.f32 %v3906, %v3918
      %3931 = vrot.lane.b32.xlu0 %v3621, 126
      %v3932 = vpop.permute.xlu0 %3931
      %3933 = vrot.lane.b32.xlu0 %v3626, 126
      %v3934 = vpop.permute.xlu0 %3933
      %3935 = vrot.lane.b32.xlu0 %v3631, 126
      %v3936 = vpop.permute.xlu0 %3935
      %3937 = vrot.lane.b32.xlu0 %v3636, 126
      %v3938 = vpop.permute.xlu0 %3937
      %v3943 = vadd.f32 %v3923, %v3932
      %v3944 = vadd.f32 %v3924, %v3934
      %v3945 = vadd.f32 %v3925, %v3936
      %v3946 = vadd.f32 %v3926, %v3938
      %3951 = vrot.lane.b32.xlu0 %v3641, 125
      %v3952 = vpop.permute.xlu0 %3951
      %3953 = vrot.lane.b32.xlu0 %v3646, 125
      %v3954 = vpop.permute.xlu0 %3953
      %3955 = vrot.lane.b32.xlu0 %v3651, 125
      %v3956 = vpop.permute.xlu0 %3955
      %3957 = vrot.lane.b32.xlu0 %v3656, 125
      %v3958 = vpop.permute.xlu0 %3957
      %v3963 = vadd.f32 %v3943, %v3952
      %v3964 = vadd.f32 %v3944, %v3954
      %v3965 = vadd.f32 %v3945, %v3956
      %v3966 = vadd.f32 %v3946, %v3958
      %3971 = vrot.lane.b32.xlu0 %v3661, 124
      %v3972 = vpop.permute.xlu0 %3971
      %3973 = vrot.lane.b32.xlu0 %v3666, 124
      %v3974 = vpop.permute.xlu0 %3973
      %3975 = vrot.lane.b32.xlu0 %v3671, 124
      %v3976 = vpop.permute.xlu0 %3975
      %3977 = vrot.lane.b32.xlu0 %v3676, 124
      %v3978 = vpop.permute.xlu0 %3977
      %v3983 = vadd.f32 %v3963, %v3972
      %v3984 = vadd.f32 %v3964, %v3974
      %v3985 = vadd.f32 %v3965, %v3976
      %v3986 = vadd.f32 %v3966, %v3978
      %3991 = vrot.lane.b32.xlu0 %v3681, 123
      %v3992 = vpop.permute.xlu0 %3991
      %3993 = vrot.lane.b32.xlu0 %v3686, 123
      %v3994 = vpop.permute.xlu0 %3993
      %3995 = vrot.lane.b32.xlu0 %v3691, 123
      %v3996 = vpop.permute.xlu0 %3995
      %3997 = vrot.lane.b32.xlu0 %v3696, 123
      %v3998 = vpop.permute.xlu0 %3997
      %v4003 = vadd.f32 %v3983, %v3992
      %v4004 = vadd.f32 %v3984, %v3994
      %v4005 = vadd.f32 %v3985, %v3996
      %v4006 = vadd.f32 %v3986, %v3998
      %4011 = vrot.lane.b32.xlu0 %v3701, 122
      %v4012 = vpop.permute.xlu0 %4011
      %4013 = vrot.lane.b32.xlu0 %v3706, 122
      %v4014 = vpop.permute.xlu0 %4013
      %4015 = vrot.lane.b32.xlu0 %v3711, 122
      %v4016 = vpop.permute.xlu0 %4015
      %4017 = vrot.lane.b32.xlu0 %v3716, 122
      %v4018 = vpop.permute.xlu0 %4017
      %v4023 = vadd.f32 %v4003, %v4012
      %v4024 = vadd.f32 %v4004, %v4014
      %v4025 = vadd.f32 %v4005, %v4016
      %v4026 = vadd.f32 %v4006, %v4018
      %4031 = vrot.lane.b32.xlu0 %v3721, 121
      %v4032 = vpop.permute.xlu0 %4031
      %4033 = vrot.lane.b32.xlu0 %v3726, 121
      %v4034 = vpop.permute.xlu0 %4033
      %4035 = vrot.lane.b32.xlu0 %v3731, 121
      %v4036 = vpop.permute.xlu0 %4035
      %4037 = vrot.lane.b32.xlu0 %v3736, 121
      %v4038 = vpop.permute.xlu0 %4037
      %v4043 = vadd.f32 %v4023, %v4032
      %v4044 = vadd.f32 %v4024, %v4034
      %v4045 = vadd.f32 %v4025, %v4036
      %v4046 = vadd.f32 %v4026, %v4038
      %4051 = vrot.lane.b32.xlu0 %v3741, 120
      %v4052 = vpop.permute.xlu0 %4051
      %4053 = vrot.lane.b32.xlu0 %v3746, 120
      %v4054 = vpop.permute.xlu0 %4053
      %4055 = vrot.lane.b32.xlu0 %v3751, 120
      %v4056 = vpop.permute.xlu0 %4055
      %4057 = vrot.lane.b32.xlu0 %v3756, 120
      %v4058 = vpop.permute.xlu0 %4057
      %v4063 = vadd.f32 %v4043, %v4052
      %v4064 = vadd.f32 %v4044, %v4054
      %v4065 = vadd.f32 %v4045, %v4056
      %v4066 = vadd.f32 %v4046, %v4058
      %4071 = vrot.lane.b32.xlu0 %v3761, 119
      %v4072 = vpop.permute.xlu0 %4071
      %4073 = vrot.lane.b32.xlu0 %v3766, 119
      %v4074 = vpop.permute.xlu0 %4073
      %4075 = vrot.lane.b32.xlu0 %v3771, 119
      %v4076 = vpop.permute.xlu0 %4075
      %4077 = vrot.lane.b32.xlu0 %v3776, 119
      %v4078 = vpop.permute.xlu0 %4077
      %v4083 = vadd.f32 %v4063, %v4072
      %v4084 = vadd.f32 %v4064, %v4074
      %v4085 = vadd.f32 %v4065, %v4076
      %v4086 = vadd.f32 %v4066, %v4078
      %4091 = vrot.lane.b32.xlu0 %v3781, 118
      %v4092 = vpop.permute.xlu0 %4091
      %4093 = vrot.lane.b32.xlu0 %v3786, 118
      %v4094 = vpop.permute.xlu0 %4093
      %4095 = vrot.lane.b32.xlu0 %v3791, 118
      %v4096 = vpop.permute.xlu0 %4095
      %4097 = vrot.lane.b32.xlu0 %v3796, 118
      %v4098 = vpop.permute.xlu0 %4097
      %v4103 = vadd.f32 %v4083, %v4092
      %v4104 = vadd.f32 %v4084, %v4094
      %v4105 = vadd.f32 %v4085, %v4096
      %v4106 = vadd.f32 %v4086, %v4098
      %4111 = vrot.lane.b32.xlu0 %v3801, 117
      %v4112 = vpop.permute.xlu0 %4111
      %4113 = vrot.lane.b32.xlu0 %v3806, 117
      %v4114 = vpop.permute.xlu0 %4113
      %4115 = vrot.lane.b32.xlu0 %v3811, 117
      %v4116 = vpop.permute.xlu0 %4115
      %4117 = vrot.lane.b32.xlu0 %v3816, 117
      %v4118 = vpop.permute.xlu0 %4117
      %v4123 = vadd.f32 %v4103, %v4112
      %v4124 = vadd.f32 %v4104, %v4114
      %v4125 = vadd.f32 %v4105, %v4116
      %v4126 = vadd.f32 %v4106, %v4118
      %4131 = vrot.lane.b32.xlu0 %v3821, 116
      %v4132 = vpop.permute.xlu0 %4131
      %4133 = vrot.lane.b32.xlu0 %v3826, 116
      %v4134 = vpop.permute.xlu0 %4133
      %4135 = vrot.lane.b32.xlu0 %v3831, 116
      %v4136 = vpop.permute.xlu0 %4135
      %4137 = vrot.lane.b32.xlu0 %v3836, 116
      %v4138 = vpop.permute.xlu0 %4137
      %v4143 = vadd.f32 %v4123, %v4132
      %v4144 = vadd.f32 %v4124, %v4134
      %v4145 = vadd.f32 %v4125, %v4136
      %v4146 = vadd.f32 %v4126, %v4138
      %4151 = vrot.lane.b32.xlu0 %v3841, 115
      %v4152 = vpop.permute.xlu0 %4151
      %4153 = vrot.lane.b32.xlu0 %v3846, 115
      %v4154 = vpop.permute.xlu0 %4153
      %4155 = vrot.lane.b32.xlu0 %v3851, 115
      %v4156 = vpop.permute.xlu0 %4155
      %4157 = vrot.lane.b32.xlu0 %v3856, 115
      %v4158 = vpop.permute.xlu0 %4157
      %v4163 = vadd.f32 %v4143, %v4152
      %v4164 = vadd.f32 %v4144, %v4154
      %v4165 = vadd.f32 %v4145, %v4156
      %v4166 = vadd.f32 %v4146, %v4158
      %4171 = vrot.lane.b32.xlu0 %v3861, 114
      %v4172 = vpop.permute.xlu0 %4171
      %4173 = vrot.lane.b32.xlu0 %v3866, 114
      %v4174 = vpop.permute.xlu0 %4173
      %4175 = vrot.lane.b32.xlu0 %v3871, 114
      %v4176 = vpop.permute.xlu0 %4175
      %4177 = vrot.lane.b32.xlu0 %v3876, 114
      %v4178 = vpop.permute.xlu0 %4177
      %v4183 = vadd.f32 %v4163, %v4172
      %v4184 = vadd.f32 %v4164, %v4174
      %v4185 = vadd.f32 %v4165, %v4176
      %v4186 = vadd.f32 %v4166, %v4178
      %4191 = vrot.lane.b32.xlu0 %v3881, 113
      %v4192 = vpop.permute.xlu0 %4191
      %4193 = vrot.lane.b32.xlu0 %v3886, 113
      %v4194 = vpop.permute.xlu0 %4193
      %4195 = vrot.lane.b32.xlu0 %v3891, 113
      %v4196 = vpop.permute.xlu0 %4195
      %4197 = vrot.lane.b32.xlu0 %v3896, 113
      %v4198 = vpop.permute.xlu0 %4197
      %v4203 = vadd.f32 %v4183, %v4192
      %v4204 = vadd.f32 %v4184, %v4194
      %v4205 = vadd.f32 %v4185, %v4196
      %v4206 = vadd.f32 %v4186, %v4198
      %vm4207 = vcmask 7168
      %4208 = vst.msk [vmem:[%s278] sm:$0xff] %vm4207, %v4203
      %4209 = vst.msk [vmem:[%s278 + $0x8] sm:$0xff] %vm4207, %v4204
      %4210 = vst.msk [vmem:[%s278 + $0x10] sm:$0xff] %vm4207, %v4205
      %4211 = vst.msk [vmem:[%s278 + $0x18] sm:$0xff] %vm4207, %v4206
      %p4212 = scmp.lt.s32.totalorder %s18, 1
      %s4213 = scalar_select %p4212, %s18, 1
      %s4214 = smul.addr %s4213, 4
      %s4215 = smul.addr %s4214, 8
      %s4216 = scalar_lea.vmem %s7, %s4215
      // Predicated region
      $region49: #{_forward_impl.1} parent=47 // pred_check
        %p4217 = pneg %p188
      $region50: #{_forward_impl.1} parent=47 // pred_check_branch
        %4219 = sbr.rel (%p4217) target = $region52
      $region51: #{_forward_impl.1} parent=47 // pred_region
        _
      $region52: #{_forward_impl.1} parent=47 // pred_fallthru
        _
    $region48: #{_forward_impl.1} parent=5 // pred_fallthru
      _
    %p4220 = scmp.le.s32.totalorder 2, %s13
    // Predicated region
    $region53: #{_forward_impl.1} parent=5 // pred_check
      %p4221 = pneg %p4220
    $region54: #{_forward_impl.1} parent=5 // pred_check_branch
      %4223 = sbr.rel (%p4221) target = $region56
    $region55: #{_forward_impl.1} parent=5 // pred_region
      %s4224 = ssub.s32 %s13, 2
      // Predicated region
      $region57: #{_forward_impl.1} parent=55 // pred_check
        %p4225 = pneg %p194
      $region58: #{_forward_impl.1} parent=55 // pred_check_branch
        %4227 = sbr.rel (%p4225) target = $region60
      $region59: #{_forward_impl.1} parent=55 // pred_region
        %p4228 = scmp.lt.s32.totalorder %s19, 1
        %s4229 = scalar_select %p4228, %s19, 1
        %s4230 = smul.addr %s4229, 4
        %s4231 = smul.addr %s4230, 8
        %s4232 = scalar_lea.vmem %s7, %s4231
      $region60: #{_forward_impl.1} parent=55 // pred_fallthru
        _
    $region56: #{_forward_impl.1} parent=5 // pred_fallthru
      _
  $region6: #{_forward_impl.1} parent=0 // loop_footer
    %s17 = sadd.s32 1, %s13
  $region7: #{_forward_impl.1} parent=0 // loop_footer_branch
    %12 = sbr.rel target = $region3
  $region8: #{_forward_impl.1} parent=0 // loop_exit
    _

</llo_original>
